<compile_context>
chip_gen: v5e
topology: v5e:2x2
jax: 0.10.0
libtpu: 0.0.40
codegen_flags: <defaults>
</compile_context>

<pallas_src>
import jax
import jax.numpy as jnp
from jax.experimental import pallas as pl
from jax.experimental.pallas import tpu as pltpu


def se_gate_kernel(w_ref, b_ref, v_ref, x_ref, o_ref):
    # w: (Cb, Cin); b: (Cb, 1); v: (Cin, 1); x: (Cb, HW); o: (Cb, HW)
    s = jnp.dot(
        w_ref[...], v_ref[...],
        preferred_element_type=jnp.float32,
        precision=jax.lax.Precision.HIGHEST,
    ) + b_ref[...]                                   # (Cb, 1)
    gate = jax.nn.sigmoid(s)                         # exp -> EUP slot; tiny
    o_ref[...] = (gate * x_ref[...].astype(jnp.float32)).astype(o_ref.dtype)


def _pick_num_blocks(cout):
    # 2 blocks: enough for DMA/compute/writeback overlap (and one block per
    # TensorCore on v7x), minimal per-step overhead. Sublane dim must stay %8.
    for nb in (2, 4):
        if cout % nb == 0 and (cout // nb) % 8 == 0:
            return nb
    return 1


def conv_sigmoid_mul(x363, x360, weight, bias):
    """x363: (1, Cin, 1, 1), x360: (1, Cout, H, W),
    weight: (Cout, Cin, 1, 1), bias: (Cout,)."""
    n, cin = x363.shape[0], x363.shape[1]
    _, cout, h, w = x360.shape
    assert n == 1 and x360.shape[0] == 1
    hw = h * w
    out_dtype = x360.dtype

    # All of these are reshapes of contiguous arrays -> free (no HBM rewrite).
    wm = weight.reshape(cout, cin)      # (Cout, Cin)
    b = bias.reshape(cout, 1)           # (Cout, 1)
    v = x363.reshape(cin, 1)            # (Cin, 1)
    x = x360.reshape(cout, hw)          # (Cout, HW)

    nb = _pick_num_blocks(cout)
    cb = cout // nb

    itemsize = jnp.dtype(x.dtype).itemsize
    cost = pl.CostEstimate(
        flops=2 * cout * cin,
        transcendentals=cout,
        bytes_accessed=(cout * cin + cout + cin) * 4 + 2 * cout * hw * itemsize,
    )

    out = pl.pallas_call(
        se_gate_kernel,
        out_shape=jax.ShapeDtypeStruct((cout, hw), out_dtype),
        grid=(nb,),
        in_specs=[
            pl.BlockSpec((cb, cin), lambda i: (i, 0)),   # per-block slice of W
            pl.BlockSpec((cb, 1), lambda i: (i, 0)),     # per-block slice of bias
            pl.BlockSpec((cin, 1), lambda i: (0, 0)),    # v resident (constant index)
            pl.BlockSpec((cb, hw), lambda i: (i, 0)),    # per-block slice of x360
        ],
        out_specs=pl.BlockSpec((cb, hw), lambda i: (i, 0)),
        compiler_params=pltpu.CompilerParams(
            dimension_semantics=("parallel",),   # one block per TC on v7x
            vmem_limit_bytes=4 * 1024 * 1024,    # ~2.6 MiB resident double-buffered
        ),
        cost_estimate=cost,
    )(wm, b, v, x)

    return out.reshape(1, cout, h, w)


if __name__ == "__main__":
    key = jax.random.PRNGKey(0)
    k1, k2, k3, k4 = jax.random.split(key, 4)

    Cin, Cout, H, W = 36, 864, 14, 14

    # Deterministic synthetic parameters (Conv2d(36, 864, kernel_size=1))
    weight = jax.random.normal(k1, (Cout, Cin, 1, 1), dtype=jnp.float32) * 0.1
    bias = jax.random.normal(k2, (Cout,), dtype=jnp.float32) * 0.1

    # Example inputs consistent with the module's forward signature
    x363 = jax.random.normal(k3, (1, Cin, 1, 1), dtype=jnp.float32)
    x360 = jax.random.normal(k4, (1, Cout, H, W), dtype=jnp.float32)

    out = conv_sigmoid_mul(x363, x360, weight, bias)
    out = jax.block_until_ready(out)

    # Reference check in plain JAX
    s = weight.reshape(Cout, Cin) @ x363.reshape(Cin, 1) + bias.reshape(Cout, 1)
    ref = jax.nn.sigmoid(s).reshape(1, Cout, 1, 1) * x360
    assert out.shape == (1, Cout, H, W)
    assert jnp.allclose(out, ref, atol=1e-5, rtol=1e-5)

    print("KERNEL_OK")
</pallas_src>

<mosaic_0001>
module attributes {stable_mosaic.version = 11 : i64} {
  func.func @se_gate_kernel(%arg0: i32, %arg1: memref<432x36xf32, #tpu.memory_space<vmem>>, %arg2: memref<432x1xf32, #tpu.memory_space<vmem>>, %arg3: memref<36x1xf32, #tpu.memory_space<vmem>>, %arg4: memref<432x196xf32, #tpu.memory_space<vmem>>, %arg5: memref<432x196xf32, #tpu.memory_space<vmem>>) attributes {dimension_semantics = [#tpu.dimension_semantics<parallel>], iteration_bounds = array<i64: 2>, scalar_prefetch = 0 : i64, scratch_operands = 0 : i64, tpu.core_type = #tpu.core_type<tc>, window_params = [{transform_indices = @transform_0, window_bounds = array<i64: 432, 36>}, {transform_indices = @transform_1, window_bounds = array<i64: 432, 1>}, {pipeline_mode = #tpu.pipeline_mode<synchronous>, transform_indices = @transform_2, window_bounds = array<i64: 36, 1>}, {transform_indices = @transform_3, window_bounds = array<i64: 432, 196>}, {transform_indices = @transform_4, window_bounds = array<i64: 432, 196>}]} {
    %c0 = arith.constant 0 : index
    %c0_0 = arith.constant 0 : index
    %0 = vector.load %arg1[%c0, %c0_0] : memref<432x36xf32, #tpu.memory_space<vmem>>, vector<432x36xf32>
    %c0_1 = arith.constant 0 : index
    %c0_2 = arith.constant 0 : index
    %1 = vector.load %arg3[%c0_1, %c0_2] : memref<36x1xf32, #tpu.memory_space<vmem>>, vector<36x1xf32>
    %cst = arith.constant dense<0.000000e+00> : vector<432x1xf32>
    %2 = tpu.matmul %0, %1, %cst {dimension_numbers = #tpu.dot_dimension_numbers<[1], [0], [0], [1], [0, 0, 1, 1], [], []>, precision = #tpu.contract_precision<fp32>} : vector<432x36xf32>, vector<36x1xf32>, vector<432x1xf32> -> vector<432x1xf32>
    %c0_3 = arith.constant 0 : index
    %c0_4 = arith.constant 0 : index
    %3 = vector.load %arg2[%c0_3, %c0_4] : memref<432x1xf32, #tpu.memory_space<vmem>>, vector<432x1xf32>
    %4 = arith.addf %2, %3 : vector<432x1xf32>
    %5 = arith.negf %4 : vector<432x1xf32>
    %6 = math.exp %5 : vector<432x1xf32>
    %cst_5 = arith.constant 1.000000e+00 : f32
    %7 = vector.broadcast %cst_5 : f32 to vector<432x1xf32>
    %8 = arith.addf %7, %6 : vector<432x1xf32>
    %9 = arith.divf %7, %8 : vector<432x1xf32>
    %c0_6 = arith.constant 0 : index
    %c0_7 = arith.constant 0 : index
    %10 = vector.load %arg4[%c0_6, %c0_7] : memref<432x196xf32, #tpu.memory_space<vmem>>, vector<432x196xf32>
    %11 = vector.broadcast %9 : vector<432x1xf32> to vector<432x196xf32>
    %12 = arith.mulf %11, %10 : vector<432x196xf32>
    %c0_8 = arith.constant 0 : index
    %c0_9 = arith.constant 0 : index
    %13 = vector.load %arg5[%c0_8, %c0_9] : memref<432x196xf32, #tpu.memory_space<vmem>>, vector<432x196xf32>
    tpu.vector_store %arg5[%c0_8, %c0_9], %12 {strides = array<i32>} : memref<432x196xf32, #tpu.memory_space<vmem>>, vector<432x196xf32>,
    return
  }
  func.func @transform_0(%arg0: i32) -> (i32, i32) {
    %c0_i32 = arith.constant 0 : i32
    %c0_i32_0 = arith.constant 0 : i32
    return %arg0, %c0_i32 : i32, i32
  }
  func.func @transform_1(%arg0: i32) -> (i32, i32) {
    %c0_i32 = arith.constant 0 : i32
    %c0_i32_0 = arith.constant 0 : i32
    return %arg0, %c0_i32 : i32, i32
  }
  func.func @transform_2(%arg0: i32) -> (i32, i32) {
    %c0_i32 = arith.constant 0 : i32
    %c0_i32_0 = arith.constant 0 : i32
    %c0_i32_1 = arith.constant 0 : i32
    return %c0_i32, %c0_i32_0 : i32, i32
  }
  func.func @transform_3(%arg0: i32) -> (i32, i32) {
    %c0_i32 = arith.constant 0 : i32
    %c0_i32_0 = arith.constant 0 : i32
    return %arg0, %c0_i32 : i32, i32
  }
  func.func @transform_4(%arg0: i32) -> (i32, i32) {
    %c0_i32 = arith.constant 0 : i32
    %c0_i32_0 = arith.constant 0 : i32
    return %arg0, %c0_i32 : i32, i32
  }
}

</mosaic_0001>

<llo_original>
// kernel: tpu_custom_call.1
$region0: #{tpu_custom_call.1}
  #allocation0 [shape = 'u32[]', space=smem, size = 0x4, offset = 0x4, fixed_abs, tag = 'smem constant byte address 0x4 - core index']
  #allocation1 [shape = 'u32[72,128]{1,0:T(1,128)}', space=vmem, size = 0x9000, scoped, tag = 'internal scratch']
  %s0 = inlined_call_operand.vmem [shape: f32[864,36], index: 0, kind: input, shape index: {}]
  %s1 = inlined_call_operand.vmem [shape: f32[864,1], index: 1, kind: input, shape index: {}]
  %s2 = inlined_call_operand.vmem [shape: f32[36,1], index: 2, kind: input, shape index: {}]
  %s3 = inlined_call_operand.vmem [shape: f32[864,196], index: 3, kind: input, shape index: {}]
  %s4 = inlined_call_operand.vmem [shape: f32[864,196], index: 4, kind: output, shape index: {}]
  %s5 = sld [smem:[#allocation0]]
  $region49: #{tpu_custom_call.1} parent=0
    _
  %s7 = ssub.s32 1, %s5
  %s8 = scalar_select 0, %s7, %s5
  loop: start=0, step=1, limit=4
  $region2: #{tpu_custom_call.1} parent=0 // loop_pre_header
    _
  $region3: #{tpu_custom_call.1} parent=0 // loop_header
    %s10 = sphi 0, %s14
    %p11 = scmp.ge.s32.totalorder %s10, 4
    %s20 = sphi 0, %s22
    %s23 = sphi 0, %s20
    %s24 = sphi 0, %s23
    %s40 = sphi 0, %s24
    %s46 = sphi 0, %s48
    %s49 = sphi 0, %s46
    %s50 = sphi 0, %s49
    %s66 = sphi 0, %s50
    %s70 = sphi 0, %s70
    %s72 = sphi 0, %s70
    %s73 = sphi 0, %s72
    %s87 = sphi 0, %s73
    %s93 = sphi 0, %s95
    %s96 = sphi 0, %s93
    %s97 = sphi 0, %s96
    %s113 = sphi 0, %s97
    %s119 = sphi 0, %s121
    %s122 = sphi 0, %s119
    %s123 = sphi 0, %s122
    %s139 = sphi 0, %s123
  $region4: #{tpu_custom_call.1} parent=0 // loop_header_branch
    %13 = sbr.rel (%p11) target = $region8
  $region5: #{tpu_custom_call.1} parent=0 // loop_body
    %s15 = ssub.s32 %s10, 1
    %s16 = ssub.s32 %s10, 2
    %s17 = sadd.s32 %s10, 1
    %s18 = ssub.s32 %s10, %s17
    %p19 = scmp.eq.s32.totalorder %s18, 0
    %s21 = sadd.s32 %s20, 1
    %s22 = scalar_select %p19, %s20, %s21
    %p25 = pneg %p19
    %p26 = scmp.eq.s32.totalorder %s10, 1
    %p27 = por %p25, %p26
    %p28 = scmp.ne.s32.totalorder %s20, %s23
    %p29 = scmp.eq.s32.totalorder %s10, 0
    %p30 = por %p28, %p29
    %p31 = scmp.ne.s32.totalorder %s20, %s23
    %p32 = scmp.eq.s32.totalorder %s15, 1
    %p33 = por %p31, %p32
    %p34 = scmp.ne.s32.totalorder %s23, %s24
    %p35 = scmp.eq.s32.totalorder %s15, 0
    %p36 = por %p34, %p35
    %p37 = scmp.ne.s32.totalorder %s23, %s24
    %p38 = scmp.eq.s32.totalorder %s16, 1
    %p39 = por %p37, %p38
    %p41 = scmp.ne.s32.totalorder %s24, %s40
    %p42 = scmp.eq.s32.totalorder %s16, 0
    %p43 = por %p41, %p42
    %s44 = ssub.s32 %s10, %s17
    %p45 = scmp.eq.s32.totalorder %s44, 0
    %s47 = sadd.s32 %s46, 1
    %s48 = scalar_select %p45, %s46, %s47
    %p51 = pneg %p45
    %p52 = scmp.eq.s32.totalorder %s10, 1
    %p53 = por %p51, %p52
    %p54 = scmp.ne.s32.totalorder %s46, %s49
    %p55 = scmp.eq.s32.totalorder %s10, 0
    %p56 = por %p54, %p55
    %p57 = scmp.ne.s32.totalorder %s46, %s49
    %p58 = scmp.eq.s32.totalorder %s15, 1
    %p59 = por %p57, %p58
    %p60 = scmp.ne.s32.totalorder %s49, %s50
    %p61 = scmp.eq.s32.totalorder %s15, 0
    %p62 = por %p60, %p61
    %p63 = scmp.ne.s32.totalorder %s49, %s50
    %p64 = scmp.eq.s32.totalorder %s16, 1
    %p65 = por %p63, %p64
    %p67 = scmp.ne.s32.totalorder %s50, %s66
    %p68 = scmp.eq.s32.totalorder %s16, 0
    %p69 = por %p67, %p68
    %s71 = sadd.s32 %s70, 1
    %p74 = scmp.eq.s32.totalorder %s10, 1
    %p75 = scmp.ne.s32.totalorder %s70, %s72
    %p76 = scmp.eq.s32.totalorder %s10, 0
    %p77 = por %p75, %p76
    %p78 = scmp.ne.s32.totalorder %s70, %s72
    %p79 = scmp.eq.s32.totalorder %s15, 1
    %p80 = por %p78, %p79
    %p81 = scmp.ne.s32.totalorder %s72, %s73
    %p82 = scmp.eq.s32.totalorder %s15, 0
    %p83 = por %p81, %p82
    %p84 = scmp.ne.s32.totalorder %s72, %s73
    %p85 = scmp.eq.s32.totalorder %s16, 1
    %p86 = por %p84, %p85
    %p88 = scmp.ne.s32.totalorder %s73, %s87
    %p89 = scmp.eq.s32.totalorder %s16, 0
    %p90 = por %p88, %p89
    %s91 = ssub.s32 %s10, %s17
    %p92 = scmp.eq.s32.totalorder %s91, 0
    %s94 = sadd.s32 %s93, 1
    %s95 = scalar_select %p92, %s93, %s94
    %p98 = pneg %p92
    %p99 = scmp.eq.s32.totalorder %s10, 1
    %p100 = por %p98, %p99
    %p101 = scmp.ne.s32.totalorder %s93, %s96
    %p102 = scmp.eq.s32.totalorder %s10, 0
    %p103 = por %p101, %p102
    %p104 = scmp.ne.s32.totalorder %s93, %s96
    %p105 = scmp.eq.s32.totalorder %s15, 1
    %p106 = por %p104, %p105
    %p107 = scmp.ne.s32.totalorder %s96, %s97
    %p108 = scmp.eq.s32.totalorder %s15, 0
    %p109 = por %p107, %p108
    %p110 = scmp.ne.s32.totalorder %s96, %s97
    %p111 = scmp.eq.s32.totalorder %s16, 1
    %p112 = por %p110, %p111
    %p114 = scmp.ne.s32.totalorder %s97, %s113
    %p115 = scmp.eq.s32.totalorder %s16, 0
    %p116 = por %p114, %p115
    %s117 = ssub.s32 %s10, %s17
    %p118 = scmp.eq.s32.totalorder %s117, 0
    %s120 = sadd.s32 %s119, 1
    %s121 = scalar_select %p118, %s119, %s120
    %p124 = pneg %p118
    %p125 = scmp.eq.s32.totalorder %s10, 1
    %p126 = por %p124, %p125
    %p127 = scmp.ne.s32.totalorder %s119, %s122
    %p128 = scmp.eq.s32.totalorder %s10, 0
    %p129 = por %p127, %p128
    %p130 = scmp.ne.s32.totalorder %s119, %s122
    %p131 = scmp.eq.s32.totalorder %s15, 1
    %p132 = por %p130, %p131
    %p133 = scmp.ne.s32.totalorder %s122, %s123
    %p134 = scmp.eq.s32.totalorder %s15, 0
    %p135 = por %p133, %p134
    %p136 = scmp.ne.s32.totalorder %s122, %s123
    %p137 = scmp.eq.s32.totalorder %s16, 1
    %p138 = por %p136, %p137
    %p140 = scmp.ne.s32.totalorder %s123, %s139
    %p141 = scmp.eq.s32.totalorder %s16, 0
    %p142 = por %p140, %p141
    %p143 = scmp.le.s32.totalorder 1, %s10
    %p144 = scmp.lt.s32.totalorder %s10, 3
    %p145 = pnand %p143, %p144
    %p146 = pneg %p145
    // Predicated region
    $region9: #{tpu_custom_call.1} parent=5 // pred_check
      _
    $region10: #{tpu_custom_call.1} parent=5 // pred_check_branch
      %148 = sbr.rel (%p145) target = $region12
    $region11: #{tpu_custom_call.1} parent=5 // pred_region
      %s149 = ssub.s32 %s10, 1
      // Predicated region
      $region13: #{tpu_custom_call.1} parent=11 // pred_check
        %p150 = pneg %p83
      $region14: #{tpu_custom_call.1} parent=11 // pred_check_branch
        %152 = sbr.rel (%p150) target = $region16
      $region15: #{tpu_custom_call.1} parent=11 // pred_region
        _
      $region16: #{tpu_custom_call.1} parent=11 // pred_fallthru
        _
    $region12: #{tpu_custom_call.1} parent=5 // pred_fallthru
      _
    %p153 = scmp.lt.s32.totalorder %s10, 2
    // Predicated region
    $region17: #{tpu_custom_call.1} parent=5 // pred_check
      %p154 = pneg %p153
    $region18: #{tpu_custom_call.1} parent=5 // pred_check_branch
      %156 = sbr.rel (%p154) target = $region20
    $region19: #{tpu_custom_call.1} parent=5 // pred_region
      // Predicated region
      $region21: #{tpu_custom_call.1} parent=19 // pred_check
        %p157 = pneg %p30
      $region22: #{tpu_custom_call.1} parent=19 // pred_check_branch
        %159 = sbr.rel (%p157) target = $region24
      $region23: #{tpu_custom_call.1} parent=19 // pred_region
        %s160 = smul.u32 54, %s10
        %p161 = scmp.lt.s32.totalorder %s160, 107
        %s162 = scalar_select %p161, %s160, 107
        %s163 = smul.addr %s162, 8
        %s164 = scalar_lea.vmem %s0, %s163
        %s165 = smul.u32 54, %s10
      $region24: #{tpu_custom_call.1} parent=19 // pred_fallthru
        _
      // Predicated region
      $region25: #{tpu_custom_call.1} parent=19 // pred_check
        %p166 = pneg %p56
      $region26: #{tpu_custom_call.1} parent=19 // pred_check_branch
        %168 = sbr.rel (%p166) target = $region28
      $region27: #{tpu_custom_call.1} parent=19 // pred_region
        %s169 = smul.u32 54, %s10
        %p170 = scmp.lt.s32.totalorder %s169, 107
        %s171 = scalar_select %p170, %s169, 107
        %s172 = smul.addr %s171, 8
        %s173 = scalar_lea.vmem %s1, %s172
        %s174 = smul.u32 54, %s10
      $region28: #{tpu_custom_call.1} parent=19 // pred_fallthru
        _
      // Predicated region
      $region29: #{tpu_custom_call.1} parent=19 // pred_check
        %p175 = pneg %p103
      $region30: #{tpu_custom_call.1} parent=19 // pred_check_branch
        %177 = sbr.rel (%p175) target = $region32
      $region31: #{tpu_custom_call.1} parent=19 // pred_region
        %s178 = smul.u32 54, %s10
        %p179 = scmp.lt.s32.totalorder %s178, 107
        %s180 = scalar_select %p179, %s178, 107
        %s181 = smul.addr %s180, 2
        %s182 = smul.addr %s181, 8
        %s183 = scalar_lea.vmem %s3, %s182
        %s184 = smul.u32 54, %s10
      $region32: #{tpu_custom_call.1} parent=19 // pred_fallthru
        _
    $region20: #{tpu_custom_call.1} parent=5 // pred_fallthru
      _
    %p185 = scmp.le.s32.totalorder 1, %s10
    %p186 = scmp.lt.s32.totalorder %s10, 3
    %p187 = pnand %p185, %p186
    %p188 = pneg %p187
    // Predicated region
    $region33: #{tpu_custom_call.1} parent=5 // pred_check
      _
    $region34: #{tpu_custom_call.1} parent=5 // pred_check_branch
      %190 = sbr.rel (%p187) target = $region36
    $region35: #{tpu_custom_call.1} parent=5 // pred_region
      %s191 = ssub.s32 %s10, 1
      %s192 = smul.u32 54, %s15
      %p193 = scmp.lt.s32.totalorder %s192, 107
      %s194 = scalar_select %p193, %s192, 107
      %s195 = smul.addr %s194, 8
      %s196 = scalar_lea.vmem %s0, %s195
      %p197 = pneg %p36
      %p198 = pneg %p33
      %s199 = smul.u32 54, %s15
      %p200 = scmp.lt.s32.totalorder %s199, 107
      %s201 = scalar_select %p200, %s199, 107
      %s202 = smul.addr %s201, 8
      %s203 = scalar_lea.vmem %s1, %s202
      %p204 = pneg %p62
      %p205 = pneg %p59
      %p206 = pneg %p83
      %p207 = pneg %p80
      %s208 = smul.u32 54, %s15
      %p209 = scmp.lt.s32.totalorder %s208, 107
      %s210 = scalar_select %p209, %s208, 107
      %s211 = smul.addr %s210, 2
      %s212 = smul.addr %s211, 8
      %s213 = scalar_lea.vmem %s3, %s212
      %p214 = pneg %p109
      %p215 = pneg %p106
      %p216 = pneg %p135
      %p217 = pneg %p132
      %s218 = smul.u32 54, %s15
      %p219 = scmp.lt.s32.totalorder %s218, 107
      %s220 = scalar_select %p219, %s218, 107
      %s221 = smul.addr %s220, 2
      %s222 = smul.addr %s221, 8
      %s223 = scalar_lea.vmem %s4, %s222
      %s224 = smul.u32 54, %s15
      %p225 = scmp.lt.s32.totalorder %s224, 107
      %s226 = scalar_select %p225, %s224, 107
      %s227 = smul.addr %s226, 8
      %s228 = scalar_lea.vmem %s0, %s227
      %s229 = smul.u32 54, %s15
      %s230 = smul.u32 54, %s15
      %p231 = scmp.lt.s32.totalorder %s230, 107
      %s232 = scalar_select %p231, %s230, 107
      %s233 = smul.addr %s232, 8
      %s234 = scalar_lea.vmem %s1, %s233
      %s235 = smul.u32 54, %s15
      %s236 = smul.u32 54, %s15
      %p237 = scmp.lt.s32.totalorder %s236, 107
      %s238 = scalar_select %p237, %s236, 107
      %s239 = smul.addr %s238, 2
      %s240 = smul.addr %s239, 8
      %s241 = scalar_lea.vmem %s3, %s240
      %s242 = smul.u32 54, %s15
      %s243 = smul.u32 54, %s15
      %p244 = scmp.lt.s32.totalorder %s243, 107
      %s245 = scalar_select %p244, %s243, 107
      %s246 = smul.addr %s245, 2
      %s247 = smul.addr %s246, 8
      %s248 = scalar_lea.vmem %s4, %s247
      %s249 = smul.u32 54, %s15
      %v250 = vld [vmem:[%s228] sm:$0xff]
      %v251 = vld [vmem:[%s228 + $0x8] sm:$0xff]
      %v252 = vld [vmem:[%s228 + $0x10] sm:$0xff]
      %v253 = vld [vmem:[%s228 + $0x18] sm:$0xff]
      %v254 = vld [vmem:[%s228 + $0x20] sm:$0xff]
      %v255 = vld [vmem:[%s228 + $0x28] sm:$0xff]
      %v256 = vld [vmem:[%s228 + $0x30] sm:$0xff]
      %v257 = vld [vmem:[%s228 + $0x38] sm:$0xff]
      %v258 = vld [vmem:[%s228 + $0x40] sm:$0xff]
      %v259 = vld [vmem:[%s228 + $0x48] sm:$0xff]
      %v260 = vld [vmem:[%s228 + $0x50] sm:$0xff]
      %v261 = vld [vmem:[%s228 + $0x58] sm:$0xff]
      %v262 = vld [vmem:[%s228 + $0x60] sm:$0xff]
      %v263 = vld [vmem:[%s228 + $0x68] sm:$0xff]
      %v264 = vld [vmem:[%s228 + $0x70] sm:$0xff]
      %v265 = vld [vmem:[%s228 + $0x78] sm:$0xff]
      %v266 = vld [vmem:[%s228 + $0x80] sm:$0xff]
      %v267 = vld [vmem:[%s228 + $0x88] sm:$0xff]
      %v268 = vld [vmem:[%s228 + $0x90] sm:$0xff]
      %v269 = vld [vmem:[%s228 + $0x98] sm:$0xff]
      %v270 = vld [vmem:[%s228 + $0xa0] sm:$0xff]
      %v271 = vld [vmem:[%s228 + $0xa8] sm:$0xff]
      %v272 = vld [vmem:[%s228 + $0xb0] sm:$0xff]
      %v273 = vld [vmem:[%s228 + $0xb8] sm:$0xff]
      %v274 = vld [vmem:[%s228 + $0xc0] sm:$0xff]
      %v275 = vld [vmem:[%s228 + $0xc8] sm:$0xff]
      %v276 = vld [vmem:[%s228 + $0xd0] sm:$0xff]
      %v277 = vld [vmem:[%s228 + $0xd8] sm:$0xff]
      %v278 = vld [vmem:[%s228 + $0xe0] sm:$0xff]
      %v279 = vld [vmem:[%s228 + $0xe8] sm:$0xff]
      %v280 = vld [vmem:[%s228 + $0xf0] sm:$0xff]
      %v281 = vld [vmem:[%s228 + $0xf8] sm:$0xff]
      %v282 = vld [vmem:[%s228 + $0x100] sm:$0xff]
      %v283 = vld [vmem:[%s228 + $0x108] sm:$0xff]
      %v284 = vld [vmem:[%s228 + $0x110] sm:$0xff]
      %v285 = vld [vmem:[%s228 + $0x118] sm:$0xff]
      %v286 = vld [vmem:[%s228 + $0x120] sm:$0xff]
      %v287 = vld [vmem:[%s228 + $0x128] sm:$0xff]
      %v288 = vld [vmem:[%s228 + $0x130] sm:$0xff]
      %v289 = vld [vmem:[%s228 + $0x138] sm:$0xff]
      %v290 = vld [vmem:[%s228 + $0x140] sm:$0xff]
      %v291 = vld [vmem:[%s228 + $0x148] sm:$0xff]
      %v292 = vld [vmem:[%s228 + $0x150] sm:$0xff]
      %v293 = vld [vmem:[%s228 + $0x158] sm:$0xff]
      %v294 = vld [vmem:[%s228 + $0x160] sm:$0xff]
      %v295 = vld [vmem:[%s228 + $0x168] sm:$0xff]
      %v296 = vld [vmem:[%s228 + $0x170] sm:$0xff]
      %v297 = vld [vmem:[%s228 + $0x178] sm:$0xff]
      %v298 = vld [vmem:[%s228 + $0x180] sm:$0xff]
      %v299 = vld [vmem:[%s228 + $0x188] sm:$0xff]
      %v300 = vld [vmem:[%s228 + $0x190] sm:$0xff]
      %v301 = vld [vmem:[%s228 + $0x198] sm:$0xff]
      %v302 = vld [vmem:[%s228 + $0x1a0] sm:$0xff]
      %v303 = vld [vmem:[%s228 + $0x1a8] sm:$0xff]
      %v304 = vld [vmem:[%s2] sm:$0xff]
      %v305 = vld [vmem:[%s2 + $0x8] sm:$0xff]
      %v306 = vld [vmem:[%s2 + $0x10] sm:$0xff]
      %v307 = vld [vmem:[%s2 + $0x18] sm:$0xff]
      %v308 = vld [vmem:[%s2 + $0x20] sm:$0xf]
      %v309 = vld [vmem:[%s234] sm:$0xff]
      %v310 = vld [vmem:[%s234 + $0x8] sm:$0xff]
      %v311 = vld [vmem:[%s234 + $0x10] sm:$0xff]
      %v312 = vld [vmem:[%s234 + $0x18] sm:$0xff]
      %v313 = vld [vmem:[%s234 + $0x20] sm:$0xff]
      %v314 = vld [vmem:[%s234 + $0x28] sm:$0xff]
      %v315 = vld [vmem:[%s234 + $0x30] sm:$0xff]
      %v316 = vld [vmem:[%s234 + $0x38] sm:$0xff]
      %v317 = vld [vmem:[%s234 + $0x40] sm:$0xff]
      %v318 = vld [vmem:[%s234 + $0x48] sm:$0xff]
      %v319 = vld [vmem:[%s234 + $0x50] sm:$0xff]
      %v320 = vld [vmem:[%s234 + $0x58] sm:$0xff]
      %v321 = vld [vmem:[%s234 + $0x60] sm:$0xff]
      %v322 = vld [vmem:[%s234 + $0x68] sm:$0xff]
      %v323 = vld [vmem:[%s234 + $0x70] sm:$0xff]
      %v324 = vld [vmem:[%s234 + $0x78] sm:$0xff]
      %v325 = vld [vmem:[%s234 + $0x80] sm:$0xff]
      %v326 = vld [vmem:[%s234 + $0x88] sm:$0xff]
      %v327 = vld [vmem:[%s234 + $0x90] sm:$0xff]
      %v328 = vld [vmem:[%s234 + $0x98] sm:$0xff]
      %v329 = vld [vmem:[%s234 + $0xa0] sm:$0xff]
      %v330 = vld [vmem:[%s234 + $0xa8] sm:$0xff]
      %v331 = vld [vmem:[%s234 + $0xb0] sm:$0xff]
      %v332 = vld [vmem:[%s234 + $0xb8] sm:$0xff]
      %v333 = vld [vmem:[%s234 + $0xc0] sm:$0xff]
      %v334 = vld [vmem:[%s234 + $0xc8] sm:$0xff]
      %v335 = vld [vmem:[%s234 + $0xd0] sm:$0xff]
      %v336 = vld [vmem:[%s234 + $0xd8] sm:$0xff]
      %v337 = vld [vmem:[%s234 + $0xe0] sm:$0xff]
      %v338 = vld [vmem:[%s234 + $0xe8] sm:$0xff]
      %v339 = vld [vmem:[%s234 + $0xf0] sm:$0xff]
      %v340 = vld [vmem:[%s234 + $0xf8] sm:$0xff]
      %v341 = vld [vmem:[%s234 + $0x100] sm:$0xff]
      %v342 = vld [vmem:[%s234 + $0x108] sm:$0xff]
      %v343 = vld [vmem:[%s234 + $0x110] sm:$0xff]
      %v344 = vld [vmem:[%s234 + $0x118] sm:$0xff]
      %v345 = vld [vmem:[%s234 + $0x120] sm:$0xff]
      %v346 = vld [vmem:[%s234 + $0x128] sm:$0xff]
      %v347 = vld [vmem:[%s234 + $0x130] sm:$0xff]
      %v348 = vld [vmem:[%s234 + $0x138] sm:$0xff]
      %v349 = vld [vmem:[%s234 + $0x140] sm:$0xff]
      %v350 = vld [vmem:[%s234 + $0x148] sm:$0xff]
      %v351 = vld [vmem:[%s234 + $0x150] sm:$0xff]
      %v352 = vld [vmem:[%s234 + $0x158] sm:$0xff]
      %v353 = vld [vmem:[%s234 + $0x160] sm:$0xff]
      %v354 = vld [vmem:[%s234 + $0x168] sm:$0xff]
      %v355 = vld [vmem:[%s234 + $0x170] sm:$0xff]
      %v356 = vld [vmem:[%s234 + $0x178] sm:$0xff]
      %v357 = vld [vmem:[%s234 + $0x180] sm:$0xff]
      %v358 = vld [vmem:[%s234 + $0x188] sm:$0xff]
      %v359 = vld [vmem:[%s234 + $0x190] sm:$0xff]
      %v360 = vld [vmem:[%s234 + $0x198] sm:$0xff]
      %v361 = vld [vmem:[%s234 + $0x1a0] sm:$0xff]
      %v362 = vld [vmem:[%s234 + $0x1a8] sm:$0xff]
      %vm363 = vcmask 293888
      %v365 = vsel %vm363, %v250, 0
      %v368 = vsel %vm363, %v251, 0
      %v371 = vsel %vm363, %v252, 0
      %v374 = vsel %vm363, %v253, 0
      %v377 = vsel %vm363, %v254, 0
      %v380 = vsel %vm363, %v255, 0
      %v383 = vsel %vm363, %v256, 0
      %v386 = vsel %vm363, %v257, 0
      %v389 = vsel %vm363, %v258, 0
      %v392 = vsel %vm363, %v259, 0
      %v395 = vsel %vm363, %v260, 0
      %v398 = vsel %vm363, %v261, 0
      %v401 = vsel %vm363, %v262, 0
      %v404 = vsel %vm363, %v263, 0
      %v407 = vsel %vm363, %v264, 0
      %v410 = vsel %vm363, %v265, 0
      %v413 = vsel %vm363, %v266, 0
      %v416 = vsel %vm363, %v267, 0
      %v419 = vsel %vm363, %v268, 0
      %v422 = vsel %vm363, %v269, 0
      %v425 = vsel %vm363, %v270, 0
      %v428 = vsel %vm363, %v271, 0
      %v431 = vsel %vm363, %v272, 0
      %v434 = vsel %vm363, %v273, 0
      %v437 = vsel %vm363, %v274, 0
      %v440 = vsel %vm363, %v275, 0
      %v443 = vsel %vm363, %v276, 0
      %v446 = vsel %vm363, %v277, 0
      %v449 = vsel %vm363, %v278, 0
      %v452 = vsel %vm363, %v279, 0
      %v455 = vsel %vm363, %v280, 0
      %v458 = vsel %vm363, %v281, 0
      %v461 = vsel %vm363, %v282, 0
      %v464 = vsel %vm363, %v283, 0
      %v467 = vsel %vm363, %v284, 0
      %v470 = vsel %vm363, %v285, 0
      %v473 = vsel %vm363, %v286, 0
      %v476 = vsel %vm363, %v287, 0
      %v479 = vsel %vm363, %v288, 0
      %v482 = vsel %vm363, %v289, 0
      %v485 = vsel %vm363, %v290, 0
      %v488 = vsel %vm363, %v291, 0
      %v491 = vsel %vm363, %v292, 0
      %v494 = vsel %vm363, %v293, 0
      %v497 = vsel %vm363, %v294, 0
      %v500 = vsel %vm363, %v295, 0
      %v503 = vsel %vm363, %v296, 0
      %v506 = vsel %vm363, %v297, 0
      %v509 = vsel %vm363, %v298, 0
      %v512 = vsel %vm363, %v299, 0
      %v515 = vsel %vm363, %v300, 0
      %v518 = vsel %vm363, %v301, 0
      %v521 = vsel %vm363, %v302, 0
      %v524 = vsel %vm363, %v303, 0
      %vm526 = vcmask 1043456
      %v528 = vsel %vm526, %v308, 0
      %530 = vmatpush.msra.mxu0 0.0
      %531 = vmatpush.msra.mxu0 0.0
      %532 = vmatpush.msra.mxu0 0.0
      %533 = vmatpush.msra.mxu0 0.0
      %534 = vmatpush.msra.mxu0 0.0
      %535 = vmatpush.msra.mxu0 0.0
      %536 = vmatpush.msra.mxu0 0.0
      %537 = vmatpush.msra.mxu0 0.0
      %538 = vmatpush.msra.mxu0 0.0
      %539 = vmatpush.msra.mxu0 0.0
      %540 = vmatpush.msra.mxu0 0.0
      %v541 = vand.u32 %v528, 4294901760
      %542 = vmatpush.msra.mxu0 %v541
      %v543 = vand.u32 %v307, 4294901760
      %544 = vmatpush.msra.mxu0 %v543
      %v545 = vand.u32 %v306, 4294901760
      %546 = vmatpush.msra.mxu0 %v545
      %v547 = vand.u32 %v305, 4294901760
      %548 = vmatpush.msra.mxu0 %v547
      %v549 = vand.u32 %v304, 4294901760
      %550 = vmatpush.msra.mxu0 %v549
      %v551 = vand.u32 %v365, 4294901760
      %v552 = vsub.f32 %v365, %v551
      %v553 = vand.u32 %v552, 4294901760
      %v554 = vsub.f32 %v552, %v553
      %v555 = vand.u32 %v554, 4294901760
      %556 = vmatmul.f32.gmra.mxu0 %v555
      %v557 = vpop.f32.mrf.mxu0
      %v558 = vadd.f32 %v309, %v557
      %v559 = vand.u32 %v368, 4294901760
      %v560 = vsub.f32 %v368, %v559
      %v561 = vand.u32 %v560, 4294901760
      %v562 = vsub.f32 %v560, %v561
      %v563 = vand.u32 %v562, 4294901760
      %564 = vmatmul.f32.gmra.mxu0 %v563
      %v565 = vpop.f32.mrf.mxu0
      %v566 = vadd.f32 %v310, %v565
      %v567 = vand.u32 %v371, 4294901760
      %v568 = vsub.f32 %v371, %v567
      %v569 = vand.u32 %v568, 4294901760
      %v570 = vsub.f32 %v568, %v569
      %v571 = vand.u32 %v570, 4294901760
      %572 = vmatmul.f32.gmra.mxu0 %v571
      %v573 = vpop.f32.mrf.mxu0
      %v574 = vadd.f32 %v311, %v573
      %v575 = vand.u32 %v374, 4294901760
      %v576 = vsub.f32 %v374, %v575
      %v577 = vand.u32 %v576, 4294901760
      %v578 = vsub.f32 %v576, %v577
      %v579 = vand.u32 %v578, 4294901760
      %580 = vmatmul.f32.gmra.mxu0 %v579
      %v581 = vpop.f32.mrf.mxu0
      %v582 = vadd.f32 %v312, %v581
      %v583 = vand.u32 %v377, 4294901760
      %v584 = vsub.f32 %v377, %v583
      %v585 = vand.u32 %v584, 4294901760
      %v586 = vsub.f32 %v584, %v585
      %v587 = vand.u32 %v586, 4294901760
      %588 = vmatmul.f32.gmra.mxu0 %v587
      %v589 = vpop.f32.mrf.mxu0
      %v590 = vadd.f32 %v313, %v589
      %v591 = vand.u32 %v380, 4294901760
      %v592 = vsub.f32 %v380, %v591
      %v593 = vand.u32 %v592, 4294901760
      %v594 = vsub.f32 %v592, %v593
      %v595 = vand.u32 %v594, 4294901760
      %596 = vmatmul.f32.gmra.mxu0 %v595
      %v597 = vpop.f32.mrf.mxu0
      %v598 = vadd.f32 %v314, %v597
      %v599 = vand.u32 %v383, 4294901760
      %v600 = vsub.f32 %v383, %v599
      %v601 = vand.u32 %v600, 4294901760
      %v602 = vsub.f32 %v600, %v601
      %v603 = vand.u32 %v602, 4294901760
      %604 = vmatmul.f32.gmra.mxu0 %v603
      %v605 = vpop.f32.mrf.mxu0
      %v606 = vadd.f32 %v315, %v605
      %v607 = vand.u32 %v386, 4294901760
      %v608 = vsub.f32 %v386, %v607
      %v609 = vand.u32 %v608, 4294901760
      %v610 = vsub.f32 %v608, %v609
      %v611 = vand.u32 %v610, 4294901760
      %612 = vmatmul.f32.gmra.mxu0 %v611
      %v613 = vpop.f32.mrf.mxu0
      %v614 = vadd.f32 %v316, %v613
      %v615 = vand.u32 %v389, 4294901760
      %v616 = vsub.f32 %v389, %v615
      %v617 = vand.u32 %v616, 4294901760
      %v618 = vsub.f32 %v616, %v617
      %v619 = vand.u32 %v618, 4294901760
      %620 = vmatmul.f32.gmra.mxu0 %v619
      %v621 = vpop.f32.mrf.mxu0
      %v622 = vadd.f32 %v317, %v621
      %v623 = vand.u32 %v392, 4294901760
      %v624 = vsub.f32 %v392, %v623
      %v625 = vand.u32 %v624, 4294901760
      %v626 = vsub.f32 %v624, %v625
      %v627 = vand.u32 %v626, 4294901760
      %628 = vmatmul.f32.gmra.mxu0 %v627
      %v629 = vpop.f32.mrf.mxu0
      %v630 = vadd.f32 %v318, %v629
      %v631 = vand.u32 %v395, 4294901760
      %v632 = vsub.f32 %v395, %v631
      %v633 = vand.u32 %v632, 4294901760
      %v634 = vsub.f32 %v632, %v633
      %v635 = vand.u32 %v634, 4294901760
      %636 = vmatmul.f32.gmra.mxu0 %v635
      %v637 = vpop.f32.mrf.mxu0
      %v638 = vadd.f32 %v319, %v637
      %v639 = vand.u32 %v398, 4294901760
      %v640 = vsub.f32 %v398, %v639
      %v641 = vand.u32 %v640, 4294901760
      %v642 = vsub.f32 %v640, %v641
      %v643 = vand.u32 %v642, 4294901760
      %644 = vmatmul.f32.gmra.mxu0 %v643
      %v645 = vpop.f32.mrf.mxu0
      %v646 = vadd.f32 %v320, %v645
      %v647 = vand.u32 %v401, 4294901760
      %v648 = vsub.f32 %v401, %v647
      %v649 = vand.u32 %v648, 4294901760
      %v650 = vsub.f32 %v648, %v649
      %v651 = vand.u32 %v650, 4294901760
      %652 = vmatmul.f32.gmra.mxu0 %v651
      %v653 = vpop.f32.mrf.mxu0
      %v654 = vadd.f32 %v321, %v653
      %v655 = vand.u32 %v404, 4294901760
      %v656 = vsub.f32 %v404, %v655
      %v657 = vand.u32 %v656, 4294901760
      %v658 = vsub.f32 %v656, %v657
      %v659 = vand.u32 %v658, 4294901760
      %660 = vmatmul.f32.gmra.mxu0 %v659
      %v661 = vpop.f32.mrf.mxu0
      %v662 = vadd.f32 %v322, %v661
      %v663 = vand.u32 %v407, 4294901760
      %v664 = vsub.f32 %v407, %v663
      %v665 = vand.u32 %v664, 4294901760
      %v666 = vsub.f32 %v664, %v665
      %v667 = vand.u32 %v666, 4294901760
      %668 = vmatmul.f32.gmra.mxu0 %v667
      %v669 = vpop.f32.mrf.mxu0
      %v670 = vadd.f32 %v323, %v669
      %v671 = vand.u32 %v410, 4294901760
      %v672 = vsub.f32 %v410, %v671
      %v673 = vand.u32 %v672, 4294901760
      %v674 = vsub.f32 %v672, %v673
      %v675 = vand.u32 %v674, 4294901760
      %676 = vmatmul.f32.gmra.mxu0 %v675
      %v677 = vpop.f32.mrf.mxu0
      %v678 = vadd.f32 %v324, %v677
      %v679 = vand.u32 %v413, 4294901760
      %v680 = vsub.f32 %v413, %v679
      %v681 = vand.u32 %v680, 4294901760
      %v682 = vsub.f32 %v680, %v681
      %v683 = vand.u32 %v682, 4294901760
      %684 = vmatmul.f32.gmra.mxu0 %v683
      %v685 = vpop.f32.mrf.mxu0
      %v686 = vadd.f32 %v325, %v685
      %v687 = vand.u32 %v416, 4294901760
      %v688 = vsub.f32 %v416, %v687
      %v689 = vand.u32 %v688, 4294901760
      %v690 = vsub.f32 %v688, %v689
      %v691 = vand.u32 %v690, 4294901760
      %692 = vmatmul.f32.gmra.mxu0 %v691
      %v693 = vpop.f32.mrf.mxu0
      %v694 = vadd.f32 %v326, %v693
      %v695 = vand.u32 %v419, 4294901760
      %v696 = vsub.f32 %v419, %v695
      %v697 = vand.u32 %v696, 4294901760
      %v698 = vsub.f32 %v696, %v697
      %v699 = vand.u32 %v698, 4294901760
      %700 = vmatmul.f32.gmra.mxu0 %v699
      %v701 = vpop.f32.mrf.mxu0
      %v702 = vadd.f32 %v327, %v701
      %v703 = vand.u32 %v422, 4294901760
      %v704 = vsub.f32 %v422, %v703
      %v705 = vand.u32 %v704, 4294901760
      %v706 = vsub.f32 %v704, %v705
      %v707 = vand.u32 %v706, 4294901760
      %708 = vmatmul.f32.gmra.mxu0 %v707
      %v709 = vpop.f32.mrf.mxu0
      %v710 = vadd.f32 %v328, %v709
      %v711 = vand.u32 %v425, 4294901760
      %v712 = vsub.f32 %v425, %v711
      %v713 = vand.u32 %v712, 4294901760
      %v714 = vsub.f32 %v712, %v713
      %v715 = vand.u32 %v714, 4294901760
      %716 = vmatmul.f32.gmra.mxu0 %v715
      %v717 = vpop.f32.mrf.mxu0
      %v718 = vadd.f32 %v329, %v717
      %v719 = vand.u32 %v428, 4294901760
      %v720 = vsub.f32 %v428, %v719
      %v721 = vand.u32 %v720, 4294901760
      %v722 = vsub.f32 %v720, %v721
      %v723 = vand.u32 %v722, 4294901760
      %724 = vmatmul.f32.gmra.mxu0 %v723
      %v725 = vpop.f32.mrf.mxu0
      %v726 = vadd.f32 %v330, %v725
      %v727 = vand.u32 %v431, 4294901760
      %v728 = vsub.f32 %v431, %v727
      %v729 = vand.u32 %v728, 4294901760
      %v730 = vsub.f32 %v728, %v729
      %v731 = vand.u32 %v730, 4294901760
      %732 = vmatmul.f32.gmra.mxu0 %v731
      %v733 = vpop.f32.mrf.mxu0
      %v734 = vadd.f32 %v331, %v733
      %v735 = vand.u32 %v434, 4294901760
      %v736 = vsub.f32 %v434, %v735
      %v737 = vand.u32 %v736, 4294901760
      %v738 = vsub.f32 %v736, %v737
      %v739 = vand.u32 %v738, 4294901760
      %740 = vmatmul.f32.gmra.mxu0 %v739
      %v741 = vpop.f32.mrf.mxu0
      %v742 = vadd.f32 %v332, %v741
      %v743 = vand.u32 %v437, 4294901760
      %v744 = vsub.f32 %v437, %v743
      %v745 = vand.u32 %v744, 4294901760
      %v746 = vsub.f32 %v744, %v745
      %v747 = vand.u32 %v746, 4294901760
      %748 = vmatmul.f32.gmra.mxu0 %v747
      %v749 = vpop.f32.mrf.mxu0
      %v750 = vadd.f32 %v333, %v749
      %v751 = vand.u32 %v440, 4294901760
      %v752 = vsub.f32 %v440, %v751
      %v753 = vand.u32 %v752, 4294901760
      %v754 = vsub.f32 %v752, %v753
      %v755 = vand.u32 %v754, 4294901760
      %756 = vmatmul.f32.gmra.mxu0 %v755
      %v757 = vpop.f32.mrf.mxu0
      %v758 = vadd.f32 %v334, %v757
      %v759 = vand.u32 %v443, 4294901760
      %v760 = vsub.f32 %v443, %v759
      %v761 = vand.u32 %v760, 4294901760
      %v762 = vsub.f32 %v760, %v761
      %v763 = vand.u32 %v762, 4294901760
      %764 = vmatmul.f32.gmra.mxu0 %v763
      %v765 = vpop.f32.mrf.mxu0
      %v766 = vadd.f32 %v335, %v765
      %v767 = vand.u32 %v446, 4294901760
      %v768 = vsub.f32 %v446, %v767
      %v769 = vand.u32 %v768, 4294901760
      %v770 = vsub.f32 %v768, %v769
      %v771 = vand.u32 %v770, 4294901760
      %772 = vmatmul.f32.gmra.mxu0 %v771
      %v773 = vpop.f32.mrf.mxu0
      %v774 = vadd.f32 %v336, %v773
      %v775 = vand.u32 %v449, 4294901760
      %v776 = vsub.f32 %v449, %v775
      %v777 = vand.u32 %v776, 4294901760
      %v778 = vsub.f32 %v776, %v777
      %v779 = vand.u32 %v778, 4294901760
      %780 = vmatmul.f32.gmra.mxu0 %v779
      %v781 = vpop.f32.mrf.mxu0
      %v782 = vadd.f32 %v337, %v781
      %v783 = vand.u32 %v452, 4294901760
      %v784 = vsub.f32 %v452, %v783
      %v785 = vand.u32 %v784, 4294901760
      %v786 = vsub.f32 %v784, %v785
      %v787 = vand.u32 %v786, 4294901760
      %788 = vmatmul.f32.gmra.mxu0 %v787
      %v789 = vpop.f32.mrf.mxu0
      %v790 = vadd.f32 %v338, %v789
      %v791 = vand.u32 %v455, 4294901760
      %v792 = vsub.f32 %v455, %v791
      %v793 = vand.u32 %v792, 4294901760
      %v794 = vsub.f32 %v792, %v793
      %v795 = vand.u32 %v794, 4294901760
      %796 = vmatmul.f32.gmra.mxu0 %v795
      %v797 = vpop.f32.mrf.mxu0
      %v798 = vadd.f32 %v339, %v797
      %v799 = vand.u32 %v458, 4294901760
      %v800 = vsub.f32 %v458, %v799
      %v801 = vand.u32 %v800, 4294901760
      %v802 = vsub.f32 %v800, %v801
      %v803 = vand.u32 %v802, 4294901760
      %804 = vmatmul.f32.gmra.mxu0 %v803
      %v805 = vpop.f32.mrf.mxu0
      %v806 = vadd.f32 %v340, %v805
      %v807 = vand.u32 %v461, 4294901760
      %v808 = vsub.f32 %v461, %v807
      %v809 = vand.u32 %v808, 4294901760
      %v810 = vsub.f32 %v808, %v809
      %v811 = vand.u32 %v810, 4294901760
      %812 = vmatmul.f32.gmra.mxu0 %v811
      %v813 = vpop.f32.mrf.mxu0
      %v814 = vadd.f32 %v341, %v813
      %v815 = vand.u32 %v464, 4294901760
      %v816 = vsub.f32 %v464, %v815
      %v817 = vand.u32 %v816, 4294901760
      %v818 = vsub.f32 %v816, %v817
      %v819 = vand.u32 %v818, 4294901760
      %820 = vmatmul.f32.gmra.mxu0 %v819
      %v821 = vpop.f32.mrf.mxu0
      %v822 = vadd.f32 %v342, %v821
      %v823 = vand.u32 %v467, 4294901760
      %v824 = vsub.f32 %v467, %v823
      %v825 = vand.u32 %v824, 4294901760
      %v826 = vsub.f32 %v824, %v825
      %v827 = vand.u32 %v826, 4294901760
      %828 = vmatmul.f32.gmra.mxu0 %v827
      %v829 = vpop.f32.mrf.mxu0
      %v830 = vadd.f32 %v343, %v829
      %v831 = vand.u32 %v470, 4294901760
      %v832 = vsub.f32 %v470, %v831
      %v833 = vand.u32 %v832, 4294901760
      %v834 = vsub.f32 %v832, %v833
      %v835 = vand.u32 %v834, 4294901760
      %836 = vmatmul.f32.gmra.mxu0 %v835
      %v837 = vpop.f32.mrf.mxu0
      %v838 = vadd.f32 %v344, %v837
      %v839 = vand.u32 %v473, 4294901760
      %v840 = vsub.f32 %v473, %v839
      %v841 = vand.u32 %v840, 4294901760
      %v842 = vsub.f32 %v840, %v841
      %v843 = vand.u32 %v842, 4294901760
      %844 = vmatmul.f32.gmra.mxu0 %v843
      %v845 = vpop.f32.mrf.mxu0
      %v846 = vadd.f32 %v345, %v845
      %v847 = vand.u32 %v476, 4294901760
      %v848 = vsub.f32 %v476, %v847
      %v849 = vand.u32 %v848, 4294901760
      %v850 = vsub.f32 %v848, %v849
      %v851 = vand.u32 %v850, 4294901760
      %852 = vmatmul.f32.gmra.mxu0 %v851
      %v853 = vpop.f32.mrf.mxu0
      %v854 = vadd.f32 %v346, %v853
      %v855 = vand.u32 %v479, 4294901760
      %v856 = vsub.f32 %v479, %v855
      %v857 = vand.u32 %v856, 4294901760
      %v858 = vsub.f32 %v856, %v857
      %v859 = vand.u32 %v858, 4294901760
      %860 = vmatmul.f32.gmra.mxu0 %v859
      %v861 = vpop.f32.mrf.mxu0
      %v862 = vadd.f32 %v347, %v861
      %v863 = vand.u32 %v482, 4294901760
      %v864 = vsub.f32 %v482, %v863
      %v865 = vand.u32 %v864, 4294901760
      %v866 = vsub.f32 %v864, %v865
      %v867 = vand.u32 %v866, 4294901760
      %868 = vmatmul.f32.gmra.mxu0 %v867
      %v869 = vpop.f32.mrf.mxu0
      %v870 = vadd.f32 %v348, %v869
      %v871 = vand.u32 %v485, 4294901760
      %v872 = vsub.f32 %v485, %v871
      %v873 = vand.u32 %v872, 4294901760
      %v874 = vsub.f32 %v872, %v873
      %v875 = vand.u32 %v874, 4294901760
      %876 = vmatmul.f32.gmra.mxu0 %v875
      %v877 = vpop.f32.mrf.mxu0
      %v878 = vadd.f32 %v349, %v877
      %v879 = vand.u32 %v488, 4294901760
      %v880 = vsub.f32 %v488, %v879
      %v881 = vand.u32 %v880, 4294901760
      %v882 = vsub.f32 %v880, %v881
      %v883 = vand.u32 %v882, 4294901760
      %884 = vmatmul.f32.gmra.mxu0 %v883
      %v885 = vpop.f32.mrf.mxu0
      %v886 = vadd.f32 %v350, %v885
      %v887 = vand.u32 %v491, 4294901760
      %v888 = vsub.f32 %v491, %v887
      %v889 = vand.u32 %v888, 4294901760
      %v890 = vsub.f32 %v888, %v889
      %v891 = vand.u32 %v890, 4294901760
      %892 = vmatmul.f32.gmra.mxu0 %v891
      %v893 = vpop.f32.mrf.mxu0
      %v894 = vadd.f32 %v351, %v893
      %v895 = vand.u32 %v494, 4294901760
      %v896 = vsub.f32 %v494, %v895
      %v897 = vand.u32 %v896, 4294901760
      %v898 = vsub.f32 %v896, %v897
      %v899 = vand.u32 %v898, 4294901760
      %900 = vmatmul.f32.gmra.mxu0 %v899
      %v901 = vpop.f32.mrf.mxu0
      %v902 = vadd.f32 %v352, %v901
      %v903 = vand.u32 %v497, 4294901760
      %v904 = vsub.f32 %v497, %v903
      %v905 = vand.u32 %v904, 4294901760
      %v906 = vsub.f32 %v904, %v905
      %v907 = vand.u32 %v906, 4294901760
      %908 = vmatmul.f32.gmra.mxu0 %v907
      %v909 = vpop.f32.mrf.mxu0
      %v910 = vadd.f32 %v353, %v909
      %v911 = vand.u32 %v500, 4294901760
      %v912 = vsub.f32 %v500, %v911
      %v913 = vand.u32 %v912, 4294901760
      %v914 = vsub.f32 %v912, %v913
      %v915 = vand.u32 %v914, 4294901760
      %916 = vmatmul.f32.gmra.mxu0 %v915
      %v917 = vpop.f32.mrf.mxu0
      %v918 = vadd.f32 %v354, %v917
      %v919 = vand.u32 %v503, 4294901760
      %v920 = vsub.f32 %v503, %v919
      %v921 = vand.u32 %v920, 4294901760
      %v922 = vsub.f32 %v920, %v921
      %v923 = vand.u32 %v922, 4294901760
      %924 = vmatmul.f32.gmra.mxu0 %v923
      %v925 = vpop.f32.mrf.mxu0
      %v926 = vadd.f32 %v355, %v925
      %v927 = vand.u32 %v506, 4294901760
      %v928 = vsub.f32 %v506, %v927
      %v929 = vand.u32 %v928, 4294901760
      %v930 = vsub.f32 %v928, %v929
      %v931 = vand.u32 %v930, 4294901760
      %932 = vmatmul.f32.gmra.mxu0 %v931
      %v933 = vpop.f32.mrf.mxu0
      %v934 = vadd.f32 %v356, %v933
      %v935 = vand.u32 %v509, 4294901760
      %v936 = vsub.f32 %v509, %v935
      %v937 = vand.u32 %v936, 4294901760
      %v938 = vsub.f32 %v936, %v937
      %v939 = vand.u32 %v938, 4294901760
      %940 = vmatmul.f32.gmra.mxu0 %v939
      %v941 = vpop.f32.mrf.mxu0
      %v942 = vadd.f32 %v357, %v941
      %v943 = vand.u32 %v512, 4294901760
      %v944 = vsub.f32 %v512, %v943
      %v945 = vand.u32 %v944, 4294901760
      %v946 = vsub.f32 %v944, %v945
      %v947 = vand.u32 %v946, 4294901760
      %948 = vmatmul.f32.gmra.mxu0 %v947
      %v949 = vpop.f32.mrf.mxu0
      %v950 = vadd.f32 %v358, %v949
      %v951 = vand.u32 %v515, 4294901760
      %v952 = vsub.f32 %v515, %v951
      %v953 = vand.u32 %v952, 4294901760
      %v954 = vsub.f32 %v952, %v953
      %v955 = vand.u32 %v954, 4294901760
      %956 = vmatmul.f32.gmra.mxu0 %v955
      %v957 = vpop.f32.mrf.mxu0
      %v958 = vadd.f32 %v359, %v957
      %v959 = vand.u32 %v518, 4294901760
      %v960 = vsub.f32 %v518, %v959
      %v961 = vand.u32 %v960, 4294901760
      %v962 = vsub.f32 %v960, %v961
      %v963 = vand.u32 %v962, 4294901760
      %964 = vmatmul.f32.gmra.mxu0 %v963
      %v965 = vpop.f32.mrf.mxu0
      %v966 = vadd.f32 %v360, %v965
      %v967 = vand.u32 %v521, 4294901760
      %v968 = vsub.f32 %v521, %v967
      %v969 = vand.u32 %v968, 4294901760
      %v970 = vsub.f32 %v968, %v969
      %v971 = vand.u32 %v970, 4294901760
      %972 = vmatmul.f32.gmra.mxu0 %v971
      %v973 = vpop.f32.mrf.mxu0
      %v974 = vadd.f32 %v361, %v973
      %v975 = vand.u32 %v524, 4294901760
      %v976 = vsub.f32 %v524, %v975
      %v977 = vand.u32 %v976, 4294901760
      %v978 = vsub.f32 %v976, %v977
      %v979 = vand.u32 %v978, 4294901760
      %980 = vmatmul.f32.gmra.mxu0 %v979
      %v981 = vpop.f32.mrf.mxu0
      %v982 = vadd.f32 %v362, %v981
      %983 = vdwg.mxu0
      %984 = vmatpush.msra.mxu0 0.0
      %985 = vmatpush.msra.mxu0 0.0
      %986 = vmatpush.msra.mxu0 0.0
      %987 = vmatpush.msra.mxu0 0.0
      %988 = vmatpush.msra.mxu0 0.0
      %989 = vmatpush.msra.mxu0 0.0
      %990 = vmatpush.msra.mxu0 0.0
      %991 = vmatpush.msra.mxu0 0.0
      %992 = vmatpush.msra.mxu0 0.0
      %993 = vmatpush.msra.mxu0 0.0
      %994 = vmatpush.msra.mxu0 0.0
      %v995 = vand.u32 %v528, 4294901760
      %v996 = vsub.f32 %v528, %v995
      %v997 = vand.u32 %v996, 4294901760
      %v998 = vsub.f32 %v996, %v997
      %v999 = vand.u32 %v998, 4294901760
      %1000 = vmatpush.msra.mxu0 %v999
      %v1001 = vand.u32 %v307, 4294901760
      %v1002 = vsub.f32 %v307, %v1001
      %v1003 = vand.u32 %v1002, 4294901760
      %v1004 = vsub.f32 %v1002, %v1003
      %v1005 = vand.u32 %v1004, 4294901760
      %1006 = vmatpush.msra.mxu0 %v1005
      %v1007 = vand.u32 %v306, 4294901760
      %v1008 = vsub.f32 %v306, %v1007
      %v1009 = vand.u32 %v1008, 4294901760
      %v1010 = vsub.f32 %v1008, %v1009
      %v1011 = vand.u32 %v1010, 4294901760
      %1012 = vmatpush.msra.mxu0 %v1011
      %v1013 = vand.u32 %v305, 4294901760
      %v1014 = vsub.f32 %v305, %v1013
      %v1015 = vand.u32 %v1014, 4294901760
      %v1016 = vsub.f32 %v1014, %v1015
      %v1017 = vand.u32 %v1016, 4294901760
      %1018 = vmatpush.msra.mxu0 %v1017
      %v1019 = vand.u32 %v304, 4294901760
      %v1020 = vsub.f32 %v304, %v1019
      %v1021 = vand.u32 %v1020, 4294901760
      %v1022 = vsub.f32 %v1020, %v1021
      %v1023 = vand.u32 %v1022, 4294901760
      %1024 = vmatpush.msra.mxu0 %v1023
      %v1025 = vand.u32 %v365, 4294901760
      %1026 = vmatmul.f32.gmra.mxu0 %v1025
      %v1027 = vpop.f32.mrf.mxu0
      %v1028 = vadd.f32 %v558, %v1027
      %v1029 = vand.u32 %v368, 4294901760
      %1030 = vmatmul.f32.gmra.mxu0 %v1029
      %v1031 = vpop.f32.mrf.mxu0
      %v1032 = vadd.f32 %v566, %v1031
      %v1033 = vand.u32 %v371, 4294901760
      %1034 = vmatmul.f32.gmra.mxu0 %v1033
      %v1035 = vpop.f32.mrf.mxu0
      %v1036 = vadd.f32 %v574, %v1035
      %v1037 = vand.u32 %v374, 4294901760
      %1038 = vmatmul.f32.gmra.mxu0 %v1037
      %v1039 = vpop.f32.mrf.mxu0
      %v1040 = vadd.f32 %v582, %v1039
      %v1041 = vand.u32 %v377, 4294901760
      %1042 = vmatmul.f32.gmra.mxu0 %v1041
      %v1043 = vpop.f32.mrf.mxu0
      %v1044 = vadd.f32 %v590, %v1043
      %v1045 = vand.u32 %v380, 4294901760
      %1046 = vmatmul.f32.gmra.mxu0 %v1045
      %v1047 = vpop.f32.mrf.mxu0
      %v1048 = vadd.f32 %v598, %v1047
      %v1049 = vand.u32 %v383, 4294901760
      %1050 = vmatmul.f32.gmra.mxu0 %v1049
      %v1051 = vpop.f32.mrf.mxu0
      %v1052 = vadd.f32 %v606, %v1051
      %v1053 = vand.u32 %v386, 4294901760
      %1054 = vmatmul.f32.gmra.mxu0 %v1053
      %v1055 = vpop.f32.mrf.mxu0
      %v1056 = vadd.f32 %v614, %v1055
      %v1057 = vand.u32 %v389, 4294901760
      %1058 = vmatmul.f32.gmra.mxu0 %v1057
      %v1059 = vpop.f32.mrf.mxu0
      %v1060 = vadd.f32 %v622, %v1059
      %v1061 = vand.u32 %v392, 4294901760
      %1062 = vmatmul.f32.gmra.mxu0 %v1061
      %v1063 = vpop.f32.mrf.mxu0
      %v1064 = vadd.f32 %v630, %v1063
      %v1065 = vand.u32 %v395, 4294901760
      %1066 = vmatmul.f32.gmra.mxu0 %v1065
      %v1067 = vpop.f32.mrf.mxu0
      %v1068 = vadd.f32 %v638, %v1067
      %v1069 = vand.u32 %v398, 4294901760
      %1070 = vmatmul.f32.gmra.mxu0 %v1069
      %v1071 = vpop.f32.mrf.mxu0
      %v1072 = vadd.f32 %v646, %v1071
      %v1073 = vand.u32 %v401, 4294901760
      %1074 = vmatmul.f32.gmra.mxu0 %v1073
      %v1075 = vpop.f32.mrf.mxu0
      %v1076 = vadd.f32 %v654, %v1075
      %v1077 = vand.u32 %v404, 4294901760
      %1078 = vmatmul.f32.gmra.mxu0 %v1077
      %v1079 = vpop.f32.mrf.mxu0
      %v1080 = vadd.f32 %v662, %v1079
      %v1081 = vand.u32 %v407, 4294901760
      %1082 = vmatmul.f32.gmra.mxu0 %v1081
      %v1083 = vpop.f32.mrf.mxu0
      %v1084 = vadd.f32 %v670, %v1083
      %v1085 = vand.u32 %v410, 4294901760
      %1086 = vmatmul.f32.gmra.mxu0 %v1085
      %v1087 = vpop.f32.mrf.mxu0
      %v1088 = vadd.f32 %v678, %v1087
      %v1089 = vand.u32 %v413, 4294901760
      %1090 = vmatmul.f32.gmra.mxu0 %v1089
      %v1091 = vpop.f32.mrf.mxu0
      %v1092 = vadd.f32 %v686, %v1091
      %v1093 = vand.u32 %v416, 4294901760
      %1094 = vmatmul.f32.gmra.mxu0 %v1093
      %v1095 = vpop.f32.mrf.mxu0
      %v1096 = vadd.f32 %v694, %v1095
      %v1097 = vand.u32 %v419, 4294901760
      %1098 = vmatmul.f32.gmra.mxu0 %v1097
      %v1099 = vpop.f32.mrf.mxu0
      %v1100 = vadd.f32 %v702, %v1099
      %v1101 = vand.u32 %v422, 4294901760
      %1102 = vmatmul.f32.gmra.mxu0 %v1101
      %v1103 = vpop.f32.mrf.mxu0
      %v1104 = vadd.f32 %v710, %v1103
      %v1105 = vand.u32 %v425, 4294901760
      %1106 = vmatmul.f32.gmra.mxu0 %v1105
      %v1107 = vpop.f32.mrf.mxu0
      %v1108 = vadd.f32 %v718, %v1107
      %v1109 = vand.u32 %v428, 4294901760
      %1110 = vmatmul.f32.gmra.mxu0 %v1109
      %v1111 = vpop.f32.mrf.mxu0
      %v1112 = vadd.f32 %v726, %v1111
      %v1113 = vand.u32 %v431, 4294901760
      %1114 = vmatmul.f32.gmra.mxu0 %v1113
      %v1115 = vpop.f32.mrf.mxu0
      %v1116 = vadd.f32 %v734, %v1115
      %v1117 = vand.u32 %v434, 4294901760
      %1118 = vmatmul.f32.gmra.mxu0 %v1117
      %v1119 = vpop.f32.mrf.mxu0
      %v1120 = vadd.f32 %v742, %v1119
      %v1121 = vand.u32 %v437, 4294901760
      %1122 = vmatmul.f32.gmra.mxu0 %v1121
      %v1123 = vpop.f32.mrf.mxu0
      %v1124 = vadd.f32 %v750, %v1123
      %v1125 = vand.u32 %v440, 4294901760
      %1126 = vmatmul.f32.gmra.mxu0 %v1125
      %v1127 = vpop.f32.mrf.mxu0
      %v1128 = vadd.f32 %v758, %v1127
      %v1129 = vand.u32 %v443, 4294901760
      %1130 = vmatmul.f32.gmra.mxu0 %v1129
      %v1131 = vpop.f32.mrf.mxu0
      %v1132 = vadd.f32 %v766, %v1131
      %v1133 = vand.u32 %v446, 4294901760
      %1134 = vmatmul.f32.gmra.mxu0 %v1133
      %v1135 = vpop.f32.mrf.mxu0
      %v1136 = vadd.f32 %v774, %v1135
      %v1137 = vand.u32 %v449, 4294901760
      %1138 = vmatmul.f32.gmra.mxu0 %v1137
      %v1139 = vpop.f32.mrf.mxu0
      %v1140 = vadd.f32 %v782, %v1139
      %v1141 = vand.u32 %v452, 4294901760
      %1142 = vmatmul.f32.gmra.mxu0 %v1141
      %v1143 = vpop.f32.mrf.mxu0
      %v1144 = vadd.f32 %v790, %v1143
      %v1145 = vand.u32 %v455, 4294901760
      %1146 = vmatmul.f32.gmra.mxu0 %v1145
      %v1147 = vpop.f32.mrf.mxu0
      %v1148 = vadd.f32 %v798, %v1147
      %v1149 = vand.u32 %v458, 4294901760
      %1150 = vmatmul.f32.gmra.mxu0 %v1149
      %v1151 = vpop.f32.mrf.mxu0
      %v1152 = vadd.f32 %v806, %v1151
      %v1153 = vand.u32 %v461, 4294901760
      %1154 = vmatmul.f32.gmra.mxu0 %v1153
      %v1155 = vpop.f32.mrf.mxu0
      %v1156 = vadd.f32 %v814, %v1155
      %v1157 = vand.u32 %v464, 4294901760
      %1158 = vmatmul.f32.gmra.mxu0 %v1157
      %v1159 = vpop.f32.mrf.mxu0
      %v1160 = vadd.f32 %v822, %v1159
      %v1161 = vand.u32 %v467, 4294901760
      %1162 = vmatmul.f32.gmra.mxu0 %v1161
      %v1163 = vpop.f32.mrf.mxu0
      %v1164 = vadd.f32 %v830, %v1163
      %v1165 = vand.u32 %v470, 4294901760
      %1166 = vmatmul.f32.gmra.mxu0 %v1165
      %v1167 = vpop.f32.mrf.mxu0
      %v1168 = vadd.f32 %v838, %v1167
      %v1169 = vand.u32 %v473, 4294901760
      %1170 = vmatmul.f32.gmra.mxu0 %v1169
      %v1171 = vpop.f32.mrf.mxu0
      %v1172 = vadd.f32 %v846, %v1171
      %v1173 = vand.u32 %v476, 4294901760
      %1174 = vmatmul.f32.gmra.mxu0 %v1173
      %v1175 = vpop.f32.mrf.mxu0
      %v1176 = vadd.f32 %v854, %v1175
      %v1177 = vand.u32 %v479, 4294901760
      %1178 = vmatmul.f32.gmra.mxu0 %v1177
      %v1179 = vpop.f32.mrf.mxu0
      %v1180 = vadd.f32 %v862, %v1179
      %v1181 = vand.u32 %v482, 4294901760
      %1182 = vmatmul.f32.gmra.mxu0 %v1181
      %v1183 = vpop.f32.mrf.mxu0
      %v1184 = vadd.f32 %v870, %v1183
      %v1185 = vand.u32 %v485, 4294901760
      %1186 = vmatmul.f32.gmra.mxu0 %v1185
      %v1187 = vpop.f32.mrf.mxu0
      %v1188 = vadd.f32 %v878, %v1187
      %v1189 = vand.u32 %v488, 4294901760
      %1190 = vmatmul.f32.gmra.mxu0 %v1189
      %v1191 = vpop.f32.mrf.mxu0
      %v1192 = vadd.f32 %v886, %v1191
      %v1193 = vand.u32 %v491, 4294901760
      %1194 = vmatmul.f32.gmra.mxu0 %v1193
      %v1195 = vpop.f32.mrf.mxu0
      %v1196 = vadd.f32 %v894, %v1195
      %v1197 = vand.u32 %v494, 4294901760
      %1198 = vmatmul.f32.gmra.mxu0 %v1197
      %v1199 = vpop.f32.mrf.mxu0
      %v1200 = vadd.f32 %v902, %v1199
      %v1201 = vand.u32 %v497, 4294901760
      %1202 = vmatmul.f32.gmra.mxu0 %v1201
      %v1203 = vpop.f32.mrf.mxu0
      %v1204 = vadd.f32 %v910, %v1203
      %v1205 = vand.u32 %v500, 4294901760
      %1206 = vmatmul.f32.gmra.mxu0 %v1205
      %v1207 = vpop.f32.mrf.mxu0
      %v1208 = vadd.f32 %v918, %v1207
      %v1209 = vand.u32 %v503, 4294901760
      %1210 = vmatmul.f32.gmra.mxu0 %v1209
      %v1211 = vpop.f32.mrf.mxu0
      %v1212 = vadd.f32 %v926, %v1211
      %v1213 = vand.u32 %v506, 4294901760
      %1214 = vmatmul.f32.gmra.mxu0 %v1213
      %v1215 = vpop.f32.mrf.mxu0
      %v1216 = vadd.f32 %v934, %v1215
      %v1217 = vand.u32 %v509, 4294901760
      %1218 = vmatmul.f32.gmra.mxu0 %v1217
      %v1219 = vpop.f32.mrf.mxu0
      %v1220 = vadd.f32 %v942, %v1219
      %v1221 = vand.u32 %v512, 4294901760
      %1222 = vmatmul.f32.gmra.mxu0 %v1221
      %v1223 = vpop.f32.mrf.mxu0
      %v1224 = vadd.f32 %v950, %v1223
      %v1225 = vand.u32 %v515, 4294901760
      %1226 = vmatmul.f32.gmra.mxu0 %v1225
      %v1227 = vpop.f32.mrf.mxu0
      %v1228 = vadd.f32 %v958, %v1227
      %v1229 = vand.u32 %v518, 4294901760
      %1230 = vmatmul.f32.gmra.mxu0 %v1229
      %v1231 = vpop.f32.mrf.mxu0
      %v1232 = vadd.f32 %v966, %v1231
      %v1233 = vand.u32 %v521, 4294901760
      %1234 = vmatmul.f32.gmra.mxu0 %v1233
      %v1235 = vpop.f32.mrf.mxu0
      %v1236 = vadd.f32 %v974, %v1235
      %v1237 = vand.u32 %v524, 4294901760
      %1238 = vmatmul.f32.gmra.mxu0 %v1237
      %v1239 = vpop.f32.mrf.mxu0
      %v1240 = vadd.f32 %v982, %v1239
      %1241 = vdwg.mxu0
      %1242 = vmatpush.msra.mxu0 0.0
      %1243 = vmatpush.msra.mxu0 0.0
      %1244 = vmatpush.msra.mxu0 0.0
      %1245 = vmatpush.msra.mxu0 0.0
      %1246 = vmatpush.msra.mxu0 0.0
      %1247 = vmatpush.msra.mxu0 0.0
      %1248 = vmatpush.msra.mxu0 0.0
      %1249 = vmatpush.msra.mxu0 0.0
      %1250 = vmatpush.msra.mxu0 0.0
      %1251 = vmatpush.msra.mxu0 0.0
      %1252 = vmatpush.msra.mxu0 0.0
      %v1253 = vand.u32 %v528, 4294901760
      %v1254 = vsub.f32 %v528, %v1253
      %1255 = vmatpush.msra.mxu0 %v1254
      %v1256 = vand.u32 %v307, 4294901760
      %v1257 = vsub.f32 %v307, %v1256
      %1258 = vmatpush.msra.mxu0 %v1257
      %v1259 = vand.u32 %v306, 4294901760
      %v1260 = vsub.f32 %v306, %v1259
      %1261 = vmatpush.msra.mxu0 %v1260
      %v1262 = vand.u32 %v305, 4294901760
      %v1263 = vsub.f32 %v305, %v1262
      %1264 = vmatpush.msra.mxu0 %v1263
      %v1265 = vand.u32 %v304, 4294901760
      %v1266 = vsub.f32 %v304, %v1265
      %1267 = vmatpush.msra.mxu0 %v1266
      %v1268 = vand.u32 %v365, 4294901760
      %v1269 = vsub.f32 %v365, %v1268
      %1270 = vmatmul.f32.gmra.mxu0 %v1269
      %v1271 = vpop.f32.mrf.mxu0
      %v1272 = vadd.f32 %v1028, %v1271
      %v1273 = vand.u32 %v368, 4294901760
      %v1274 = vsub.f32 %v368, %v1273
      %1275 = vmatmul.f32.gmra.mxu0 %v1274
      %v1276 = vpop.f32.mrf.mxu0
      %v1277 = vadd.f32 %v1032, %v1276
      %v1278 = vand.u32 %v371, 4294901760
      %v1279 = vsub.f32 %v371, %v1278
      %1280 = vmatmul.f32.gmra.mxu0 %v1279
      %v1281 = vpop.f32.mrf.mxu0
      %v1282 = vadd.f32 %v1036, %v1281
      %v1283 = vand.u32 %v374, 4294901760
      %v1284 = vsub.f32 %v374, %v1283
      %1285 = vmatmul.f32.gmra.mxu0 %v1284
      %v1286 = vpop.f32.mrf.mxu0
      %v1287 = vadd.f32 %v1040, %v1286
      %v1288 = vand.u32 %v377, 4294901760
      %v1289 = vsub.f32 %v377, %v1288
      %1290 = vmatmul.f32.gmra.mxu0 %v1289
      %v1291 = vpop.f32.mrf.mxu0
      %v1292 = vadd.f32 %v1044, %v1291
      %v1293 = vand.u32 %v380, 4294901760
      %v1294 = vsub.f32 %v380, %v1293
      %1295 = vmatmul.f32.gmra.mxu0 %v1294
      %v1296 = vpop.f32.mrf.mxu0
      %v1297 = vadd.f32 %v1048, %v1296
      %v1298 = vand.u32 %v383, 4294901760
      %v1299 = vsub.f32 %v383, %v1298
      %1300 = vmatmul.f32.gmra.mxu0 %v1299
      %v1301 = vpop.f32.mrf.mxu0
      %v1302 = vadd.f32 %v1052, %v1301
      %v1303 = vand.u32 %v386, 4294901760
      %v1304 = vsub.f32 %v386, %v1303
      %1305 = vmatmul.f32.gmra.mxu0 %v1304
      %v1306 = vpop.f32.mrf.mxu0
      %v1307 = vadd.f32 %v1056, %v1306
      %v1308 = vand.u32 %v389, 4294901760
      %v1309 = vsub.f32 %v389, %v1308
      %1310 = vmatmul.f32.gmra.mxu0 %v1309
      %v1311 = vpop.f32.mrf.mxu0
      %v1312 = vadd.f32 %v1060, %v1311
      %v1313 = vand.u32 %v392, 4294901760
      %v1314 = vsub.f32 %v392, %v1313
      %1315 = vmatmul.f32.gmra.mxu0 %v1314
      %v1316 = vpop.f32.mrf.mxu0
      %v1317 = vadd.f32 %v1064, %v1316
      %v1318 = vand.u32 %v395, 4294901760
      %v1319 = vsub.f32 %v395, %v1318
      %1320 = vmatmul.f32.gmra.mxu0 %v1319
      %v1321 = vpop.f32.mrf.mxu0
      %v1322 = vadd.f32 %v1068, %v1321
      %v1323 = vand.u32 %v398, 4294901760
      %v1324 = vsub.f32 %v398, %v1323
      %1325 = vmatmul.f32.gmra.mxu0 %v1324
      %v1326 = vpop.f32.mrf.mxu0
      %v1327 = vadd.f32 %v1072, %v1326
      %v1328 = vand.u32 %v401, 4294901760
      %v1329 = vsub.f32 %v401, %v1328
      %1330 = vmatmul.f32.gmra.mxu0 %v1329
      %v1331 = vpop.f32.mrf.mxu0
      %v1332 = vadd.f32 %v1076, %v1331
      %v1333 = vand.u32 %v404, 4294901760
      %v1334 = vsub.f32 %v404, %v1333
      %1335 = vmatmul.f32.gmra.mxu0 %v1334
      %v1336 = vpop.f32.mrf.mxu0
      %v1337 = vadd.f32 %v1080, %v1336
      %v1338 = vand.u32 %v407, 4294901760
      %v1339 = vsub.f32 %v407, %v1338
      %1340 = vmatmul.f32.gmra.mxu0 %v1339
      %v1341 = vpop.f32.mrf.mxu0
      %v1342 = vadd.f32 %v1084, %v1341
      %v1343 = vand.u32 %v410, 4294901760
      %v1344 = vsub.f32 %v410, %v1343
      %1345 = vmatmul.f32.gmra.mxu0 %v1344
      %v1346 = vpop.f32.mrf.mxu0
      %v1347 = vadd.f32 %v1088, %v1346
      %v1348 = vand.u32 %v413, 4294901760
      %v1349 = vsub.f32 %v413, %v1348
      %1350 = vmatmul.f32.gmra.mxu0 %v1349
      %v1351 = vpop.f32.mrf.mxu0
      %v1352 = vadd.f32 %v1092, %v1351
      %v1353 = vand.u32 %v416, 4294901760
      %v1354 = vsub.f32 %v416, %v1353
      %1355 = vmatmul.f32.gmra.mxu0 %v1354
      %v1356 = vpop.f32.mrf.mxu0
      %v1357 = vadd.f32 %v1096, %v1356
      %v1358 = vand.u32 %v419, 4294901760
      %v1359 = vsub.f32 %v419, %v1358
      %1360 = vmatmul.f32.gmra.mxu0 %v1359
      %v1361 = vpop.f32.mrf.mxu0
      %v1362 = vadd.f32 %v1100, %v1361
      %v1363 = vand.u32 %v422, 4294901760
      %v1364 = vsub.f32 %v422, %v1363
      %1365 = vmatmul.f32.gmra.mxu0 %v1364
      %v1366 = vpop.f32.mrf.mxu0
      %v1367 = vadd.f32 %v1104, %v1366
      %v1368 = vand.u32 %v425, 4294901760
      %v1369 = vsub.f32 %v425, %v1368
      %1370 = vmatmul.f32.gmra.mxu0 %v1369
      %v1371 = vpop.f32.mrf.mxu0
      %v1372 = vadd.f32 %v1108, %v1371
      %v1373 = vand.u32 %v428, 4294901760
      %v1374 = vsub.f32 %v428, %v1373
      %1375 = vmatmul.f32.gmra.mxu0 %v1374
      %v1376 = vpop.f32.mrf.mxu0
      %v1377 = vadd.f32 %v1112, %v1376
      %v1378 = vand.u32 %v431, 4294901760
      %v1379 = vsub.f32 %v431, %v1378
      %1380 = vmatmul.f32.gmra.mxu0 %v1379
      %v1381 = vpop.f32.mrf.mxu0
      %v1382 = vadd.f32 %v1116, %v1381
      %v1383 = vand.u32 %v434, 4294901760
      %v1384 = vsub.f32 %v434, %v1383
      %1385 = vmatmul.f32.gmra.mxu0 %v1384
      %v1386 = vpop.f32.mrf.mxu0
      %v1387 = vadd.f32 %v1120, %v1386
      %v1388 = vand.u32 %v437, 4294901760
      %v1389 = vsub.f32 %v437, %v1388
      %1390 = vmatmul.f32.gmra.mxu0 %v1389
      %v1391 = vpop.f32.mrf.mxu0
      %v1392 = vadd.f32 %v1124, %v1391
      %v1393 = vand.u32 %v440, 4294901760
      %v1394 = vsub.f32 %v440, %v1393
      %1395 = vmatmul.f32.gmra.mxu0 %v1394
      %v1396 = vpop.f32.mrf.mxu0
      %v1397 = vadd.f32 %v1128, %v1396
      %v1398 = vand.u32 %v443, 4294901760
      %v1399 = vsub.f32 %v443, %v1398
      %1400 = vmatmul.f32.gmra.mxu0 %v1399
      %v1401 = vpop.f32.mrf.mxu0
      %v1402 = vadd.f32 %v1132, %v1401
      %v1403 = vand.u32 %v446, 4294901760
      %v1404 = vsub.f32 %v446, %v1403
      %1405 = vmatmul.f32.gmra.mxu0 %v1404
      %v1406 = vpop.f32.mrf.mxu0
      %v1407 = vadd.f32 %v1136, %v1406
      %v1408 = vand.u32 %v449, 4294901760
      %v1409 = vsub.f32 %v449, %v1408
      %1410 = vmatmul.f32.gmra.mxu0 %v1409
      %v1411 = vpop.f32.mrf.mxu0
      %v1412 = vadd.f32 %v1140, %v1411
      %v1413 = vand.u32 %v452, 4294901760
      %v1414 = vsub.f32 %v452, %v1413
      %1415 = vmatmul.f32.gmra.mxu0 %v1414
      %v1416 = vpop.f32.mrf.mxu0
      %v1417 = vadd.f32 %v1144, %v1416
      %v1418 = vand.u32 %v455, 4294901760
      %v1419 = vsub.f32 %v455, %v1418
      %1420 = vmatmul.f32.gmra.mxu0 %v1419
      %v1421 = vpop.f32.mrf.mxu0
      %v1422 = vadd.f32 %v1148, %v1421
      %v1423 = vand.u32 %v458, 4294901760
      %v1424 = vsub.f32 %v458, %v1423
      %1425 = vmatmul.f32.gmra.mxu0 %v1424
      %v1426 = vpop.f32.mrf.mxu0
      %v1427 = vadd.f32 %v1152, %v1426
      %v1428 = vand.u32 %v461, 4294901760
      %v1429 = vsub.f32 %v461, %v1428
      %1430 = vmatmul.f32.gmra.mxu0 %v1429
      %v1431 = vpop.f32.mrf.mxu0
      %v1432 = vadd.f32 %v1156, %v1431
      %v1433 = vand.u32 %v464, 4294901760
      %v1434 = vsub.f32 %v464, %v1433
      %1435 = vmatmul.f32.gmra.mxu0 %v1434
      %v1436 = vpop.f32.mrf.mxu0
      %v1437 = vadd.f32 %v1160, %v1436
      %v1438 = vand.u32 %v467, 4294901760
      %v1439 = vsub.f32 %v467, %v1438
      %1440 = vmatmul.f32.gmra.mxu0 %v1439
      %v1441 = vpop.f32.mrf.mxu0
      %v1442 = vadd.f32 %v1164, %v1441
      %v1443 = vand.u32 %v470, 4294901760
      %v1444 = vsub.f32 %v470, %v1443
      %1445 = vmatmul.f32.gmra.mxu0 %v1444
      %v1446 = vpop.f32.mrf.mxu0
      %v1447 = vadd.f32 %v1168, %v1446
      %v1448 = vand.u32 %v473, 4294901760
      %v1449 = vsub.f32 %v473, %v1448
      %1450 = vmatmul.f32.gmra.mxu0 %v1449
      %v1451 = vpop.f32.mrf.mxu0
      %v1452 = vadd.f32 %v1172, %v1451
      %v1453 = vand.u32 %v476, 4294901760
      %v1454 = vsub.f32 %v476, %v1453
      %1455 = vmatmul.f32.gmra.mxu0 %v1454
      %v1456 = vpop.f32.mrf.mxu0
      %v1457 = vadd.f32 %v1176, %v1456
      %v1458 = vand.u32 %v479, 4294901760
      %v1459 = vsub.f32 %v479, %v1458
      %1460 = vmatmul.f32.gmra.mxu0 %v1459
      %v1461 = vpop.f32.mrf.mxu0
      %v1462 = vadd.f32 %v1180, %v1461
      %v1463 = vand.u32 %v482, 4294901760
      %v1464 = vsub.f32 %v482, %v1463
      %1465 = vmatmul.f32.gmra.mxu0 %v1464
      %v1466 = vpop.f32.mrf.mxu0
      %v1467 = vadd.f32 %v1184, %v1466
      %v1468 = vand.u32 %v485, 4294901760
      %v1469 = vsub.f32 %v485, %v1468
      %1470 = vmatmul.f32.gmra.mxu0 %v1469
      %v1471 = vpop.f32.mrf.mxu0
      %v1472 = vadd.f32 %v1188, %v1471
      %v1473 = vand.u32 %v488, 4294901760
      %v1474 = vsub.f32 %v488, %v1473
      %1475 = vmatmul.f32.gmra.mxu0 %v1474
      %v1476 = vpop.f32.mrf.mxu0
      %v1477 = vadd.f32 %v1192, %v1476
      %v1478 = vand.u32 %v491, 4294901760
      %v1479 = vsub.f32 %v491, %v1478
      %1480 = vmatmul.f32.gmra.mxu0 %v1479
      %v1481 = vpop.f32.mrf.mxu0
      %v1482 = vadd.f32 %v1196, %v1481
      %v1483 = vand.u32 %v494, 4294901760
      %v1484 = vsub.f32 %v494, %v1483
      %1485 = vmatmul.f32.gmra.mxu0 %v1484
      %v1486 = vpop.f32.mrf.mxu0
      %v1487 = vadd.f32 %v1200, %v1486
      %v1488 = vand.u32 %v497, 4294901760
      %v1489 = vsub.f32 %v497, %v1488
      %1490 = vmatmul.f32.gmra.mxu0 %v1489
      %v1491 = vpop.f32.mrf.mxu0
      %v1492 = vadd.f32 %v1204, %v1491
      %v1493 = vand.u32 %v500, 4294901760
      %v1494 = vsub.f32 %v500, %v1493
      %1495 = vmatmul.f32.gmra.mxu0 %v1494
      %v1496 = vpop.f32.mrf.mxu0
      %v1497 = vadd.f32 %v1208, %v1496
      %v1498 = vand.u32 %v503, 4294901760
      %v1499 = vsub.f32 %v503, %v1498
      %1500 = vmatmul.f32.gmra.mxu0 %v1499
      %v1501 = vpop.f32.mrf.mxu0
      %v1502 = vadd.f32 %v1212, %v1501
      %v1503 = vand.u32 %v506, 4294901760
      %v1504 = vsub.f32 %v506, %v1503
      %1505 = vmatmul.f32.gmra.mxu0 %v1504
      %v1506 = vpop.f32.mrf.mxu0
      %v1507 = vadd.f32 %v1216, %v1506
      %v1508 = vand.u32 %v509, 4294901760
      %v1509 = vsub.f32 %v509, %v1508
      %1510 = vmatmul.f32.gmra.mxu0 %v1509
      %v1511 = vpop.f32.mrf.mxu0
      %v1512 = vadd.f32 %v1220, %v1511
      %v1513 = vand.u32 %v512, 4294901760
      %v1514 = vsub.f32 %v512, %v1513
      %1515 = vmatmul.f32.gmra.mxu0 %v1514
      %v1516 = vpop.f32.mrf.mxu0
      %v1517 = vadd.f32 %v1224, %v1516
      %v1518 = vand.u32 %v515, 4294901760
      %v1519 = vsub.f32 %v515, %v1518
      %1520 = vmatmul.f32.gmra.mxu0 %v1519
      %v1521 = vpop.f32.mrf.mxu0
      %v1522 = vadd.f32 %v1228, %v1521
      %v1523 = vand.u32 %v518, 4294901760
      %v1524 = vsub.f32 %v518, %v1523
      %1525 = vmatmul.f32.gmra.mxu0 %v1524
      %v1526 = vpop.f32.mrf.mxu0
      %v1527 = vadd.f32 %v1232, %v1526
      %v1528 = vand.u32 %v521, 4294901760
      %v1529 = vsub.f32 %v521, %v1528
      %1530 = vmatmul.f32.gmra.mxu0 %v1529
      %v1531 = vpop.f32.mrf.mxu0
      %v1532 = vadd.f32 %v1236, %v1531
      %v1533 = vand.u32 %v524, 4294901760
      %v1534 = vsub.f32 %v524, %v1533
      %1535 = vmatmul.f32.gmra.mxu0 %v1534
      %v1536 = vpop.f32.mrf.mxu0
      %v1537 = vadd.f32 %v1240, %v1536
      %1538 = vdwg.mxu0
      %1539 = vmatpush.msra.mxu0 0.0
      %1540 = vmatpush.msra.mxu0 0.0
      %1541 = vmatpush.msra.mxu0 0.0
      %1542 = vmatpush.msra.mxu0 0.0
      %1543 = vmatpush.msra.mxu0 0.0
      %1544 = vmatpush.msra.mxu0 0.0
      %1545 = vmatpush.msra.mxu0 0.0
      %1546 = vmatpush.msra.mxu0 0.0
      %1547 = vmatpush.msra.mxu0 0.0
      %1548 = vmatpush.msra.mxu0 0.0
      %1549 = vmatpush.msra.mxu0 0.0
      %v1550 = vand.u32 %v528, 4294901760
      %1551 = vmatpush.msra.mxu0 %v1550
      %v1552 = vand.u32 %v307, 4294901760
      %1553 = vmatpush.msra.mxu0 %v1552
      %v1554 = vand.u32 %v306, 4294901760
      %1555 = vmatpush.msra.mxu0 %v1554
      %v1556 = vand.u32 %v305, 4294901760
      %1557 = vmatpush.msra.mxu0 %v1556
      %v1558 = vand.u32 %v304, 4294901760
      %1559 = vmatpush.msra.mxu0 %v1558
      %v1560 = vand.u32 %v365, 4294901760
      %v1561 = vsub.f32 %v365, %v1560
      %v1562 = vand.u32 %v1561, 4294901760
      %1563 = vmatmul.f32.gmra.mxu0 %v1562
      %v1564 = vpop.f32.mrf.mxu0
      %v1565 = vadd.f32 %v1272, %v1564
      %v1566 = vand.u32 %v368, 4294901760
      %v1567 = vsub.f32 %v368, %v1566
      %v1568 = vand.u32 %v1567, 4294901760
      %1569 = vmatmul.f32.gmra.mxu0 %v1568
      %v1570 = vpop.f32.mrf.mxu0
      %v1571 = vadd.f32 %v1277, %v1570
      %v1572 = vand.u32 %v371, 4294901760
      %v1573 = vsub.f32 %v371, %v1572
      %v1574 = vand.u32 %v1573, 4294901760
      %1575 = vmatmul.f32.gmra.mxu0 %v1574
      %v1576 = vpop.f32.mrf.mxu0
      %v1577 = vadd.f32 %v1282, %v1576
      %v1578 = vand.u32 %v374, 4294901760
      %v1579 = vsub.f32 %v374, %v1578
      %v1580 = vand.u32 %v1579, 4294901760
      %1581 = vmatmul.f32.gmra.mxu0 %v1580
      %v1582 = vpop.f32.mrf.mxu0
      %v1583 = vadd.f32 %v1287, %v1582
      %v1584 = vand.u32 %v377, 4294901760
      %v1585 = vsub.f32 %v377, %v1584
      %v1586 = vand.u32 %v1585, 4294901760
      %1587 = vmatmul.f32.gmra.mxu0 %v1586
      %v1588 = vpop.f32.mrf.mxu0
      %v1589 = vadd.f32 %v1292, %v1588
      %v1590 = vand.u32 %v380, 4294901760
      %v1591 = vsub.f32 %v380, %v1590
      %v1592 = vand.u32 %v1591, 4294901760
      %1593 = vmatmul.f32.gmra.mxu0 %v1592
      %v1594 = vpop.f32.mrf.mxu0
      %v1595 = vadd.f32 %v1297, %v1594
      %v1596 = vand.u32 %v383, 4294901760
      %v1597 = vsub.f32 %v383, %v1596
      %v1598 = vand.u32 %v1597, 4294901760
      %1599 = vmatmul.f32.gmra.mxu0 %v1598
      %v1600 = vpop.f32.mrf.mxu0
      %v1601 = vadd.f32 %v1302, %v1600
      %v1602 = vand.u32 %v386, 4294901760
      %v1603 = vsub.f32 %v386, %v1602
      %v1604 = vand.u32 %v1603, 4294901760
      %1605 = vmatmul.f32.gmra.mxu0 %v1604
      %v1606 = vpop.f32.mrf.mxu0
      %v1607 = vadd.f32 %v1307, %v1606
      %v1608 = vand.u32 %v389, 4294901760
      %v1609 = vsub.f32 %v389, %v1608
      %v1610 = vand.u32 %v1609, 4294901760
      %1611 = vmatmul.f32.gmra.mxu0 %v1610
      %v1612 = vpop.f32.mrf.mxu0
      %v1613 = vadd.f32 %v1312, %v1612
      %v1614 = vand.u32 %v392, 4294901760
      %v1615 = vsub.f32 %v392, %v1614
      %v1616 = vand.u32 %v1615, 4294901760
      %1617 = vmatmul.f32.gmra.mxu0 %v1616
      %v1618 = vpop.f32.mrf.mxu0
      %v1619 = vadd.f32 %v1317, %v1618
      %v1620 = vand.u32 %v395, 4294901760
      %v1621 = vsub.f32 %v395, %v1620
      %v1622 = vand.u32 %v1621, 4294901760
      %1623 = vmatmul.f32.gmra.mxu0 %v1622
      %v1624 = vpop.f32.mrf.mxu0
      %v1625 = vadd.f32 %v1322, %v1624
      %v1626 = vand.u32 %v398, 4294901760
      %v1627 = vsub.f32 %v398, %v1626
      %v1628 = vand.u32 %v1627, 4294901760
      %1629 = vmatmul.f32.gmra.mxu0 %v1628
      %v1630 = vpop.f32.mrf.mxu0
      %v1631 = vadd.f32 %v1327, %v1630
      %v1632 = vand.u32 %v401, 4294901760
      %v1633 = vsub.f32 %v401, %v1632
      %v1634 = vand.u32 %v1633, 4294901760
      %1635 = vmatmul.f32.gmra.mxu0 %v1634
      %v1636 = vpop.f32.mrf.mxu0
      %v1637 = vadd.f32 %v1332, %v1636
      %v1638 = vand.u32 %v404, 4294901760
      %v1639 = vsub.f32 %v404, %v1638
      %v1640 = vand.u32 %v1639, 4294901760
      %1641 = vmatmul.f32.gmra.mxu0 %v1640
      %v1642 = vpop.f32.mrf.mxu0
      %v1643 = vadd.f32 %v1337, %v1642
      %v1644 = vand.u32 %v407, 4294901760
      %v1645 = vsub.f32 %v407, %v1644
      %v1646 = vand.u32 %v1645, 4294901760
      %1647 = vmatmul.f32.gmra.mxu0 %v1646
      %v1648 = vpop.f32.mrf.mxu0
      %v1649 = vadd.f32 %v1342, %v1648
      %v1650 = vand.u32 %v410, 4294901760
      %v1651 = vsub.f32 %v410, %v1650
      %v1652 = vand.u32 %v1651, 4294901760
      %1653 = vmatmul.f32.gmra.mxu0 %v1652
      %v1654 = vpop.f32.mrf.mxu0
      %v1655 = vadd.f32 %v1347, %v1654
      %v1656 = vand.u32 %v413, 4294901760
      %v1657 = vsub.f32 %v413, %v1656
      %v1658 = vand.u32 %v1657, 4294901760
      %1659 = vmatmul.f32.gmra.mxu0 %v1658
      %v1660 = vpop.f32.mrf.mxu0
      %v1661 = vadd.f32 %v1352, %v1660
      %v1662 = vand.u32 %v416, 4294901760
      %v1663 = vsub.f32 %v416, %v1662
      %v1664 = vand.u32 %v1663, 4294901760
      %1665 = vmatmul.f32.gmra.mxu0 %v1664
      %v1666 = vpop.f32.mrf.mxu0
      %v1667 = vadd.f32 %v1357, %v1666
      %v1668 = vand.u32 %v419, 4294901760
      %v1669 = vsub.f32 %v419, %v1668
      %v1670 = vand.u32 %v1669, 4294901760
      %1671 = vmatmul.f32.gmra.mxu0 %v1670
      %v1672 = vpop.f32.mrf.mxu0
      %v1673 = vadd.f32 %v1362, %v1672
      %v1674 = vand.u32 %v422, 4294901760
      %v1675 = vsub.f32 %v422, %v1674
      %v1676 = vand.u32 %v1675, 4294901760
      %1677 = vmatmul.f32.gmra.mxu0 %v1676
      %v1678 = vpop.f32.mrf.mxu0
      %v1679 = vadd.f32 %v1367, %v1678
      %v1680 = vand.u32 %v425, 4294901760
      %v1681 = vsub.f32 %v425, %v1680
      %v1682 = vand.u32 %v1681, 4294901760
      %1683 = vmatmul.f32.gmra.mxu0 %v1682
      %v1684 = vpop.f32.mrf.mxu0
      %v1685 = vadd.f32 %v1372, %v1684
      %v1686 = vand.u32 %v428, 4294901760
      %v1687 = vsub.f32 %v428, %v1686
      %v1688 = vand.u32 %v1687, 4294901760
      %1689 = vmatmul.f32.gmra.mxu0 %v1688
      %v1690 = vpop.f32.mrf.mxu0
      %v1691 = vadd.f32 %v1377, %v1690
      %v1692 = vand.u32 %v431, 4294901760
      %v1693 = vsub.f32 %v431, %v1692
      %v1694 = vand.u32 %v1693, 4294901760
      %1695 = vmatmul.f32.gmra.mxu0 %v1694
      %v1696 = vpop.f32.mrf.mxu0
      %v1697 = vadd.f32 %v1382, %v1696
      %v1698 = vand.u32 %v434, 4294901760
      %v1699 = vsub.f32 %v434, %v1698
      %v1700 = vand.u32 %v1699, 4294901760
      %1701 = vmatmul.f32.gmra.mxu0 %v1700
      %v1702 = vpop.f32.mrf.mxu0
      %v1703 = vadd.f32 %v1387, %v1702
      %v1704 = vand.u32 %v437, 4294901760
      %v1705 = vsub.f32 %v437, %v1704
      %v1706 = vand.u32 %v1705, 4294901760
      %1707 = vmatmul.f32.gmra.mxu0 %v1706
      %v1708 = vpop.f32.mrf.mxu0
      %v1709 = vadd.f32 %v1392, %v1708
      %v1710 = vand.u32 %v440, 4294901760
      %v1711 = vsub.f32 %v440, %v1710
      %v1712 = vand.u32 %v1711, 4294901760
      %1713 = vmatmul.f32.gmra.mxu0 %v1712
      %v1714 = vpop.f32.mrf.mxu0
      %v1715 = vadd.f32 %v1397, %v1714
      %v1716 = vand.u32 %v443, 4294901760
      %v1717 = vsub.f32 %v443, %v1716
      %v1718 = vand.u32 %v1717, 4294901760
      %1719 = vmatmul.f32.gmra.mxu0 %v1718
      %v1720 = vpop.f32.mrf.mxu0
      %v1721 = vadd.f32 %v1402, %v1720
      %v1722 = vand.u32 %v446, 4294901760
      %v1723 = vsub.f32 %v446, %v1722
      %v1724 = vand.u32 %v1723, 4294901760
      %1725 = vmatmul.f32.gmra.mxu0 %v1724
      %v1726 = vpop.f32.mrf.mxu0
      %v1727 = vadd.f32 %v1407, %v1726
      %v1728 = vand.u32 %v449, 4294901760
      %v1729 = vsub.f32 %v449, %v1728
      %v1730 = vand.u32 %v1729, 4294901760
      %1731 = vmatmul.f32.gmra.mxu0 %v1730
      %v1732 = vpop.f32.mrf.mxu0
      %v1733 = vadd.f32 %v1412, %v1732
      %v1734 = vand.u32 %v452, 4294901760
      %v1735 = vsub.f32 %v452, %v1734
      %v1736 = vand.u32 %v1735, 4294901760
      %1737 = vmatmul.f32.gmra.mxu0 %v1736
      %v1738 = vpop.f32.mrf.mxu0
      %v1739 = vadd.f32 %v1417, %v1738
      %v1740 = vand.u32 %v455, 4294901760
      %v1741 = vsub.f32 %v455, %v1740
      %v1742 = vand.u32 %v1741, 4294901760
      %1743 = vmatmul.f32.gmra.mxu0 %v1742
      %v1744 = vpop.f32.mrf.mxu0
      %v1745 = vadd.f32 %v1422, %v1744
      %v1746 = vand.u32 %v458, 4294901760
      %v1747 = vsub.f32 %v458, %v1746
      %v1748 = vand.u32 %v1747, 4294901760
      %1749 = vmatmul.f32.gmra.mxu0 %v1748
      %v1750 = vpop.f32.mrf.mxu0
      %v1751 = vadd.f32 %v1427, %v1750
      %v1752 = vand.u32 %v461, 4294901760
      %v1753 = vsub.f32 %v461, %v1752
      %v1754 = vand.u32 %v1753, 4294901760
      %1755 = vmatmul.f32.gmra.mxu0 %v1754
      %v1756 = vpop.f32.mrf.mxu0
      %v1757 = vadd.f32 %v1432, %v1756
      %v1758 = vand.u32 %v464, 4294901760
      %v1759 = vsub.f32 %v464, %v1758
      %v1760 = vand.u32 %v1759, 4294901760
      %1761 = vmatmul.f32.gmra.mxu0 %v1760
      %v1762 = vpop.f32.mrf.mxu0
      %v1763 = vadd.f32 %v1437, %v1762
      %v1764 = vand.u32 %v467, 4294901760
      %v1765 = vsub.f32 %v467, %v1764
      %v1766 = vand.u32 %v1765, 4294901760
      %1767 = vmatmul.f32.gmra.mxu0 %v1766
      %v1768 = vpop.f32.mrf.mxu0
      %v1769 = vadd.f32 %v1442, %v1768
      %v1770 = vand.u32 %v470, 4294901760
      %v1771 = vsub.f32 %v470, %v1770
      %v1772 = vand.u32 %v1771, 4294901760
      %1773 = vmatmul.f32.gmra.mxu0 %v1772
      %v1774 = vpop.f32.mrf.mxu0
      %v1775 = vadd.f32 %v1447, %v1774
      %v1776 = vand.u32 %v473, 4294901760
      %v1777 = vsub.f32 %v473, %v1776
      %v1778 = vand.u32 %v1777, 4294901760
      %1779 = vmatmul.f32.gmra.mxu0 %v1778
      %v1780 = vpop.f32.mrf.mxu0
      %v1781 = vadd.f32 %v1452, %v1780
      %v1782 = vand.u32 %v476, 4294901760
      %v1783 = vsub.f32 %v476, %v1782
      %v1784 = vand.u32 %v1783, 4294901760
      %1785 = vmatmul.f32.gmra.mxu0 %v1784
      %v1786 = vpop.f32.mrf.mxu0
      %v1787 = vadd.f32 %v1457, %v1786
      %v1788 = vand.u32 %v479, 4294901760
      %v1789 = vsub.f32 %v479, %v1788
      %v1790 = vand.u32 %v1789, 4294901760
      %1791 = vmatmul.f32.gmra.mxu0 %v1790
      %v1792 = vpop.f32.mrf.mxu0
      %v1793 = vadd.f32 %v1462, %v1792
      %v1794 = vand.u32 %v482, 4294901760
      %v1795 = vsub.f32 %v482, %v1794
      %v1796 = vand.u32 %v1795, 4294901760
      %1797 = vmatmul.f32.gmra.mxu0 %v1796
      %v1798 = vpop.f32.mrf.mxu0
      %v1799 = vadd.f32 %v1467, %v1798
      %v1800 = vand.u32 %v485, 4294901760
      %v1801 = vsub.f32 %v485, %v1800
      %v1802 = vand.u32 %v1801, 4294901760
      %1803 = vmatmul.f32.gmra.mxu0 %v1802
      %v1804 = vpop.f32.mrf.mxu0
      %v1805 = vadd.f32 %v1472, %v1804
      %v1806 = vand.u32 %v488, 4294901760
      %v1807 = vsub.f32 %v488, %v1806
      %v1808 = vand.u32 %v1807, 4294901760
      %1809 = vmatmul.f32.gmra.mxu0 %v1808
      %v1810 = vpop.f32.mrf.mxu0
      %v1811 = vadd.f32 %v1477, %v1810
      %v1812 = vand.u32 %v491, 4294901760
      %v1813 = vsub.f32 %v491, %v1812
      %v1814 = vand.u32 %v1813, 4294901760
      %1815 = vmatmul.f32.gmra.mxu0 %v1814
      %v1816 = vpop.f32.mrf.mxu0
      %v1817 = vadd.f32 %v1482, %v1816
      %v1818 = vand.u32 %v494, 4294901760
      %v1819 = vsub.f32 %v494, %v1818
      %v1820 = vand.u32 %v1819, 4294901760
      %1821 = vmatmul.f32.gmra.mxu0 %v1820
      %v1822 = vpop.f32.mrf.mxu0
      %v1823 = vadd.f32 %v1487, %v1822
      %v1824 = vand.u32 %v497, 4294901760
      %v1825 = vsub.f32 %v497, %v1824
      %v1826 = vand.u32 %v1825, 4294901760
      %1827 = vmatmul.f32.gmra.mxu0 %v1826
      %v1828 = vpop.f32.mrf.mxu0
      %v1829 = vadd.f32 %v1492, %v1828
      %v1830 = vand.u32 %v500, 4294901760
      %v1831 = vsub.f32 %v500, %v1830
      %v1832 = vand.u32 %v1831, 4294901760
      %1833 = vmatmul.f32.gmra.mxu0 %v1832
      %v1834 = vpop.f32.mrf.mxu0
      %v1835 = vadd.f32 %v1497, %v1834
      %v1836 = vand.u32 %v503, 4294901760
      %v1837 = vsub.f32 %v503, %v1836
      %v1838 = vand.u32 %v1837, 4294901760
      %1839 = vmatmul.f32.gmra.mxu0 %v1838
      %v1840 = vpop.f32.mrf.mxu0
      %v1841 = vadd.f32 %v1502, %v1840
      %v1842 = vand.u32 %v506, 4294901760
      %v1843 = vsub.f32 %v506, %v1842
      %v1844 = vand.u32 %v1843, 4294901760
      %1845 = vmatmul.f32.gmra.mxu0 %v1844
      %v1846 = vpop.f32.mrf.mxu0
      %v1847 = vadd.f32 %v1507, %v1846
      %v1848 = vand.u32 %v509, 4294901760
      %v1849 = vsub.f32 %v509, %v1848
      %v1850 = vand.u32 %v1849, 4294901760
      %1851 = vmatmul.f32.gmra.mxu0 %v1850
      %v1852 = vpop.f32.mrf.mxu0
      %v1853 = vadd.f32 %v1512, %v1852
      %v1854 = vand.u32 %v512, 4294901760
      %v1855 = vsub.f32 %v512, %v1854
      %v1856 = vand.u32 %v1855, 4294901760
      %1857 = vmatmul.f32.gmra.mxu0 %v1856
      %v1858 = vpop.f32.mrf.mxu0
      %v1859 = vadd.f32 %v1517, %v1858
      %v1860 = vand.u32 %v515, 4294901760
      %v1861 = vsub.f32 %v515, %v1860
      %v1862 = vand.u32 %v1861, 4294901760
      %1863 = vmatmul.f32.gmra.mxu0 %v1862
      %v1864 = vpop.f32.mrf.mxu0
      %v1865 = vadd.f32 %v1522, %v1864
      %v1866 = vand.u32 %v518, 4294901760
      %v1867 = vsub.f32 %v518, %v1866
      %v1868 = vand.u32 %v1867, 4294901760
      %1869 = vmatmul.f32.gmra.mxu0 %v1868
      %v1870 = vpop.f32.mrf.mxu0
      %v1871 = vadd.f32 %v1527, %v1870
      %v1872 = vand.u32 %v521, 4294901760
      %v1873 = vsub.f32 %v521, %v1872
      %v1874 = vand.u32 %v1873, 4294901760
      %1875 = vmatmul.f32.gmra.mxu0 %v1874
      %v1876 = vpop.f32.mrf.mxu0
      %v1877 = vadd.f32 %v1532, %v1876
      %v1878 = vand.u32 %v524, 4294901760
      %v1879 = vsub.f32 %v524, %v1878
      %v1880 = vand.u32 %v1879, 4294901760
      %1881 = vmatmul.f32.gmra.mxu0 %v1880
      %v1882 = vpop.f32.mrf.mxu0
      %v1883 = vadd.f32 %v1537, %v1882
      %1884 = vdwg.mxu0
      %1885 = vmatpush.msra.mxu0 0.0
      %1886 = vmatpush.msra.mxu0 0.0
      %1887 = vmatpush.msra.mxu0 0.0
      %1888 = vmatpush.msra.mxu0 0.0
      %1889 = vmatpush.msra.mxu0 0.0
      %1890 = vmatpush.msra.mxu0 0.0
      %1891 = vmatpush.msra.mxu0 0.0
      %1892 = vmatpush.msra.mxu0 0.0
      %1893 = vmatpush.msra.mxu0 0.0
      %1894 = vmatpush.msra.mxu0 0.0
      %1895 = vmatpush.msra.mxu0 0.0
      %v1896 = vand.u32 %v528, 4294901760
      %v1897 = vsub.f32 %v528, %v1896
      %v1898 = vand.u32 %v1897, 4294901760
      %1899 = vmatpush.msra.mxu0 %v1898
      %v1900 = vand.u32 %v307, 4294901760
      %v1901 = vsub.f32 %v307, %v1900
      %v1902 = vand.u32 %v1901, 4294901760
      %1903 = vmatpush.msra.mxu0 %v1902
      %v1904 = vand.u32 %v306, 4294901760
      %v1905 = vsub.f32 %v306, %v1904
      %v1906 = vand.u32 %v1905, 4294901760
      %1907 = vmatpush.msra.mxu0 %v1906
      %v1908 = vand.u32 %v305, 4294901760
      %v1909 = vsub.f32 %v305, %v1908
      %v1910 = vand.u32 %v1909, 4294901760
      %1911 = vmatpush.msra.mxu0 %v1910
      %v1912 = vand.u32 %v304, 4294901760
      %v1913 = vsub.f32 %v304, %v1912
      %v1914 = vand.u32 %v1913, 4294901760
      %1915 = vmatpush.msra.mxu0 %v1914
      %v1916 = vand.u32 %v365, 4294901760
      %1917 = vmatmul.f32.gmra.mxu0 %v1916
      %v1918 = vpop.f32.mrf.mxu0
      %v1919 = vadd.f32 %v1565, %v1918
      %v1920 = vand.u32 %v368, 4294901760
      %1921 = vmatmul.f32.gmra.mxu0 %v1920
      %v1922 = vpop.f32.mrf.mxu0
      %v1923 = vadd.f32 %v1571, %v1922
      %v1924 = vand.u32 %v371, 4294901760
      %1925 = vmatmul.f32.gmra.mxu0 %v1924
      %v1926 = vpop.f32.mrf.mxu0
      %v1927 = vadd.f32 %v1577, %v1926
      %v1928 = vand.u32 %v374, 4294901760
      %1929 = vmatmul.f32.gmra.mxu0 %v1928
      %v1930 = vpop.f32.mrf.mxu0
      %v1931 = vadd.f32 %v1583, %v1930
      %v1932 = vand.u32 %v377, 4294901760
      %1933 = vmatmul.f32.gmra.mxu0 %v1932
      %v1934 = vpop.f32.mrf.mxu0
      %v1935 = vadd.f32 %v1589, %v1934
      %v1936 = vand.u32 %v380, 4294901760
      %1937 = vmatmul.f32.gmra.mxu0 %v1936
      %v1938 = vpop.f32.mrf.mxu0
      %v1939 = vadd.f32 %v1595, %v1938
      %v1940 = vand.u32 %v383, 4294901760
      %1941 = vmatmul.f32.gmra.mxu0 %v1940
      %v1942 = vpop.f32.mrf.mxu0
      %v1943 = vadd.f32 %v1601, %v1942
      %v1944 = vand.u32 %v386, 4294901760
      %1945 = vmatmul.f32.gmra.mxu0 %v1944
      %v1946 = vpop.f32.mrf.mxu0
      %v1947 = vadd.f32 %v1607, %v1946
      %v1948 = vand.u32 %v389, 4294901760
      %1949 = vmatmul.f32.gmra.mxu0 %v1948
      %v1950 = vpop.f32.mrf.mxu0
      %v1951 = vadd.f32 %v1613, %v1950
      %v1952 = vand.u32 %v392, 4294901760
      %1953 = vmatmul.f32.gmra.mxu0 %v1952
      %v1954 = vpop.f32.mrf.mxu0
      %v1955 = vadd.f32 %v1619, %v1954
      %v1956 = vand.u32 %v395, 4294901760
      %1957 = vmatmul.f32.gmra.mxu0 %v1956
      %v1958 = vpop.f32.mrf.mxu0
      %v1959 = vadd.f32 %v1625, %v1958
      %v1960 = vand.u32 %v398, 4294901760
      %1961 = vmatmul.f32.gmra.mxu0 %v1960
      %v1962 = vpop.f32.mrf.mxu0
      %v1963 = vadd.f32 %v1631, %v1962
      %v1964 = vand.u32 %v401, 4294901760
      %1965 = vmatmul.f32.gmra.mxu0 %v1964
      %v1966 = vpop.f32.mrf.mxu0
      %v1967 = vadd.f32 %v1637, %v1966
      %v1968 = vand.u32 %v404, 4294901760
      %1969 = vmatmul.f32.gmra.mxu0 %v1968
      %v1970 = vpop.f32.mrf.mxu0
      %v1971 = vadd.f32 %v1643, %v1970
      %v1972 = vand.u32 %v407, 4294901760
      %1973 = vmatmul.f32.gmra.mxu0 %v1972
      %v1974 = vpop.f32.mrf.mxu0
      %v1975 = vadd.f32 %v1649, %v1974
      %v1976 = vand.u32 %v410, 4294901760
      %1977 = vmatmul.f32.gmra.mxu0 %v1976
      %v1978 = vpop.f32.mrf.mxu0
      %v1979 = vadd.f32 %v1655, %v1978
      %v1980 = vand.u32 %v413, 4294901760
      %1981 = vmatmul.f32.gmra.mxu0 %v1980
      %v1982 = vpop.f32.mrf.mxu0
      %v1983 = vadd.f32 %v1661, %v1982
      %v1984 = vand.u32 %v416, 4294901760
      %1985 = vmatmul.f32.gmra.mxu0 %v1984
      %v1986 = vpop.f32.mrf.mxu0
      %v1987 = vadd.f32 %v1667, %v1986
      %v1988 = vand.u32 %v419, 4294901760
      %1989 = vmatmul.f32.gmra.mxu0 %v1988
      %v1990 = vpop.f32.mrf.mxu0
      %v1991 = vadd.f32 %v1673, %v1990
      %v1992 = vand.u32 %v422, 4294901760
      %1993 = vmatmul.f32.gmra.mxu0 %v1992
      %v1994 = vpop.f32.mrf.mxu0
      %v1995 = vadd.f32 %v1679, %v1994
      %v1996 = vand.u32 %v425, 4294901760
      %1997 = vmatmul.f32.gmra.mxu0 %v1996
      %v1998 = vpop.f32.mrf.mxu0
      %v1999 = vadd.f32 %v1685, %v1998
      %v2000 = vand.u32 %v428, 4294901760
      %2001 = vmatmul.f32.gmra.mxu0 %v2000
      %v2002 = vpop.f32.mrf.mxu0
      %v2003 = vadd.f32 %v1691, %v2002
      %v2004 = vand.u32 %v431, 4294901760
      %2005 = vmatmul.f32.gmra.mxu0 %v2004
      %v2006 = vpop.f32.mrf.mxu0
      %v2007 = vadd.f32 %v1697, %v2006
      %v2008 = vand.u32 %v434, 4294901760
      %2009 = vmatmul.f32.gmra.mxu0 %v2008
      %v2010 = vpop.f32.mrf.mxu0
      %v2011 = vadd.f32 %v1703, %v2010
      %v2012 = vand.u32 %v437, 4294901760
      %2013 = vmatmul.f32.gmra.mxu0 %v2012
      %v2014 = vpop.f32.mrf.mxu0
      %v2015 = vadd.f32 %v1709, %v2014
      %v2016 = vand.u32 %v440, 4294901760
      %2017 = vmatmul.f32.gmra.mxu0 %v2016
      %v2018 = vpop.f32.mrf.mxu0
      %v2019 = vadd.f32 %v1715, %v2018
      %v2020 = vand.u32 %v443, 4294901760
      %2021 = vmatmul.f32.gmra.mxu0 %v2020
      %v2022 = vpop.f32.mrf.mxu0
      %v2023 = vadd.f32 %v1721, %v2022
      %v2024 = vand.u32 %v446, 4294901760
      %2025 = vmatmul.f32.gmra.mxu0 %v2024
      %v2026 = vpop.f32.mrf.mxu0
      %v2027 = vadd.f32 %v1727, %v2026
      %v2028 = vand.u32 %v449, 4294901760
      %2029 = vmatmul.f32.gmra.mxu0 %v2028
      %v2030 = vpop.f32.mrf.mxu0
      %v2031 = vadd.f32 %v1733, %v2030
      %v2032 = vand.u32 %v452, 4294901760
      %2033 = vmatmul.f32.gmra.mxu0 %v2032
      %v2034 = vpop.f32.mrf.mxu0
      %v2035 = vadd.f32 %v1739, %v2034
      %v2036 = vand.u32 %v455, 4294901760
      %2037 = vmatmul.f32.gmra.mxu0 %v2036
      %v2038 = vpop.f32.mrf.mxu0
      %v2039 = vadd.f32 %v1745, %v2038
      %v2040 = vand.u32 %v458, 4294901760
      %2041 = vmatmul.f32.gmra.mxu0 %v2040
      %v2042 = vpop.f32.mrf.mxu0
      %v2043 = vadd.f32 %v1751, %v2042
      %v2044 = vand.u32 %v461, 4294901760
      %2045 = vmatmul.f32.gmra.mxu0 %v2044
      %v2046 = vpop.f32.mrf.mxu0
      %v2047 = vadd.f32 %v1757, %v2046
      %v2048 = vand.u32 %v464, 4294901760
      %2049 = vmatmul.f32.gmra.mxu0 %v2048
      %v2050 = vpop.f32.mrf.mxu0
      %v2051 = vadd.f32 %v1763, %v2050
      %v2052 = vand.u32 %v467, 4294901760
      %2053 = vmatmul.f32.gmra.mxu0 %v2052
      %v2054 = vpop.f32.mrf.mxu0
      %v2055 = vadd.f32 %v1769, %v2054
      %v2056 = vand.u32 %v470, 4294901760
      %2057 = vmatmul.f32.gmra.mxu0 %v2056
      %v2058 = vpop.f32.mrf.mxu0
      %v2059 = vadd.f32 %v1775, %v2058
      %v2060 = vand.u32 %v473, 4294901760
      %2061 = vmatmul.f32.gmra.mxu0 %v2060
      %v2062 = vpop.f32.mrf.mxu0
      %v2063 = vadd.f32 %v1781, %v2062
      %v2064 = vand.u32 %v476, 4294901760
      %2065 = vmatmul.f32.gmra.mxu0 %v2064
      %v2066 = vpop.f32.mrf.mxu0
      %v2067 = vadd.f32 %v1787, %v2066
      %v2068 = vand.u32 %v479, 4294901760
      %2069 = vmatmul.f32.gmra.mxu0 %v2068
      %v2070 = vpop.f32.mrf.mxu0
      %v2071 = vadd.f32 %v1793, %v2070
      %v2072 = vand.u32 %v482, 4294901760
      %2073 = vmatmul.f32.gmra.mxu0 %v2072
      %v2074 = vpop.f32.mrf.mxu0
      %v2075 = vadd.f32 %v1799, %v2074
      %v2076 = vand.u32 %v485, 4294901760
      %2077 = vmatmul.f32.gmra.mxu0 %v2076
      %v2078 = vpop.f32.mrf.mxu0
      %v2079 = vadd.f32 %v1805, %v2078
      %v2080 = vand.u32 %v488, 4294901760
      %2081 = vmatmul.f32.gmra.mxu0 %v2080
      %v2082 = vpop.f32.mrf.mxu0
      %v2083 = vadd.f32 %v1811, %v2082
      %v2084 = vand.u32 %v491, 4294901760
      %2085 = vmatmul.f32.gmra.mxu0 %v2084
      %v2086 = vpop.f32.mrf.mxu0
      %v2087 = vadd.f32 %v1817, %v2086
      %v2088 = vand.u32 %v494, 4294901760
      %2089 = vmatmul.f32.gmra.mxu0 %v2088
      %v2090 = vpop.f32.mrf.mxu0
      %v2091 = vadd.f32 %v1823, %v2090
      %v2092 = vand.u32 %v497, 4294901760
      %2093 = vmatmul.f32.gmra.mxu0 %v2092
      %v2094 = vpop.f32.mrf.mxu0
      %v2095 = vadd.f32 %v1829, %v2094
      %v2096 = vand.u32 %v500, 4294901760
      %2097 = vmatmul.f32.gmra.mxu0 %v2096
      %v2098 = vpop.f32.mrf.mxu0
      %v2099 = vadd.f32 %v1835, %v2098
      %v2100 = vand.u32 %v503, 4294901760
      %2101 = vmatmul.f32.gmra.mxu0 %v2100
      %v2102 = vpop.f32.mrf.mxu0
      %v2103 = vadd.f32 %v1841, %v2102
      %v2104 = vand.u32 %v506, 4294901760
      %2105 = vmatmul.f32.gmra.mxu0 %v2104
      %v2106 = vpop.f32.mrf.mxu0
      %v2107 = vadd.f32 %v1847, %v2106
      %v2108 = vand.u32 %v509, 4294901760
      %2109 = vmatmul.f32.gmra.mxu0 %v2108
      %v2110 = vpop.f32.mrf.mxu0
      %v2111 = vadd.f32 %v1853, %v2110
      %v2112 = vand.u32 %v512, 4294901760
      %2113 = vmatmul.f32.gmra.mxu0 %v2112
      %v2114 = vpop.f32.mrf.mxu0
      %v2115 = vadd.f32 %v1859, %v2114
      %v2116 = vand.u32 %v515, 4294901760
      %2117 = vmatmul.f32.gmra.mxu0 %v2116
      %v2118 = vpop.f32.mrf.mxu0
      %v2119 = vadd.f32 %v1865, %v2118
      %v2120 = vand.u32 %v518, 4294901760
      %2121 = vmatmul.f32.gmra.mxu0 %v2120
      %v2122 = vpop.f32.mrf.mxu0
      %v2123 = vadd.f32 %v1871, %v2122
      %v2124 = vand.u32 %v521, 4294901760
      %2125 = vmatmul.f32.gmra.mxu0 %v2124
      %v2126 = vpop.f32.mrf.mxu0
      %v2127 = vadd.f32 %v1877, %v2126
      %v2128 = vand.u32 %v524, 4294901760
      %2129 = vmatmul.f32.gmra.mxu0 %v2128
      %v2130 = vpop.f32.mrf.mxu0
      %v2131 = vadd.f32 %v1883, %v2130
      %2132 = vdwg.mxu0
      %2133 = vmatpush.msra.mxu0 0.0
      %2134 = vmatpush.msra.mxu0 0.0
      %2135 = vmatpush.msra.mxu0 0.0
      %2136 = vmatpush.msra.mxu0 0.0
      %2137 = vmatpush.msra.mxu0 0.0
      %2138 = vmatpush.msra.mxu0 0.0
      %2139 = vmatpush.msra.mxu0 0.0
      %2140 = vmatpush.msra.mxu0 0.0
      %2141 = vmatpush.msra.mxu0 0.0
      %2142 = vmatpush.msra.mxu0 0.0
      %2143 = vmatpush.msra.mxu0 0.0
      %v2144 = vand.u32 %v528, 4294901760
      %2145 = vmatpush.msra.mxu0 %v2144
      %v2146 = vand.u32 %v307, 4294901760
      %2147 = vmatpush.msra.mxu0 %v2146
      %v2148 = vand.u32 %v306, 4294901760
      %2149 = vmatpush.msra.mxu0 %v2148
      %v2150 = vand.u32 %v305, 4294901760
      %2151 = vmatpush.msra.mxu0 %v2150
      %v2152 = vand.u32 %v304, 4294901760
      %2153 = vmatpush.msra.mxu0 %v2152
      %v2154 = vand.u32 %v365, 4294901760
      %2155 = vmatmul.f32.gmra.mxu0 %v2154
      %v2156 = vpop.f32.mrf.mxu0
      %v2157 = vadd.f32 %v1919, %v2156
      %v2158 = vand.u32 %v368, 4294901760
      %2159 = vmatmul.f32.gmra.mxu0 %v2158
      %v2160 = vpop.f32.mrf.mxu0
      %v2161 = vadd.f32 %v1923, %v2160
      %v2162 = vand.u32 %v371, 4294901760
      %2163 = vmatmul.f32.gmra.mxu0 %v2162
      %v2164 = vpop.f32.mrf.mxu0
      %v2165 = vadd.f32 %v1927, %v2164
      %v2166 = vand.u32 %v374, 4294901760
      %2167 = vmatmul.f32.gmra.mxu0 %v2166
      %v2168 = vpop.f32.mrf.mxu0
      %v2169 = vadd.f32 %v1931, %v2168
      %v2170 = vand.u32 %v377, 4294901760
      %2171 = vmatmul.f32.gmra.mxu0 %v2170
      %v2172 = vpop.f32.mrf.mxu0
      %v2173 = vadd.f32 %v1935, %v2172
      %v2174 = vand.u32 %v380, 4294901760
      %2175 = vmatmul.f32.gmra.mxu0 %v2174
      %v2176 = vpop.f32.mrf.mxu0
      %v2177 = vadd.f32 %v1939, %v2176
      %v2178 = vand.u32 %v383, 4294901760
      %2179 = vmatmul.f32.gmra.mxu0 %v2178
      %v2180 = vpop.f32.mrf.mxu0
      %v2181 = vadd.f32 %v1943, %v2180
      %v2182 = vand.u32 %v386, 4294901760
      %2183 = vmatmul.f32.gmra.mxu0 %v2182
      %v2184 = vpop.f32.mrf.mxu0
      %v2185 = vadd.f32 %v1947, %v2184
      %v2186 = vand.u32 %v389, 4294901760
      %2187 = vmatmul.f32.gmra.mxu0 %v2186
      %v2188 = vpop.f32.mrf.mxu0
      %v2189 = vadd.f32 %v1951, %v2188
      %v2190 = vand.u32 %v392, 4294901760
      %2191 = vmatmul.f32.gmra.mxu0 %v2190
      %v2192 = vpop.f32.mrf.mxu0
      %v2193 = vadd.f32 %v1955, %v2192
      %v2194 = vand.u32 %v395, 4294901760
      %2195 = vmatmul.f32.gmra.mxu0 %v2194
      %v2196 = vpop.f32.mrf.mxu0
      %v2197 = vadd.f32 %v1959, %v2196
      %v2198 = vand.u32 %v398, 4294901760
      %2199 = vmatmul.f32.gmra.mxu0 %v2198
      %v2200 = vpop.f32.mrf.mxu0
      %v2201 = vadd.f32 %v1963, %v2200
      %v2202 = vand.u32 %v401, 4294901760
      %2203 = vmatmul.f32.gmra.mxu0 %v2202
      %v2204 = vpop.f32.mrf.mxu0
      %v2205 = vadd.f32 %v1967, %v2204
      %v2206 = vand.u32 %v404, 4294901760
      %2207 = vmatmul.f32.gmra.mxu0 %v2206
      %v2208 = vpop.f32.mrf.mxu0
      %v2209 = vadd.f32 %v1971, %v2208
      %v2210 = vand.u32 %v407, 4294901760
      %2211 = vmatmul.f32.gmra.mxu0 %v2210
      %v2212 = vpop.f32.mrf.mxu0
      %v2213 = vadd.f32 %v1975, %v2212
      %v2214 = vand.u32 %v410, 4294901760
      %2215 = vmatmul.f32.gmra.mxu0 %v2214
      %v2216 = vpop.f32.mrf.mxu0
      %v2217 = vadd.f32 %v1979, %v2216
      %v2218 = vand.u32 %v413, 4294901760
      %2219 = vmatmul.f32.gmra.mxu0 %v2218
      %v2220 = vpop.f32.mrf.mxu0
      %v2221 = vadd.f32 %v1983, %v2220
      %v2222 = vand.u32 %v416, 4294901760
      %2223 = vmatmul.f32.gmra.mxu0 %v2222
      %v2224 = vpop.f32.mrf.mxu0
      %v2225 = vadd.f32 %v1987, %v2224
      %v2226 = vand.u32 %v419, 4294901760
      %2227 = vmatmul.f32.gmra.mxu0 %v2226
      %v2228 = vpop.f32.mrf.mxu0
      %v2229 = vadd.f32 %v1991, %v2228
      %v2230 = vand.u32 %v422, 4294901760
      %2231 = vmatmul.f32.gmra.mxu0 %v2230
      %v2232 = vpop.f32.mrf.mxu0
      %v2233 = vadd.f32 %v1995, %v2232
      %v2234 = vand.u32 %v425, 4294901760
      %2235 = vmatmul.f32.gmra.mxu0 %v2234
      %v2236 = vpop.f32.mrf.mxu0
      %v2237 = vadd.f32 %v1999, %v2236
      %v2238 = vand.u32 %v428, 4294901760
      %2239 = vmatmul.f32.gmra.mxu0 %v2238
      %v2240 = vpop.f32.mrf.mxu0
      %v2241 = vadd.f32 %v2003, %v2240
      %v2242 = vand.u32 %v431, 4294901760
      %2243 = vmatmul.f32.gmra.mxu0 %v2242
      %v2244 = vpop.f32.mrf.mxu0
      %v2245 = vadd.f32 %v2007, %v2244
      %v2246 = vand.u32 %v434, 4294901760
      %2247 = vmatmul.f32.gmra.mxu0 %v2246
      %v2248 = vpop.f32.mrf.mxu0
      %v2249 = vadd.f32 %v2011, %v2248
      %v2250 = vand.u32 %v437, 4294901760
      %2251 = vmatmul.f32.gmra.mxu0 %v2250
      %v2252 = vpop.f32.mrf.mxu0
      %v2253 = vadd.f32 %v2015, %v2252
      %v2254 = vand.u32 %v440, 4294901760
      %2255 = vmatmul.f32.gmra.mxu0 %v2254
      %v2256 = vpop.f32.mrf.mxu0
      %v2257 = vadd.f32 %v2019, %v2256
      %v2258 = vand.u32 %v443, 4294901760
      %2259 = vmatmul.f32.gmra.mxu0 %v2258
      %v2260 = vpop.f32.mrf.mxu0
      %v2261 = vadd.f32 %v2023, %v2260
      %v2262 = vand.u32 %v446, 4294901760
      %2263 = vmatmul.f32.gmra.mxu0 %v2262
      %v2264 = vpop.f32.mrf.mxu0
      %v2265 = vadd.f32 %v2027, %v2264
      %v2266 = vand.u32 %v449, 4294901760
      %2267 = vmatmul.f32.gmra.mxu0 %v2266
      %v2268 = vpop.f32.mrf.mxu0
      %v2269 = vadd.f32 %v2031, %v2268
      %v2270 = vand.u32 %v452, 4294901760
      %2271 = vmatmul.f32.gmra.mxu0 %v2270
      %v2272 = vpop.f32.mrf.mxu0
      %v2273 = vadd.f32 %v2035, %v2272
      %v2274 = vand.u32 %v455, 4294901760
      %2275 = vmatmul.f32.gmra.mxu0 %v2274
      %v2276 = vpop.f32.mrf.mxu0
      %v2277 = vadd.f32 %v2039, %v2276
      %v2278 = vand.u32 %v458, 4294901760
      %2279 = vmatmul.f32.gmra.mxu0 %v2278
      %v2280 = vpop.f32.mrf.mxu0
      %v2281 = vadd.f32 %v2043, %v2280
      %v2282 = vand.u32 %v461, 4294901760
      %2283 = vmatmul.f32.gmra.mxu0 %v2282
      %v2284 = vpop.f32.mrf.mxu0
      %v2285 = vadd.f32 %v2047, %v2284
      %v2286 = vand.u32 %v464, 4294901760
      %2287 = vmatmul.f32.gmra.mxu0 %v2286
      %v2288 = vpop.f32.mrf.mxu0
      %v2289 = vadd.f32 %v2051, %v2288
      %v2290 = vand.u32 %v467, 4294901760
      %2291 = vmatmul.f32.gmra.mxu0 %v2290
      %v2292 = vpop.f32.mrf.mxu0
      %v2293 = vadd.f32 %v2055, %v2292
      %v2294 = vand.u32 %v470, 4294901760
      %2295 = vmatmul.f32.gmra.mxu0 %v2294
      %v2296 = vpop.f32.mrf.mxu0
      %v2297 = vadd.f32 %v2059, %v2296
      %v2298 = vand.u32 %v473, 4294901760
      %2299 = vmatmul.f32.gmra.mxu0 %v2298
      %v2300 = vpop.f32.mrf.mxu0
      %v2301 = vadd.f32 %v2063, %v2300
      %v2302 = vand.u32 %v476, 4294901760
      %2303 = vmatmul.f32.gmra.mxu0 %v2302
      %v2304 = vpop.f32.mrf.mxu0
      %v2305 = vadd.f32 %v2067, %v2304
      %v2306 = vand.u32 %v479, 4294901760
      %2307 = vmatmul.f32.gmra.mxu0 %v2306
      %v2308 = vpop.f32.mrf.mxu0
      %v2309 = vadd.f32 %v2071, %v2308
      %v2310 = vand.u32 %v482, 4294901760
      %2311 = vmatmul.f32.gmra.mxu0 %v2310
      %v2312 = vpop.f32.mrf.mxu0
      %v2313 = vadd.f32 %v2075, %v2312
      %v2314 = vand.u32 %v485, 4294901760
      %2315 = vmatmul.f32.gmra.mxu0 %v2314
      %v2316 = vpop.f32.mrf.mxu0
      %v2317 = vadd.f32 %v2079, %v2316
      %v2318 = vand.u32 %v488, 4294901760
      %2319 = vmatmul.f32.gmra.mxu0 %v2318
      %v2320 = vpop.f32.mrf.mxu0
      %v2321 = vadd.f32 %v2083, %v2320
      %v2322 = vand.u32 %v491, 4294901760
      %2323 = vmatmul.f32.gmra.mxu0 %v2322
      %v2324 = vpop.f32.mrf.mxu0
      %v2325 = vadd.f32 %v2087, %v2324
      %v2326 = vand.u32 %v494, 4294901760
      %2327 = vmatmul.f32.gmra.mxu0 %v2326
      %v2328 = vpop.f32.mrf.mxu0
      %v2329 = vadd.f32 %v2091, %v2328
      %v2330 = vand.u32 %v497, 4294901760
      %2331 = vmatmul.f32.gmra.mxu0 %v2330
      %v2332 = vpop.f32.mrf.mxu0
      %v2333 = vadd.f32 %v2095, %v2332
      %v2334 = vand.u32 %v500, 4294901760
      %2335 = vmatmul.f32.gmra.mxu0 %v2334
      %v2336 = vpop.f32.mrf.mxu0
      %v2337 = vadd.f32 %v2099, %v2336
      %v2338 = vand.u32 %v503, 4294901760
      %2339 = vmatmul.f32.gmra.mxu0 %v2338
      %v2340 = vpop.f32.mrf.mxu0
      %v2341 = vadd.f32 %v2103, %v2340
      %v2342 = vand.u32 %v506, 4294901760
      %2343 = vmatmul.f32.gmra.mxu0 %v2342
      %v2344 = vpop.f32.mrf.mxu0
      %v2345 = vadd.f32 %v2107, %v2344
      %v2346 = vand.u32 %v509, 4294901760
      %2347 = vmatmul.f32.gmra.mxu0 %v2346
      %v2348 = vpop.f32.mrf.mxu0
      %v2349 = vadd.f32 %v2111, %v2348
      %v2350 = vand.u32 %v512, 4294901760
      %2351 = vmatmul.f32.gmra.mxu0 %v2350
      %v2352 = vpop.f32.mrf.mxu0
      %v2353 = vadd.f32 %v2115, %v2352
      %v2354 = vand.u32 %v515, 4294901760
      %2355 = vmatmul.f32.gmra.mxu0 %v2354
      %v2356 = vpop.f32.mrf.mxu0
      %v2357 = vadd.f32 %v2119, %v2356
      %v2358 = vand.u32 %v518, 4294901760
      %2359 = vmatmul.f32.gmra.mxu0 %v2358
      %v2360 = vpop.f32.mrf.mxu0
      %v2361 = vadd.f32 %v2123, %v2360
      %v2362 = vand.u32 %v521, 4294901760
      %2363 = vmatmul.f32.gmra.mxu0 %v2362
      %v2364 = vpop.f32.mrf.mxu0
      %v2365 = vadd.f32 %v2127, %v2364
      %v2366 = vand.u32 %v524, 4294901760
      %2367 = vmatmul.f32.gmra.mxu0 %v2366
      %v2368 = vpop.f32.mrf.mxu0
      %v2369 = vadd.f32 %v2131, %v2368
      %2370 = vdwg.mxu0
      %v2371 = vxor.u32 %v2157, 2147483648
      %v2372 = vxor.u32 %v2161, 2147483648
      %v2373 = vxor.u32 %v2165, 2147483648
      %v2374 = vxor.u32 %v2169, 2147483648
      %v2375 = vxor.u32 %v2173, 2147483648
      %v2376 = vxor.u32 %v2177, 2147483648
      %v2377 = vxor.u32 %v2181, 2147483648
      %v2378 = vxor.u32 %v2185, 2147483648
      %v2379 = vxor.u32 %v2189, 2147483648
      %v2380 = vxor.u32 %v2193, 2147483648
      %v2381 = vxor.u32 %v2197, 2147483648
      %v2382 = vxor.u32 %v2201, 2147483648
      %v2383 = vxor.u32 %v2205, 2147483648
      %v2384 = vxor.u32 %v2209, 2147483648
      %v2385 = vxor.u32 %v2213, 2147483648
      %v2386 = vxor.u32 %v2217, 2147483648
      %v2387 = vxor.u32 %v2221, 2147483648
      %v2388 = vxor.u32 %v2225, 2147483648
      %v2389 = vxor.u32 %v2229, 2147483648
      %v2390 = vxor.u32 %v2233, 2147483648
      %v2391 = vxor.u32 %v2237, 2147483648
      %v2392 = vxor.u32 %v2241, 2147483648
      %v2393 = vxor.u32 %v2245, 2147483648
      %v2394 = vxor.u32 %v2249, 2147483648
      %v2395 = vxor.u32 %v2253, 2147483648
      %v2396 = vxor.u32 %v2257, 2147483648
      %v2397 = vxor.u32 %v2261, 2147483648
      %v2398 = vxor.u32 %v2265, 2147483648
      %v2399 = vxor.u32 %v2269, 2147483648
      %v2400 = vxor.u32 %v2273, 2147483648
      %v2401 = vxor.u32 %v2277, 2147483648
      %v2402 = vxor.u32 %v2281, 2147483648
      %v2403 = vxor.u32 %v2285, 2147483648
      %v2404 = vxor.u32 %v2289, 2147483648
      %v2405 = vxor.u32 %v2293, 2147483648
      %v2406 = vxor.u32 %v2297, 2147483648
      %v2407 = vxor.u32 %v2301, 2147483648
      %v2408 = vxor.u32 %v2305, 2147483648
      %v2409 = vxor.u32 %v2309, 2147483648
      %v2410 = vxor.u32 %v2313, 2147483648
      %v2411 = vxor.u32 %v2317, 2147483648
      %v2412 = vxor.u32 %v2321, 2147483648
      %v2413 = vxor.u32 %v2325, 2147483648
      %v2414 = vxor.u32 %v2329, 2147483648
      %v2415 = vxor.u32 %v2333, 2147483648
      %v2416 = vxor.u32 %v2337, 2147483648
      %v2417 = vxor.u32 %v2341, 2147483648
      %v2418 = vxor.u32 %v2345, 2147483648
      %v2419 = vxor.u32 %v2349, 2147483648
      %v2420 = vxor.u32 %v2353, 2147483648
      %v2421 = vxor.u32 %v2357, 2147483648
      %v2422 = vxor.u32 %v2361, 2147483648
      %v2423 = vxor.u32 %v2365, 2147483648
      %v2424 = vxor.u32 %v2369, 2147483648
      %v2425 = vmul.f32 %v2371, 1.442695
      %v2426 = vpow.pop %v2425
      %v2427 = vmul.f32 %v2372, 1.442695
      %v2428 = vpow.pop %v2427
      %v2429 = vmul.f32 %v2373, 1.442695
      %v2430 = vpow.pop %v2429
      %v2431 = vmul.f32 %v2374, 1.442695
      %v2432 = vpow.pop %v2431
      %v2433 = vmul.f32 %v2375, 1.442695
      %v2434 = vpow.pop %v2433
      %v2435 = vmul.f32 %v2376, 1.442695
      %v2436 = vpow.pop %v2435
      %v2437 = vmul.f32 %v2377, 1.442695
      %v2438 = vpow.pop %v2437
      %v2439 = vmul.f32 %v2378, 1.442695
      %v2440 = vpow.pop %v2439
      %v2441 = vmul.f32 %v2379, 1.442695
      %v2442 = vpow.pop %v2441
      %v2443 = vmul.f32 %v2380, 1.442695
      %v2444 = vpow.pop %v2443
      %v2445 = vmul.f32 %v2381, 1.442695
      %v2446 = vpow.pop %v2445
      %v2447 = vmul.f32 %v2382, 1.442695
      %v2448 = vpow.pop %v2447
      %v2449 = vmul.f32 %v2383, 1.442695
      %v2450 = vpow.pop %v2449
      %v2451 = vmul.f32 %v2384, 1.442695
      %v2452 = vpow.pop %v2451
      %v2453 = vmul.f32 %v2385, 1.442695
      %v2454 = vpow.pop %v2453
      %v2455 = vmul.f32 %v2386, 1.442695
      %v2456 = vpow.pop %v2455
      %v2457 = vmul.f32 %v2387, 1.442695
      %v2458 = vpow.pop %v2457
      %v2459 = vmul.f32 %v2388, 1.442695
      %v2460 = vpow.pop %v2459
      %v2461 = vmul.f32 %v2389, 1.442695
      %v2462 = vpow.pop %v2461
      %v2463 = vmul.f32 %v2390, 1.442695
      %v2464 = vpow.pop %v2463
      %v2465 = vmul.f32 %v2391, 1.442695
      %v2466 = vpow.pop %v2465
      %v2467 = vmul.f32 %v2392, 1.442695
      %v2468 = vpow.pop %v2467
      %v2469 = vmul.f32 %v2393, 1.442695
      %v2470 = vpow.pop %v2469
      %v2471 = vmul.f32 %v2394, 1.442695
      %v2472 = vpow.pop %v2471
      %v2473 = vmul.f32 %v2395, 1.442695
      %v2474 = vpow.pop %v2473
      %v2475 = vmul.f32 %v2396, 1.442695
      %v2476 = vpow.pop %v2475
      %v2477 = vmul.f32 %v2397, 1.442695
      %v2478 = vpow.pop %v2477
      %v2479 = vmul.f32 %v2398, 1.442695
      %v2480 = vpow.pop %v2479
      %v2481 = vmul.f32 %v2399, 1.442695
      %v2482 = vpow.pop %v2481
      %v2483 = vmul.f32 %v2400, 1.442695
      %v2484 = vpow.pop %v2483
      %v2485 = vmul.f32 %v2401, 1.442695
      %v2486 = vpow.pop %v2485
      %v2487 = vmul.f32 %v2402, 1.442695
      %v2488 = vpow.pop %v2487
      %v2489 = vmul.f32 %v2403, 1.442695
      %v2490 = vpow.pop %v2489
      %v2491 = vmul.f32 %v2404, 1.442695
      %v2492 = vpow.pop %v2491
      %v2493 = vmul.f32 %v2405, 1.442695
      %v2494 = vpow.pop %v2493
      %v2495 = vmul.f32 %v2406, 1.442695
      %v2496 = vpow.pop %v2495
      %v2497 = vmul.f32 %v2407, 1.442695
      %v2498 = vpow.pop %v2497
      %v2499 = vmul.f32 %v2408, 1.442695
      %v2500 = vpow.pop %v2499
      %v2501 = vmul.f32 %v2409, 1.442695
      %v2502 = vpow.pop %v2501
      %v2503 = vmul.f32 %v2410, 1.442695
      %v2504 = vpow.pop %v2503
      %v2505 = vmul.f32 %v2411, 1.442695
      %v2506 = vpow.pop %v2505
      %v2507 = vmul.f32 %v2412, 1.442695
      %v2508 = vpow.pop %v2507
      %v2509 = vmul.f32 %v2413, 1.442695
      %v2510 = vpow.pop %v2509
      %v2511 = vmul.f32 %v2414, 1.442695
      %v2512 = vpow.pop %v2511
      %v2513 = vmul.f32 %v2415, 1.442695
      %v2514 = vpow.pop %v2513
      %v2515 = vmul.f32 %v2416, 1.442695
      %v2516 = vpow.pop %v2515
      %v2517 = vmul.f32 %v2417, 1.442695
      %v2518 = vpow.pop %v2517
      %v2519 = vmul.f32 %v2418, 1.442695
      %v2520 = vpow.pop %v2519
      %v2521 = vmul.f32 %v2419, 1.442695
      %v2522 = vpow.pop %v2521
      %v2523 = vmul.f32 %v2420, 1.442695
      %v2524 = vpow.pop %v2523
      %v2525 = vmul.f32 %v2421, 1.442695
      %v2526 = vpow.pop %v2525
      %v2527 = vmul.f32 %v2422, 1.442695
      %v2528 = vpow.pop %v2527
      %v2529 = vmul.f32 %v2423, 1.442695
      %v2530 = vpow.pop %v2529
      %v2531 = vmul.f32 %v2424, 1.442695
      %v2532 = vpow.pop %v2531
      %v2533 = vadd.f32 %v2426, 1.0
      %v2534 = vadd.f32 %v2428, 1.0
      %v2535 = vadd.f32 %v2430, 1.0
      %v2536 = vadd.f32 %v2432, 1.0
      %v2537 = vadd.f32 %v2434, 1.0
      %v2538 = vadd.f32 %v2436, 1.0
      %v2539 = vadd.f32 %v2438, 1.0
      %v2540 = vadd.f32 %v2440, 1.0
      %v2541 = vadd.f32 %v2442, 1.0
      %v2542 = vadd.f32 %v2444, 1.0
      %v2543 = vadd.f32 %v2446, 1.0
      %v2544 = vadd.f32 %v2448, 1.0
      %v2545 = vadd.f32 %v2450, 1.0
      %v2546 = vadd.f32 %v2452, 1.0
      %v2547 = vadd.f32 %v2454, 1.0
      %v2548 = vadd.f32 %v2456, 1.0
      %v2549 = vadd.f32 %v2458, 1.0
      %v2550 = vadd.f32 %v2460, 1.0
      %v2551 = vadd.f32 %v2462, 1.0
      %v2552 = vadd.f32 %v2464, 1.0
      %v2553 = vadd.f32 %v2466, 1.0
      %v2554 = vadd.f32 %v2468, 1.0
      %v2555 = vadd.f32 %v2470, 1.0
      %v2556 = vadd.f32 %v2472, 1.0
      %v2557 = vadd.f32 %v2474, 1.0
      %v2558 = vadd.f32 %v2476, 1.0
      %v2559 = vadd.f32 %v2478, 1.0
      %v2560 = vadd.f32 %v2480, 1.0
      %v2561 = vadd.f32 %v2482, 1.0
      %v2562 = vadd.f32 %v2484, 1.0
      %v2563 = vadd.f32 %v2486, 1.0
      %v2564 = vadd.f32 %v2488, 1.0
      %v2565 = vadd.f32 %v2490, 1.0
      %v2566 = vadd.f32 %v2492, 1.0
      %v2567 = vadd.f32 %v2494, 1.0
      %v2568 = vadd.f32 %v2496, 1.0
      %v2569 = vadd.f32 %v2498, 1.0
      %v2570 = vadd.f32 %v2500, 1.0
      %v2571 = vadd.f32 %v2502, 1.0
      %v2572 = vadd.f32 %v2504, 1.0
      %v2573 = vadd.f32 %v2506, 1.0
      %v2574 = vadd.f32 %v2508, 1.0
      %v2575 = vadd.f32 %v2510, 1.0
      %v2576 = vadd.f32 %v2512, 1.0
      %v2577 = vadd.f32 %v2514, 1.0
      %v2578 = vadd.f32 %v2516, 1.0
      %v2579 = vadd.f32 %v2518, 1.0
      %v2580 = vadd.f32 %v2520, 1.0
      %v2581 = vadd.f32 %v2522, 1.0
      %v2582 = vadd.f32 %v2524, 1.0
      %v2583 = vadd.f32 %v2526, 1.0
      %v2584 = vadd.f32 %v2528, 1.0
      %v2585 = vadd.f32 %v2530, 1.0
      %v2586 = vadd.f32 %v2532, 1.0
      %v2587 = vrcp.pop %v2533
      %v2588 = vmul.f32 %v2533, %v2587
      %v2589 = vsub.f32 1.0, %v2588
      %v2590 = vmul.f32 %v2587, %v2589
      %v2591 = vadd.f32 %v2587, %v2590
      %vm2592 = vweird.f32 %v2533
      %vm2593 = vweird.f32 %v2587
      %vm2594 = vmor %vm2592, %vm2593
      %v2595 = vsel %vm2594, %v2587, %v2591
      %v2596 = vand.u32 2147483647, %v2533
      %vm2597 = vcmp.eq.f32.partialorder %v2596, 8.507059e+37
      %v2598 = vand.u32 %v2533, 2147483648
      %v2599 = vor.u32 1.1754944e-38, %v2598
      %v2600 = vsel %vm2597, %v2599, %v2595
      %v2601 = vmul.f32 1.0, %v2600
      %v2602 = vrcp.pop %v2534
      %v2603 = vmul.f32 %v2534, %v2602
      %v2604 = vsub.f32 1.0, %v2603
      %v2605 = vmul.f32 %v2602, %v2604
      %v2606 = vadd.f32 %v2602, %v2605
      %vm2607 = vweird.f32 %v2534
      %vm2608 = vweird.f32 %v2602
      %vm2609 = vmor %vm2607, %vm2608
      %v2610 = vsel %vm2609, %v2602, %v2606
      %v2611 = vand.u32 2147483647, %v2534
      %vm2612 = vcmp.eq.f32.partialorder %v2611, 8.507059e+37
      %v2613 = vand.u32 %v2534, 2147483648
      %v2614 = vor.u32 1.1754944e-38, %v2613
      %v2615 = vsel %vm2612, %v2614, %v2610
      %v2616 = vmul.f32 1.0, %v2615
      %v2617 = vrcp.pop %v2535
      %v2618 = vmul.f32 %v2535, %v2617
      %v2619 = vsub.f32 1.0, %v2618
      %v2620 = vmul.f32 %v2617, %v2619
      %v2621 = vadd.f32 %v2617, %v2620
      %vm2622 = vweird.f32 %v2535
      %vm2623 = vweird.f32 %v2617
      %vm2624 = vmor %vm2622, %vm2623
      %v2625 = vsel %vm2624, %v2617, %v2621
      %v2626 = vand.u32 2147483647, %v2535
      %vm2627 = vcmp.eq.f32.partialorder %v2626, 8.507059e+37
      %v2628 = vand.u32 %v2535, 2147483648
      %v2629 = vor.u32 1.1754944e-38, %v2628
      %v2630 = vsel %vm2627, %v2629, %v2625
      %v2631 = vmul.f32 1.0, %v2630
      %v2632 = vrcp.pop %v2536
      %v2633 = vmul.f32 %v2536, %v2632
      %v2634 = vsub.f32 1.0, %v2633
      %v2635 = vmul.f32 %v2632, %v2634
      %v2636 = vadd.f32 %v2632, %v2635
      %vm2637 = vweird.f32 %v2536
      %vm2638 = vweird.f32 %v2632
      %vm2639 = vmor %vm2637, %vm2638
      %v2640 = vsel %vm2639, %v2632, %v2636
      %v2641 = vand.u32 2147483647, %v2536
      %vm2642 = vcmp.eq.f32.partialorder %v2641, 8.507059e+37
      %v2643 = vand.u32 %v2536, 2147483648
      %v2644 = vor.u32 1.1754944e-38, %v2643
      %v2645 = vsel %vm2642, %v2644, %v2640
      %v2646 = vmul.f32 1.0, %v2645
      %v2647 = vrcp.pop %v2537
      %v2648 = vmul.f32 %v2537, %v2647
      %v2649 = vsub.f32 1.0, %v2648
      %v2650 = vmul.f32 %v2647, %v2649
      %v2651 = vadd.f32 %v2647, %v2650
      %vm2652 = vweird.f32 %v2537
      %vm2653 = vweird.f32 %v2647
      %vm2654 = vmor %vm2652, %vm2653
      %v2655 = vsel %vm2654, %v2647, %v2651
      %v2656 = vand.u32 2147483647, %v2537
      %vm2657 = vcmp.eq.f32.partialorder %v2656, 8.507059e+37
      %v2658 = vand.u32 %v2537, 2147483648
      %v2659 = vor.u32 1.1754944e-38, %v2658
      %v2660 = vsel %vm2657, %v2659, %v2655
      %v2661 = vmul.f32 1.0, %v2660
      %v2662 = vrcp.pop %v2538
      %v2663 = vmul.f32 %v2538, %v2662
      %v2664 = vsub.f32 1.0, %v2663
      %v2665 = vmul.f32 %v2662, %v2664
      %v2666 = vadd.f32 %v2662, %v2665
      %vm2667 = vweird.f32 %v2538
      %vm2668 = vweird.f32 %v2662
      %vm2669 = vmor %vm2667, %vm2668
      %v2670 = vsel %vm2669, %v2662, %v2666
      %v2671 = vand.u32 2147483647, %v2538
      %vm2672 = vcmp.eq.f32.partialorder %v2671, 8.507059e+37
      %v2673 = vand.u32 %v2538, 2147483648
      %v2674 = vor.u32 1.1754944e-38, %v2673
      %v2675 = vsel %vm2672, %v2674, %v2670
      %v2676 = vmul.f32 1.0, %v2675
      %v2677 = vrcp.pop %v2539
      %v2678 = vmul.f32 %v2539, %v2677
      %v2679 = vsub.f32 1.0, %v2678
      %v2680 = vmul.f32 %v2677, %v2679
      %v2681 = vadd.f32 %v2677, %v2680
      %vm2682 = vweird.f32 %v2539
      %vm2683 = vweird.f32 %v2677
      %vm2684 = vmor %vm2682, %vm2683
      %v2685 = vsel %vm2684, %v2677, %v2681
      %v2686 = vand.u32 2147483647, %v2539
      %vm2687 = vcmp.eq.f32.partialorder %v2686, 8.507059e+37
      %v2688 = vand.u32 %v2539, 2147483648
      %v2689 = vor.u32 1.1754944e-38, %v2688
      %v2690 = vsel %vm2687, %v2689, %v2685
      %v2691 = vmul.f32 1.0, %v2690
      %v2692 = vrcp.pop %v2540
      %v2693 = vmul.f32 %v2540, %v2692
      %v2694 = vsub.f32 1.0, %v2693
      %v2695 = vmul.f32 %v2692, %v2694
      %v2696 = vadd.f32 %v2692, %v2695
      %vm2697 = vweird.f32 %v2540
      %vm2698 = vweird.f32 %v2692
      %vm2699 = vmor %vm2697, %vm2698
      %v2700 = vsel %vm2699, %v2692, %v2696
      %v2701 = vand.u32 2147483647, %v2540
      %vm2702 = vcmp.eq.f32.partialorder %v2701, 8.507059e+37
      %v2703 = vand.u32 %v2540, 2147483648
      %v2704 = vor.u32 1.1754944e-38, %v2703
      %v2705 = vsel %vm2702, %v2704, %v2700
      %v2706 = vmul.f32 1.0, %v2705
      %v2707 = vrcp.pop %v2541
      %v2708 = vmul.f32 %v2541, %v2707
      %v2709 = vsub.f32 1.0, %v2708
      %v2710 = vmul.f32 %v2707, %v2709
      %v2711 = vadd.f32 %v2707, %v2710
      %vm2712 = vweird.f32 %v2541
      %vm2713 = vweird.f32 %v2707
      %vm2714 = vmor %vm2712, %vm2713
      %v2715 = vsel %vm2714, %v2707, %v2711
      %v2716 = vand.u32 2147483647, %v2541
      %vm2717 = vcmp.eq.f32.partialorder %v2716, 8.507059e+37
      %v2718 = vand.u32 %v2541, 2147483648
      %v2719 = vor.u32 1.1754944e-38, %v2718
      %v2720 = vsel %vm2717, %v2719, %v2715
      %v2721 = vmul.f32 1.0, %v2720
      %v2722 = vrcp.pop %v2542
      %v2723 = vmul.f32 %v2542, %v2722
      %v2724 = vsub.f32 1.0, %v2723
      %v2725 = vmul.f32 %v2722, %v2724
      %v2726 = vadd.f32 %v2722, %v2725
      %vm2727 = vweird.f32 %v2542
      %vm2728 = vweird.f32 %v2722
      %vm2729 = vmor %vm2727, %vm2728
      %v2730 = vsel %vm2729, %v2722, %v2726
      %v2731 = vand.u32 2147483647, %v2542
      %vm2732 = vcmp.eq.f32.partialorder %v2731, 8.507059e+37
      %v2733 = vand.u32 %v2542, 2147483648
      %v2734 = vor.u32 1.1754944e-38, %v2733
      %v2735 = vsel %vm2732, %v2734, %v2730
      %v2736 = vmul.f32 1.0, %v2735
      %v2737 = vrcp.pop %v2543
      %v2738 = vmul.f32 %v2543, %v2737
      %v2739 = vsub.f32 1.0, %v2738
      %v2740 = vmul.f32 %v2737, %v2739
      %v2741 = vadd.f32 %v2737, %v2740
      %vm2742 = vweird.f32 %v2543
      %vm2743 = vweird.f32 %v2737
      %vm2744 = vmor %vm2742, %vm2743
      %v2745 = vsel %vm2744, %v2737, %v2741
      %v2746 = vand.u32 2147483647, %v2543
      %vm2747 = vcmp.eq.f32.partialorder %v2746, 8.507059e+37
      %v2748 = vand.u32 %v2543, 2147483648
      %v2749 = vor.u32 1.1754944e-38, %v2748
      %v2750 = vsel %vm2747, %v2749, %v2745
      %v2751 = vmul.f32 1.0, %v2750
      %v2752 = vrcp.pop %v2544
      %v2753 = vmul.f32 %v2544, %v2752
      %v2754 = vsub.f32 1.0, %v2753
      %v2755 = vmul.f32 %v2752, %v2754
      %v2756 = vadd.f32 %v2752, %v2755
      %vm2757 = vweird.f32 %v2544
      %vm2758 = vweird.f32 %v2752
      %vm2759 = vmor %vm2757, %vm2758
      %v2760 = vsel %vm2759, %v2752, %v2756
      %v2761 = vand.u32 2147483647, %v2544
      %vm2762 = vcmp.eq.f32.partialorder %v2761, 8.507059e+37
      %v2763 = vand.u32 %v2544, 2147483648
      %v2764 = vor.u32 1.1754944e-38, %v2763
      %v2765 = vsel %vm2762, %v2764, %v2760
      %v2766 = vmul.f32 1.0, %v2765
      %v2767 = vrcp.pop %v2545
      %v2768 = vmul.f32 %v2545, %v2767
      %v2769 = vsub.f32 1.0, %v2768
      %v2770 = vmul.f32 %v2767, %v2769
      %v2771 = vadd.f32 %v2767, %v2770
      %vm2772 = vweird.f32 %v2545
      %vm2773 = vweird.f32 %v2767
      %vm2774 = vmor %vm2772, %vm2773
      %v2775 = vsel %vm2774, %v2767, %v2771
      %v2776 = vand.u32 2147483647, %v2545
      %vm2777 = vcmp.eq.f32.partialorder %v2776, 8.507059e+37
      %v2778 = vand.u32 %v2545, 2147483648
      %v2779 = vor.u32 1.1754944e-38, %v2778
      %v2780 = vsel %vm2777, %v2779, %v2775
      %v2781 = vmul.f32 1.0, %v2780
      %v2782 = vrcp.pop %v2546
      %v2783 = vmul.f32 %v2546, %v2782
      %v2784 = vsub.f32 1.0, %v2783
      %v2785 = vmul.f32 %v2782, %v2784
      %v2786 = vadd.f32 %v2782, %v2785
      %vm2787 = vweird.f32 %v2546
      %vm2788 = vweird.f32 %v2782
      %vm2789 = vmor %vm2787, %vm2788
      %v2790 = vsel %vm2789, %v2782, %v2786
      %v2791 = vand.u32 2147483647, %v2546
      %vm2792 = vcmp.eq.f32.partialorder %v2791, 8.507059e+37
      %v2793 = vand.u32 %v2546, 2147483648
      %v2794 = vor.u32 1.1754944e-38, %v2793
      %v2795 = vsel %vm2792, %v2794, %v2790
      %v2796 = vmul.f32 1.0, %v2795
      %v2797 = vrcp.pop %v2547
      %v2798 = vmul.f32 %v2547, %v2797
      %v2799 = vsub.f32 1.0, %v2798
      %v2800 = vmul.f32 %v2797, %v2799
      %v2801 = vadd.f32 %v2797, %v2800
      %vm2802 = vweird.f32 %v2547
      %vm2803 = vweird.f32 %v2797
      %vm2804 = vmor %vm2802, %vm2803
      %v2805 = vsel %vm2804, %v2797, %v2801
      %v2806 = vand.u32 2147483647, %v2547
      %vm2807 = vcmp.eq.f32.partialorder %v2806, 8.507059e+37
      %v2808 = vand.u32 %v2547, 2147483648
      %v2809 = vor.u32 1.1754944e-38, %v2808
      %v2810 = vsel %vm2807, %v2809, %v2805
      %v2811 = vmul.f32 1.0, %v2810
      %v2812 = vrcp.pop %v2548
      %v2813 = vmul.f32 %v2548, %v2812
      %v2814 = vsub.f32 1.0, %v2813
      %v2815 = vmul.f32 %v2812, %v2814
      %v2816 = vadd.f32 %v2812, %v2815
      %vm2817 = vweird.f32 %v2548
      %vm2818 = vweird.f32 %v2812
      %vm2819 = vmor %vm2817, %vm2818
      %v2820 = vsel %vm2819, %v2812, %v2816
      %v2821 = vand.u32 2147483647, %v2548
      %vm2822 = vcmp.eq.f32.partialorder %v2821, 8.507059e+37
      %v2823 = vand.u32 %v2548, 2147483648
      %v2824 = vor.u32 1.1754944e-38, %v2823
      %v2825 = vsel %vm2822, %v2824, %v2820
      %v2826 = vmul.f32 1.0, %v2825
      %v2827 = vrcp.pop %v2549
      %v2828 = vmul.f32 %v2549, %v2827
      %v2829 = vsub.f32 1.0, %v2828
      %v2830 = vmul.f32 %v2827, %v2829
      %v2831 = vadd.f32 %v2827, %v2830
      %vm2832 = vweird.f32 %v2549
      %vm2833 = vweird.f32 %v2827
      %vm2834 = vmor %vm2832, %vm2833
      %v2835 = vsel %vm2834, %v2827, %v2831
      %v2836 = vand.u32 2147483647, %v2549
      %vm2837 = vcmp.eq.f32.partialorder %v2836, 8.507059e+37
      %v2838 = vand.u32 %v2549, 2147483648
      %v2839 = vor.u32 1.1754944e-38, %v2838
      %v2840 = vsel %vm2837, %v2839, %v2835
      %v2841 = vmul.f32 1.0, %v2840
      %v2842 = vrcp.pop %v2550
      %v2843 = vmul.f32 %v2550, %v2842
      %v2844 = vsub.f32 1.0, %v2843
      %v2845 = vmul.f32 %v2842, %v2844
      %v2846 = vadd.f32 %v2842, %v2845
      %vm2847 = vweird.f32 %v2550
      %vm2848 = vweird.f32 %v2842
      %vm2849 = vmor %vm2847, %vm2848
      %v2850 = vsel %vm2849, %v2842, %v2846
      %v2851 = vand.u32 2147483647, %v2550
      %vm2852 = vcmp.eq.f32.partialorder %v2851, 8.507059e+37
      %v2853 = vand.u32 %v2550, 2147483648
      %v2854 = vor.u32 1.1754944e-38, %v2853
      %v2855 = vsel %vm2852, %v2854, %v2850
      %v2856 = vmul.f32 1.0, %v2855
      %v2857 = vrcp.pop %v2551
      %v2858 = vmul.f32 %v2551, %v2857
      %v2859 = vsub.f32 1.0, %v2858
      %v2860 = vmul.f32 %v2857, %v2859
      %v2861 = vadd.f32 %v2857, %v2860
      %vm2862 = vweird.f32 %v2551
      %vm2863 = vweird.f32 %v2857
      %vm2864 = vmor %vm2862, %vm2863
      %v2865 = vsel %vm2864, %v2857, %v2861
      %v2866 = vand.u32 2147483647, %v2551
      %vm2867 = vcmp.eq.f32.partialorder %v2866, 8.507059e+37
      %v2868 = vand.u32 %v2551, 2147483648
      %v2869 = vor.u32 1.1754944e-38, %v2868
      %v2870 = vsel %vm2867, %v2869, %v2865
      %v2871 = vmul.f32 1.0, %v2870
      %v2872 = vrcp.pop %v2552
      %v2873 = vmul.f32 %v2552, %v2872
      %v2874 = vsub.f32 1.0, %v2873
      %v2875 = vmul.f32 %v2872, %v2874
      %v2876 = vadd.f32 %v2872, %v2875
      %vm2877 = vweird.f32 %v2552
      %vm2878 = vweird.f32 %v2872
      %vm2879 = vmor %vm2877, %vm2878
      %v2880 = vsel %vm2879, %v2872, %v2876
      %v2881 = vand.u32 2147483647, %v2552
      %vm2882 = vcmp.eq.f32.partialorder %v2881, 8.507059e+37
      %v2883 = vand.u32 %v2552, 2147483648
      %v2884 = vor.u32 1.1754944e-38, %v2883
      %v2885 = vsel %vm2882, %v2884, %v2880
      %v2886 = vmul.f32 1.0, %v2885
      %v2887 = vrcp.pop %v2553
      %v2888 = vmul.f32 %v2553, %v2887
      %v2889 = vsub.f32 1.0, %v2888
      %v2890 = vmul.f32 %v2887, %v2889
      %v2891 = vadd.f32 %v2887, %v2890
      %vm2892 = vweird.f32 %v2553
      %vm2893 = vweird.f32 %v2887
      %vm2894 = vmor %vm2892, %vm2893
      %v2895 = vsel %vm2894, %v2887, %v2891
      %v2896 = vand.u32 2147483647, %v2553
      %vm2897 = vcmp.eq.f32.partialorder %v2896, 8.507059e+37
      %v2898 = vand.u32 %v2553, 2147483648
      %v2899 = vor.u32 1.1754944e-38, %v2898
      %v2900 = vsel %vm2897, %v2899, %v2895
      %v2901 = vmul.f32 1.0, %v2900
      %v2902 = vrcp.pop %v2554
      %v2903 = vmul.f32 %v2554, %v2902
      %v2904 = vsub.f32 1.0, %v2903
      %v2905 = vmul.f32 %v2902, %v2904
      %v2906 = vadd.f32 %v2902, %v2905
      %vm2907 = vweird.f32 %v2554
      %vm2908 = vweird.f32 %v2902
      %vm2909 = vmor %vm2907, %vm2908
      %v2910 = vsel %vm2909, %v2902, %v2906
      %v2911 = vand.u32 2147483647, %v2554
      %vm2912 = vcmp.eq.f32.partialorder %v2911, 8.507059e+37
      %v2913 = vand.u32 %v2554, 2147483648
      %v2914 = vor.u32 1.1754944e-38, %v2913
      %v2915 = vsel %vm2912, %v2914, %v2910
      %v2916 = vmul.f32 1.0, %v2915
      %v2917 = vrcp.pop %v2555
      %v2918 = vmul.f32 %v2555, %v2917
      %v2919 = vsub.f32 1.0, %v2918
      %v2920 = vmul.f32 %v2917, %v2919
      %v2921 = vadd.f32 %v2917, %v2920
      %vm2922 = vweird.f32 %v2555
      %vm2923 = vweird.f32 %v2917
      %vm2924 = vmor %vm2922, %vm2923
      %v2925 = vsel %vm2924, %v2917, %v2921
      %v2926 = vand.u32 2147483647, %v2555
      %vm2927 = vcmp.eq.f32.partialorder %v2926, 8.507059e+37
      %v2928 = vand.u32 %v2555, 2147483648
      %v2929 = vor.u32 1.1754944e-38, %v2928
      %v2930 = vsel %vm2927, %v2929, %v2925
      %v2931 = vmul.f32 1.0, %v2930
      %v2932 = vrcp.pop %v2556
      %v2933 = vmul.f32 %v2556, %v2932
      %v2934 = vsub.f32 1.0, %v2933
      %v2935 = vmul.f32 %v2932, %v2934
      %v2936 = vadd.f32 %v2932, %v2935
      %vm2937 = vweird.f32 %v2556
      %vm2938 = vweird.f32 %v2932
      %vm2939 = vmor %vm2937, %vm2938
      %v2940 = vsel %vm2939, %v2932, %v2936
      %v2941 = vand.u32 2147483647, %v2556
      %vm2942 = vcmp.eq.f32.partialorder %v2941, 8.507059e+37
      %v2943 = vand.u32 %v2556, 2147483648
      %v2944 = vor.u32 1.1754944e-38, %v2943
      %v2945 = vsel %vm2942, %v2944, %v2940
      %v2946 = vmul.f32 1.0, %v2945
      %v2947 = vrcp.pop %v2557
      %v2948 = vmul.f32 %v2557, %v2947
      %v2949 = vsub.f32 1.0, %v2948
      %v2950 = vmul.f32 %v2947, %v2949
      %v2951 = vadd.f32 %v2947, %v2950
      %vm2952 = vweird.f32 %v2557
      %vm2953 = vweird.f32 %v2947
      %vm2954 = vmor %vm2952, %vm2953
      %v2955 = vsel %vm2954, %v2947, %v2951
      %v2956 = vand.u32 2147483647, %v2557
      %vm2957 = vcmp.eq.f32.partialorder %v2956, 8.507059e+37
      %v2958 = vand.u32 %v2557, 2147483648
      %v2959 = vor.u32 1.1754944e-38, %v2958
      %v2960 = vsel %vm2957, %v2959, %v2955
      %v2961 = vmul.f32 1.0, %v2960
      %v2962 = vrcp.pop %v2558
      %v2963 = vmul.f32 %v2558, %v2962
      %v2964 = vsub.f32 1.0, %v2963
      %v2965 = vmul.f32 %v2962, %v2964
      %v2966 = vadd.f32 %v2962, %v2965
      %vm2967 = vweird.f32 %v2558
      %vm2968 = vweird.f32 %v2962
      %vm2969 = vmor %vm2967, %vm2968
      %v2970 = vsel %vm2969, %v2962, %v2966
      %v2971 = vand.u32 2147483647, %v2558
      %vm2972 = vcmp.eq.f32.partialorder %v2971, 8.507059e+37
      %v2973 = vand.u32 %v2558, 2147483648
      %v2974 = vor.u32 1.1754944e-38, %v2973
      %v2975 = vsel %vm2972, %v2974, %v2970
      %v2976 = vmul.f32 1.0, %v2975
      %v2977 = vrcp.pop %v2559
      %v2978 = vmul.f32 %v2559, %v2977
      %v2979 = vsub.f32 1.0, %v2978
      %v2980 = vmul.f32 %v2977, %v2979
      %v2981 = vadd.f32 %v2977, %v2980
      %vm2982 = vweird.f32 %v2559
      %vm2983 = vweird.f32 %v2977
      %vm2984 = vmor %vm2982, %vm2983
      %v2985 = vsel %vm2984, %v2977, %v2981
      %v2986 = vand.u32 2147483647, %v2559
      %vm2987 = vcmp.eq.f32.partialorder %v2986, 8.507059e+37
      %v2988 = vand.u32 %v2559, 2147483648
      %v2989 = vor.u32 1.1754944e-38, %v2988
      %v2990 = vsel %vm2987, %v2989, %v2985
      %v2991 = vmul.f32 1.0, %v2990
      %v2992 = vrcp.pop %v2560
      %v2993 = vmul.f32 %v2560, %v2992
      %v2994 = vsub.f32 1.0, %v2993
      %v2995 = vmul.f32 %v2992, %v2994
      %v2996 = vadd.f32 %v2992, %v2995
      %vm2997 = vweird.f32 %v2560
      %vm2998 = vweird.f32 %v2992
      %vm2999 = vmor %vm2997, %vm2998
      %v3000 = vsel %vm2999, %v2992, %v2996
      %v3001 = vand.u32 2147483647, %v2560
      %vm3002 = vcmp.eq.f32.partialorder %v3001, 8.507059e+37
      %v3003 = vand.u32 %v2560, 2147483648
      %v3004 = vor.u32 1.1754944e-38, %v3003
      %v3005 = vsel %vm3002, %v3004, %v3000
      %v3006 = vmul.f32 1.0, %v3005
      %v3007 = vrcp.pop %v2561
      %v3008 = vmul.f32 %v2561, %v3007
      %v3009 = vsub.f32 1.0, %v3008
      %v3010 = vmul.f32 %v3007, %v3009
      %v3011 = vadd.f32 %v3007, %v3010
      %vm3012 = vweird.f32 %v2561
      %vm3013 = vweird.f32 %v3007
      %vm3014 = vmor %vm3012, %vm3013
      %v3015 = vsel %vm3014, %v3007, %v3011
      %v3016 = vand.u32 2147483647, %v2561
      %vm3017 = vcmp.eq.f32.partialorder %v3016, 8.507059e+37
      %v3018 = vand.u32 %v2561, 2147483648
      %v3019 = vor.u32 1.1754944e-38, %v3018
      %v3020 = vsel %vm3017, %v3019, %v3015
      %v3021 = vmul.f32 1.0, %v3020
      %v3022 = vrcp.pop %v2562
      %v3023 = vmul.f32 %v2562, %v3022
      %v3024 = vsub.f32 1.0, %v3023
      %v3025 = vmul.f32 %v3022, %v3024
      %v3026 = vadd.f32 %v3022, %v3025
      %vm3027 = vweird.f32 %v2562
      %vm3028 = vweird.f32 %v3022
      %vm3029 = vmor %vm3027, %vm3028
      %v3030 = vsel %vm3029, %v3022, %v3026
      %v3031 = vand.u32 2147483647, %v2562
      %vm3032 = vcmp.eq.f32.partialorder %v3031, 8.507059e+37
      %v3033 = vand.u32 %v2562, 2147483648
      %v3034 = vor.u32 1.1754944e-38, %v3033
      %v3035 = vsel %vm3032, %v3034, %v3030
      %v3036 = vmul.f32 1.0, %v3035
      %v3037 = vrcp.pop %v2563
      %v3038 = vmul.f32 %v2563, %v3037
      %v3039 = vsub.f32 1.0, %v3038
      %v3040 = vmul.f32 %v3037, %v3039
      %v3041 = vadd.f32 %v3037, %v3040
      %vm3042 = vweird.f32 %v2563
      %vm3043 = vweird.f32 %v3037
      %vm3044 = vmor %vm3042, %vm3043
      %v3045 = vsel %vm3044, %v3037, %v3041
      %v3046 = vand.u32 2147483647, %v2563
      %vm3047 = vcmp.eq.f32.partialorder %v3046, 8.507059e+37
      %v3048 = vand.u32 %v2563, 2147483648
      %v3049 = vor.u32 1.1754944e-38, %v3048
      %v3050 = vsel %vm3047, %v3049, %v3045
      %v3051 = vmul.f32 1.0, %v3050
      %v3052 = vrcp.pop %v2564
      %v3053 = vmul.f32 %v2564, %v3052
      %v3054 = vsub.f32 1.0, %v3053
      %v3055 = vmul.f32 %v3052, %v3054
      %v3056 = vadd.f32 %v3052, %v3055
      %vm3057 = vweird.f32 %v2564
      %vm3058 = vweird.f32 %v3052
      %vm3059 = vmor %vm3057, %vm3058
      %v3060 = vsel %vm3059, %v3052, %v3056
      %v3061 = vand.u32 2147483647, %v2564
      %vm3062 = vcmp.eq.f32.partialorder %v3061, 8.507059e+37
      %v3063 = vand.u32 %v2564, 2147483648
      %v3064 = vor.u32 1.1754944e-38, %v3063
      %v3065 = vsel %vm3062, %v3064, %v3060
      %v3066 = vmul.f32 1.0, %v3065
      %v3067 = vrcp.pop %v2565
      %v3068 = vmul.f32 %v2565, %v3067
      %v3069 = vsub.f32 1.0, %v3068
      %v3070 = vmul.f32 %v3067, %v3069
      %v3071 = vadd.f32 %v3067, %v3070
      %vm3072 = vweird.f32 %v2565
      %vm3073 = vweird.f32 %v3067
      %vm3074 = vmor %vm3072, %vm3073
      %v3075 = vsel %vm3074, %v3067, %v3071
      %v3076 = vand.u32 2147483647, %v2565
      %vm3077 = vcmp.eq.f32.partialorder %v3076, 8.507059e+37
      %v3078 = vand.u32 %v2565, 2147483648
      %v3079 = vor.u32 1.1754944e-38, %v3078
      %v3080 = vsel %vm3077, %v3079, %v3075
      %v3081 = vmul.f32 1.0, %v3080
      %v3082 = vrcp.pop %v2566
      %v3083 = vmul.f32 %v2566, %v3082
      %v3084 = vsub.f32 1.0, %v3083
      %v3085 = vmul.f32 %v3082, %v3084
      %v3086 = vadd.f32 %v3082, %v3085
      %vm3087 = vweird.f32 %v2566
      %vm3088 = vweird.f32 %v3082
      %vm3089 = vmor %vm3087, %vm3088
      %v3090 = vsel %vm3089, %v3082, %v3086
      %v3091 = vand.u32 2147483647, %v2566
      %vm3092 = vcmp.eq.f32.partialorder %v3091, 8.507059e+37
      %v3093 = vand.u32 %v2566, 2147483648
      %v3094 = vor.u32 1.1754944e-38, %v3093
      %v3095 = vsel %vm3092, %v3094, %v3090
      %v3096 = vmul.f32 1.0, %v3095
      %v3097 = vrcp.pop %v2567
      %v3098 = vmul.f32 %v2567, %v3097
      %v3099 = vsub.f32 1.0, %v3098
      %v3100 = vmul.f32 %v3097, %v3099
      %v3101 = vadd.f32 %v3097, %v3100
      %vm3102 = vweird.f32 %v2567
      %vm3103 = vweird.f32 %v3097
      %vm3104 = vmor %vm3102, %vm3103
      %v3105 = vsel %vm3104, %v3097, %v3101
      %v3106 = vand.u32 2147483647, %v2567
      %vm3107 = vcmp.eq.f32.partialorder %v3106, 8.507059e+37
      %v3108 = vand.u32 %v2567, 2147483648
      %v3109 = vor.u32 1.1754944e-38, %v3108
      %v3110 = vsel %vm3107, %v3109, %v3105
      %v3111 = vmul.f32 1.0, %v3110
      %v3112 = vrcp.pop %v2568
      %v3113 = vmul.f32 %v2568, %v3112
      %v3114 = vsub.f32 1.0, %v3113
      %v3115 = vmul.f32 %v3112, %v3114
      %v3116 = vadd.f32 %v3112, %v3115
      %vm3117 = vweird.f32 %v2568
      %vm3118 = vweird.f32 %v3112
      %vm3119 = vmor %vm3117, %vm3118
      %v3120 = vsel %vm3119, %v3112, %v3116
      %v3121 = vand.u32 2147483647, %v2568
      %vm3122 = vcmp.eq.f32.partialorder %v3121, 8.507059e+37
      %v3123 = vand.u32 %v2568, 2147483648
      %v3124 = vor.u32 1.1754944e-38, %v3123
      %v3125 = vsel %vm3122, %v3124, %v3120
      %v3126 = vmul.f32 1.0, %v3125
      %v3127 = vrcp.pop %v2569
      %v3128 = vmul.f32 %v2569, %v3127
      %v3129 = vsub.f32 1.0, %v3128
      %v3130 = vmul.f32 %v3127, %v3129
      %v3131 = vadd.f32 %v3127, %v3130
      %vm3132 = vweird.f32 %v2569
      %vm3133 = vweird.f32 %v3127
      %vm3134 = vmor %vm3132, %vm3133
      %v3135 = vsel %vm3134, %v3127, %v3131
      %v3136 = vand.u32 2147483647, %v2569
      %vm3137 = vcmp.eq.f32.partialorder %v3136, 8.507059e+37
      %v3138 = vand.u32 %v2569, 2147483648
      %v3139 = vor.u32 1.1754944e-38, %v3138
      %v3140 = vsel %vm3137, %v3139, %v3135
      %v3141 = vmul.f32 1.0, %v3140
      %v3142 = vrcp.pop %v2570
      %v3143 = vmul.f32 %v2570, %v3142
      %v3144 = vsub.f32 1.0, %v3143
      %v3145 = vmul.f32 %v3142, %v3144
      %v3146 = vadd.f32 %v3142, %v3145
      %vm3147 = vweird.f32 %v2570
      %vm3148 = vweird.f32 %v3142
      %vm3149 = vmor %vm3147, %vm3148
      %v3150 = vsel %vm3149, %v3142, %v3146
      %v3151 = vand.u32 2147483647, %v2570
      %vm3152 = vcmp.eq.f32.partialorder %v3151, 8.507059e+37
      %v3153 = vand.u32 %v2570, 2147483648
      %v3154 = vor.u32 1.1754944e-38, %v3153
      %v3155 = vsel %vm3152, %v3154, %v3150
      %v3156 = vmul.f32 1.0, %v3155
      %v3157 = vrcp.pop %v2571
      %v3158 = vmul.f32 %v2571, %v3157
      %v3159 = vsub.f32 1.0, %v3158
      %v3160 = vmul.f32 %v3157, %v3159
      %v3161 = vadd.f32 %v3157, %v3160
      %vm3162 = vweird.f32 %v2571
      %vm3163 = vweird.f32 %v3157
      %vm3164 = vmor %vm3162, %vm3163
      %v3165 = vsel %vm3164, %v3157, %v3161
      %v3166 = vand.u32 2147483647, %v2571
      %vm3167 = vcmp.eq.f32.partialorder %v3166, 8.507059e+37
      %v3168 = vand.u32 %v2571, 2147483648
      %v3169 = vor.u32 1.1754944e-38, %v3168
      %v3170 = vsel %vm3167, %v3169, %v3165
      %v3171 = vmul.f32 1.0, %v3170
      %v3172 = vrcp.pop %v2572
      %v3173 = vmul.f32 %v2572, %v3172
      %v3174 = vsub.f32 1.0, %v3173
      %v3175 = vmul.f32 %v3172, %v3174
      %v3176 = vadd.f32 %v3172, %v3175
      %vm3177 = vweird.f32 %v2572
      %vm3178 = vweird.f32 %v3172
      %vm3179 = vmor %vm3177, %vm3178
      %v3180 = vsel %vm3179, %v3172, %v3176
      %v3181 = vand.u32 2147483647, %v2572
      %vm3182 = vcmp.eq.f32.partialorder %v3181, 8.507059e+37
      %v3183 = vand.u32 %v2572, 2147483648
      %v3184 = vor.u32 1.1754944e-38, %v3183
      %v3185 = vsel %vm3182, %v3184, %v3180
      %v3186 = vmul.f32 1.0, %v3185
      %v3187 = vrcp.pop %v2573
      %v3188 = vmul.f32 %v2573, %v3187
      %v3189 = vsub.f32 1.0, %v3188
      %v3190 = vmul.f32 %v3187, %v3189
      %v3191 = vadd.f32 %v3187, %v3190
      %vm3192 = vweird.f32 %v2573
      %vm3193 = vweird.f32 %v3187
      %vm3194 = vmor %vm3192, %vm3193
      %v3195 = vsel %vm3194, %v3187, %v3191
      %v3196 = vand.u32 2147483647, %v2573
      %vm3197 = vcmp.eq.f32.partialorder %v3196, 8.507059e+37
      %v3198 = vand.u32 %v2573, 2147483648
      %v3199 = vor.u32 1.1754944e-38, %v3198
      %v3200 = vsel %vm3197, %v3199, %v3195
      %v3201 = vmul.f32 1.0, %v3200
      %v3202 = vrcp.pop %v2574
      %v3203 = vmul.f32 %v2574, %v3202
      %v3204 = vsub.f32 1.0, %v3203
      %v3205 = vmul.f32 %v3202, %v3204
      %v3206 = vadd.f32 %v3202, %v3205
      %vm3207 = vweird.f32 %v2574
      %vm3208 = vweird.f32 %v3202
      %vm3209 = vmor %vm3207, %vm3208
      %v3210 = vsel %vm3209, %v3202, %v3206
      %v3211 = vand.u32 2147483647, %v2574
      %vm3212 = vcmp.eq.f32.partialorder %v3211, 8.507059e+37
      %v3213 = vand.u32 %v2574, 2147483648
      %v3214 = vor.u32 1.1754944e-38, %v3213
      %v3215 = vsel %vm3212, %v3214, %v3210
      %v3216 = vmul.f32 1.0, %v3215
      %v3217 = vrcp.pop %v2575
      %v3218 = vmul.f32 %v2575, %v3217
      %v3219 = vsub.f32 1.0, %v3218
      %v3220 = vmul.f32 %v3217, %v3219
      %v3221 = vadd.f32 %v3217, %v3220
      %vm3222 = vweird.f32 %v2575
      %vm3223 = vweird.f32 %v3217
      %vm3224 = vmor %vm3222, %vm3223
      %v3225 = vsel %vm3224, %v3217, %v3221
      %v3226 = vand.u32 2147483647, %v2575
      %vm3227 = vcmp.eq.f32.partialorder %v3226, 8.507059e+37
      %v3228 = vand.u32 %v2575, 2147483648
      %v3229 = vor.u32 1.1754944e-38, %v3228
      %v3230 = vsel %vm3227, %v3229, %v3225
      %v3231 = vmul.f32 1.0, %v3230
      %v3232 = vrcp.pop %v2576
      %v3233 = vmul.f32 %v2576, %v3232
      %v3234 = vsub.f32 1.0, %v3233
      %v3235 = vmul.f32 %v3232, %v3234
      %v3236 = vadd.f32 %v3232, %v3235
      %vm3237 = vweird.f32 %v2576
      %vm3238 = vweird.f32 %v3232
      %vm3239 = vmor %vm3237, %vm3238
      %v3240 = vsel %vm3239, %v3232, %v3236
      %v3241 = vand.u32 2147483647, %v2576
      %vm3242 = vcmp.eq.f32.partialorder %v3241, 8.507059e+37
      %v3243 = vand.u32 %v2576, 2147483648
      %v3244 = vor.u32 1.1754944e-38, %v3243
      %v3245 = vsel %vm3242, %v3244, %v3240
      %v3246 = vmul.f32 1.0, %v3245
      %v3247 = vrcp.pop %v2577
      %v3248 = vmul.f32 %v2577, %v3247
      %v3249 = vsub.f32 1.0, %v3248
      %v3250 = vmul.f32 %v3247, %v3249
      %v3251 = vadd.f32 %v3247, %v3250
      %vm3252 = vweird.f32 %v2577
      %vm3253 = vweird.f32 %v3247
      %vm3254 = vmor %vm3252, %vm3253
      %v3255 = vsel %vm3254, %v3247, %v3251
      %v3256 = vand.u32 2147483647, %v2577
      %vm3257 = vcmp.eq.f32.partialorder %v3256, 8.507059e+37
      %v3258 = vand.u32 %v2577, 2147483648
      %v3259 = vor.u32 1.1754944e-38, %v3258
      %v3260 = vsel %vm3257, %v3259, %v3255
      %v3261 = vmul.f32 1.0, %v3260
      %v3262 = vrcp.pop %v2578
      %v3263 = vmul.f32 %v2578, %v3262
      %v3264 = vsub.f32 1.0, %v3263
      %v3265 = vmul.f32 %v3262, %v3264
      %v3266 = vadd.f32 %v3262, %v3265
      %vm3267 = vweird.f32 %v2578
      %vm3268 = vweird.f32 %v3262
      %vm3269 = vmor %vm3267, %vm3268
      %v3270 = vsel %vm3269, %v3262, %v3266
      %v3271 = vand.u32 2147483647, %v2578
      %vm3272 = vcmp.eq.f32.partialorder %v3271, 8.507059e+37
      %v3273 = vand.u32 %v2578, 2147483648
      %v3274 = vor.u32 1.1754944e-38, %v3273
      %v3275 = vsel %vm3272, %v3274, %v3270
      %v3276 = vmul.f32 1.0, %v3275
      %v3277 = vrcp.pop %v2579
      %v3278 = vmul.f32 %v2579, %v3277
      %v3279 = vsub.f32 1.0, %v3278
      %v3280 = vmul.f32 %v3277, %v3279
      %v3281 = vadd.f32 %v3277, %v3280
      %vm3282 = vweird.f32 %v2579
      %vm3283 = vweird.f32 %v3277
      %vm3284 = vmor %vm3282, %vm3283
      %v3285 = vsel %vm3284, %v3277, %v3281
      %v3286 = vand.u32 2147483647, %v2579
      %vm3287 = vcmp.eq.f32.partialorder %v3286, 8.507059e+37
      %v3288 = vand.u32 %v2579, 2147483648
      %v3289 = vor.u32 1.1754944e-38, %v3288
      %v3290 = vsel %vm3287, %v3289, %v3285
      %v3291 = vmul.f32 1.0, %v3290
      %v3292 = vrcp.pop %v2580
      %v3293 = vmul.f32 %v2580, %v3292
      %v3294 = vsub.f32 1.0, %v3293
      %v3295 = vmul.f32 %v3292, %v3294
      %v3296 = vadd.f32 %v3292, %v3295
      %vm3297 = vweird.f32 %v2580
      %vm3298 = vweird.f32 %v3292
      %vm3299 = vmor %vm3297, %vm3298
      %v3300 = vsel %vm3299, %v3292, %v3296
      %v3301 = vand.u32 2147483647, %v2580
      %vm3302 = vcmp.eq.f32.partialorder %v3301, 8.507059e+37
      %v3303 = vand.u32 %v2580, 2147483648
      %v3304 = vor.u32 1.1754944e-38, %v3303
      %v3305 = vsel %vm3302, %v3304, %v3300
      %v3306 = vmul.f32 1.0, %v3305
      %v3307 = vrcp.pop %v2581
      %v3308 = vmul.f32 %v2581, %v3307
      %v3309 = vsub.f32 1.0, %v3308
      %v3310 = vmul.f32 %v3307, %v3309
      %v3311 = vadd.f32 %v3307, %v3310
      %vm3312 = vweird.f32 %v2581
      %vm3313 = vweird.f32 %v3307
      %vm3314 = vmor %vm3312, %vm3313
      %v3315 = vsel %vm3314, %v3307, %v3311
      %v3316 = vand.u32 2147483647, %v2581
      %vm3317 = vcmp.eq.f32.partialorder %v3316, 8.507059e+37
      %v3318 = vand.u32 %v2581, 2147483648
      %v3319 = vor.u32 1.1754944e-38, %v3318
      %v3320 = vsel %vm3317, %v3319, %v3315
      %v3321 = vmul.f32 1.0, %v3320
      %v3322 = vrcp.pop %v2582
      %v3323 = vmul.f32 %v2582, %v3322
      %v3324 = vsub.f32 1.0, %v3323
      %v3325 = vmul.f32 %v3322, %v3324
      %v3326 = vadd.f32 %v3322, %v3325
      %vm3327 = vweird.f32 %v2582
      %vm3328 = vweird.f32 %v3322
      %vm3329 = vmor %vm3327, %vm3328
      %v3330 = vsel %vm3329, %v3322, %v3326
      %v3331 = vand.u32 2147483647, %v2582
      %vm3332 = vcmp.eq.f32.partialorder %v3331, 8.507059e+37
      %v3333 = vand.u32 %v2582, 2147483648
      %v3334 = vor.u32 1.1754944e-38, %v3333
      %v3335 = vsel %vm3332, %v3334, %v3330
      %v3336 = vmul.f32 1.0, %v3335
      %v3337 = vrcp.pop %v2583
      %v3338 = vmul.f32 %v2583, %v3337
      %v3339 = vsub.f32 1.0, %v3338
      %v3340 = vmul.f32 %v3337, %v3339
      %v3341 = vadd.f32 %v3337, %v3340
      %vm3342 = vweird.f32 %v2583
      %vm3343 = vweird.f32 %v3337
      %vm3344 = vmor %vm3342, %vm3343
      %v3345 = vsel %vm3344, %v3337, %v3341
      %v3346 = vand.u32 2147483647, %v2583
      %vm3347 = vcmp.eq.f32.partialorder %v3346, 8.507059e+37
      %v3348 = vand.u32 %v2583, 2147483648
      %v3349 = vor.u32 1.1754944e-38, %v3348
      %v3350 = vsel %vm3347, %v3349, %v3345
      %v3351 = vmul.f32 1.0, %v3350
      %v3352 = vrcp.pop %v2584
      %v3353 = vmul.f32 %v2584, %v3352
      %v3354 = vsub.f32 1.0, %v3353
      %v3355 = vmul.f32 %v3352, %v3354
      %v3356 = vadd.f32 %v3352, %v3355
      %vm3357 = vweird.f32 %v2584
      %vm3358 = vweird.f32 %v3352
      %vm3359 = vmor %vm3357, %vm3358
      %v3360 = vsel %vm3359, %v3352, %v3356
      %v3361 = vand.u32 2147483647, %v2584
      %vm3362 = vcmp.eq.f32.partialorder %v3361, 8.507059e+37
      %v3363 = vand.u32 %v2584, 2147483648
      %v3364 = vor.u32 1.1754944e-38, %v3363
      %v3365 = vsel %vm3362, %v3364, %v3360
      %v3366 = vmul.f32 1.0, %v3365
      %v3367 = vrcp.pop %v2585
      %v3368 = vmul.f32 %v2585, %v3367
      %v3369 = vsub.f32 1.0, %v3368
      %v3370 = vmul.f32 %v3367, %v3369
      %v3371 = vadd.f32 %v3367, %v3370
      %vm3372 = vweird.f32 %v2585
      %vm3373 = vweird.f32 %v3367
      %vm3374 = vmor %vm3372, %vm3373
      %v3375 = vsel %vm3374, %v3367, %v3371
      %v3376 = vand.u32 2147483647, %v2585
      %vm3377 = vcmp.eq.f32.partialorder %v3376, 8.507059e+37
      %v3378 = vand.u32 %v2585, 2147483648
      %v3379 = vor.u32 1.1754944e-38, %v3378
      %v3380 = vsel %vm3377, %v3379, %v3375
      %v3381 = vmul.f32 1.0, %v3380
      %v3382 = vrcp.pop %v2586
      %v3383 = vmul.f32 %v2586, %v3382
      %v3384 = vsub.f32 1.0, %v3383
      %v3385 = vmul.f32 %v3382, %v3384
      %v3386 = vadd.f32 %v3382, %v3385
      %vm3387 = vweird.f32 %v2586
      %vm3388 = vweird.f32 %v3382
      %vm3389 = vmor %vm3387, %vm3388
      %v3390 = vsel %vm3389, %v3382, %v3386
      %v3391 = vand.u32 2147483647, %v2586
      %vm3392 = vcmp.eq.f32.partialorder %v3391, 8.507059e+37
      %v3393 = vand.u32 %v2586, 2147483648
      %v3394 = vor.u32 1.1754944e-38, %v3393
      %v3395 = vsel %vm3392, %v3394, %v3390
      %v3396 = vmul.f32 1.0, %v3395
      %v3397 = vld [vmem:[%s241] sm:$0xff]
      %v3398 = vld [vmem:[%s241 + $0x8] sm:$0xff]
      %v3399 = vld [vmem:[%s241 + $0x10] sm:$0xff]
      %v3400 = vld [vmem:[%s241 + $0x18] sm:$0xff]
      %v3401 = vld [vmem:[%s241 + $0x20] sm:$0xff]
      %v3402 = vld [vmem:[%s241 + $0x28] sm:$0xff]
      %v3403 = vld [vmem:[%s241 + $0x30] sm:$0xff]
      %v3404 = vld [vmem:[%s241 + $0x38] sm:$0xff]
      %v3405 = vld [vmem:[%s241 + $0x40] sm:$0xff]
      %v3406 = vld [vmem:[%s241 + $0x48] sm:$0xff]
      %v3407 = vld [vmem:[%s241 + $0x50] sm:$0xff]
      %v3408 = vld [vmem:[%s241 + $0x58] sm:$0xff]
      %v3409 = vld [vmem:[%s241 + $0x60] sm:$0xff]
      %v3410 = vld [vmem:[%s241 + $0x68] sm:$0xff]
      %v3411 = vld [vmem:[%s241 + $0x70] sm:$0xff]
      %v3412 = vld [vmem:[%s241 + $0x78] sm:$0xff]
      %v3413 = vld [vmem:[%s241 + $0x80] sm:$0xff]
      %v3414 = vld [vmem:[%s241 + $0x88] sm:$0xff]
      %v3415 = vld [vmem:[%s241 + $0x90] sm:$0xff]
      %v3416 = vld [vmem:[%s241 + $0x98] sm:$0xff]
      %v3417 = vld [vmem:[%s241 + $0xa0] sm:$0xff]
      %v3418 = vld [vmem:[%s241 + $0xa8] sm:$0xff]
      %v3419 = vld [vmem:[%s241 + $0xb0] sm:$0xff]
      %v3420 = vld [vmem:[%s241 + $0xb8] sm:$0xff]
      %v3421 = vld [vmem:[%s241 + $0xc0] sm:$0xff]
      %v3422 = vld [vmem:[%s241 + $0xc8] sm:$0xff]
      %v3423 = vld [vmem:[%s241 + $0xd0] sm:$0xff]
      %v3424 = vld [vmem:[%s241 + $0xd8] sm:$0xff]
      %v3425 = vld [vmem:[%s241 + $0xe0] sm:$0xff]
      %v3426 = vld [vmem:[%s241 + $0xe8] sm:$0xff]
      %v3427 = vld [vmem:[%s241 + $0xf0] sm:$0xff]
      %v3428 = vld [vmem:[%s241 + $0xf8] sm:$0xff]
      %v3429 = vld [vmem:[%s241 + $0x100] sm:$0xff]
      %v3430 = vld [vmem:[%s241 + $0x108] sm:$0xff]
      %v3431 = vld [vmem:[%s241 + $0x110] sm:$0xff]
      %v3432 = vld [vmem:[%s241 + $0x118] sm:$0xff]
      %v3433 = vld [vmem:[%s241 + $0x120] sm:$0xff]
      %v3434 = vld [vmem:[%s241 + $0x128] sm:$0xff]
      %v3435 = vld [vmem:[%s241 + $0x130] sm:$0xff]
      %v3436 = vld [vmem:[%s241 + $0x138] sm:$0xff]
      %v3437 = vld [vmem:[%s241 + $0x140] sm:$0xff]
      %v3438 = vld [vmem:[%s241 + $0x148] sm:$0xff]
      %v3439 = vld [vmem:[%s241 + $0x150] sm:$0xff]
      %v3440 = vld [vmem:[%s241 + $0x158] sm:$0xff]
      %v3441 = vld [vmem:[%s241 + $0x160] sm:$0xff]
      %v3442 = vld [vmem:[%s241 + $0x168] sm:$0xff]
      %v3443 = vld [vmem:[%s241 + $0x170] sm:$0xff]
      %v3444 = vld [vmem:[%s241 + $0x178] sm:$0xff]
      %v3445 = vld [vmem:[%s241 + $0x180] sm:$0xff]
      %v3446 = vld [vmem:[%s241 + $0x188] sm:$0xff]
      %v3447 = vld [vmem:[%s241 + $0x190] sm:$0xff]
      %v3448 = vld [vmem:[%s241 + $0x198] sm:$0xff]
      %v3449 = vld [vmem:[%s241 + $0x1a0] sm:$0xff]
      %v3450 = vld [vmem:[%s241 + $0x1a8] sm:$0xff]
      %v3451 = vld [vmem:[%s241 + $0x1b0] sm:$0xff]
      %v3452 = vld [vmem:[%s241 + $0x1b8] sm:$0xff]
      %v3453 = vld [vmem:[%s241 + $0x1c0] sm:$0xff]
      %v3454 = vld [vmem:[%s241 + $0x1c8] sm:$0xff]
      %v3455 = vld [vmem:[%s241 + $0x1d0] sm:$0xff]
      %v3456 = vld [vmem:[%s241 + $0x1d8] sm:$0xff]
      %v3457 = vld [vmem:[%s241 + $0x1e0] sm:$0xff]
      %v3458 = vld [vmem:[%s241 + $0x1e8] sm:$0xff]
      %v3459 = vld [vmem:[%s241 + $0x1f0] sm:$0xff]
      %v3460 = vld [vmem:[%s241 + $0x1f8] sm:$0xff]
      %v3461 = vld [vmem:[%s241 + $0x200] sm:$0xff]
      %v3462 = vld [vmem:[%s241 + $0x208] sm:$0xff]
      %v3463 = vld [vmem:[%s241 + $0x210] sm:$0xff]
      %v3464 = vld [vmem:[%s241 + $0x218] sm:$0xff]
      %v3465 = vld [vmem:[%s241 + $0x220] sm:$0xff]
      %v3466 = vld [vmem:[%s241 + $0x228] sm:$0xff]
      %v3467 = vld [vmem:[%s241 + $0x230] sm:$0xff]
      %v3468 = vld [vmem:[%s241 + $0x238] sm:$0xff]
      %v3469 = vld [vmem:[%s241 + $0x240] sm:$0xff]
      %v3470 = vld [vmem:[%s241 + $0x248] sm:$0xff]
      %v3471 = vld [vmem:[%s241 + $0x250] sm:$0xff]
      %v3472 = vld [vmem:[%s241 + $0x258] sm:$0xff]
      %v3473 = vld [vmem:[%s241 + $0x260] sm:$0xff]
      %v3474 = vld [vmem:[%s241 + $0x268] sm:$0xff]
      %v3475 = vld [vmem:[%s241 + $0x270] sm:$0xff]
      %v3476 = vld [vmem:[%s241 + $0x278] sm:$0xff]
      %v3477 = vld [vmem:[%s241 + $0x280] sm:$0xff]
      %v3478 = vld [vmem:[%s241 + $0x288] sm:$0xff]
      %v3479 = vld [vmem:[%s241 + $0x290] sm:$0xff]
      %v3480 = vld [vmem:[%s241 + $0x298] sm:$0xff]
      %v3481 = vld [vmem:[%s241 + $0x2a0] sm:$0xff]
      %v3482 = vld [vmem:[%s241 + $0x2a8] sm:$0xff]
      %v3483 = vld [vmem:[%s241 + $0x2b0] sm:$0xff]
      %v3484 = vld [vmem:[%s241 + $0x2b8] sm:$0xff]
      %v3485 = vld [vmem:[%s241 + $0x2c0] sm:$0xff]
      %v3486 = vld [vmem:[%s241 + $0x2c8] sm:$0xff]
      %v3487 = vld [vmem:[%s241 + $0x2d0] sm:$0xff]
      %v3488 = vld [vmem:[%s241 + $0x2d8] sm:$0xff]
      %v3489 = vld [vmem:[%s241 + $0x2e0] sm:$0xff]
      %v3490 = vld [vmem:[%s241 + $0x2e8] sm:$0xff]
      %v3491 = vld [vmem:[%s241 + $0x2f0] sm:$0xff]
      %v3492 = vld [vmem:[%s241 + $0x2f8] sm:$0xff]
      %v3493 = vld [vmem:[%s241 + $0x300] sm:$0xff]
      %v3494 = vld [vmem:[%s241 + $0x308] sm:$0xff]
      %v3495 = vld [vmem:[%s241 + $0x310] sm:$0xff]
      %v3496 = vld [vmem:[%s241 + $0x318] sm:$0xff]
      %v3497 = vld [vmem:[%s241 + $0x320] sm:$0xff]
      %v3498 = vld [vmem:[%s241 + $0x328] sm:$0xff]
      %v3499 = vld [vmem:[%s241 + $0x330] sm:$0xff]
      %v3500 = vld [vmem:[%s241 + $0x338] sm:$0xff]
      %v3501 = vld [vmem:[%s241 + $0x340] sm:$0xff]
      %v3502 = vld [vmem:[%s241 + $0x348] sm:$0xff]
      %v3503 = vld [vmem:[%s241 + $0x350] sm:$0xff]
      %v3504 = vld [vmem:[%s241 + $0x358] sm:$0xff]
      %3506 = vset.pattern.permute.xlu0 0
      %3507 = vperm.xlu0 %3506, %v2601
      %v3508 = vpop.permute.xlu0 %3507
      %3511 = vset.pattern.permute.xlu0 0
      %3512 = vperm.xlu0 %3511, %v2616
      %v3513 = vpop.permute.xlu0 %3512
      %3516 = vset.pattern.permute.xlu0 0
      %3517 = vperm.xlu0 %3516, %v2631
      %v3518 = vpop.permute.xlu0 %3517
      %3521 = vset.pattern.permute.xlu0 0
      %3522 = vperm.xlu0 %3521, %v2646
      %v3523 = vpop.permute.xlu0 %3522
      %3526 = vset.pattern.permute.xlu0 0
      %3527 = vperm.xlu0 %3526, %v2661
      %v3528 = vpop.permute.xlu0 %3527
      %3531 = vset.pattern.permute.xlu0 0
      %3532 = vperm.xlu0 %3531, %v2676
      %v3533 = vpop.permute.xlu0 %3532
      %3536 = vset.pattern.permute.xlu0 0
      %3537 = vperm.xlu0 %3536, %v2691
      %v3538 = vpop.permute.xlu0 %3537
      %3541 = vset.pattern.permute.xlu0 0
      %3542 = vperm.xlu0 %3541, %v2706
      %v3543 = vpop.permute.xlu0 %3542
      %3546 = vset.pattern.permute.xlu0 0
      %3547 = vperm.xlu0 %3546, %v2721
      %v3548 = vpop.permute.xlu0 %3547
      %3551 = vset.pattern.permute.xlu0 0
      %3552 = vperm.xlu0 %3551, %v2736
      %v3553 = vpop.permute.xlu0 %3552
      %3556 = vset.pattern.permute.xlu0 0
      %3557 = vperm.xlu0 %3556, %v2751
      %v3558 = vpop.permute.xlu0 %3557
      %3561 = vset.pattern.permute.xlu0 0
      %3562 = vperm.xlu0 %3561, %v2766
      %v3563 = vpop.permute.xlu0 %3562
      %3566 = vset.pattern.permute.xlu0 0
      %3567 = vperm.xlu0 %3566, %v2781
      %v3568 = vpop.permute.xlu0 %3567
      %3571 = vset.pattern.permute.xlu0 0
      %3572 = vperm.xlu0 %3571, %v2796
      %v3573 = vpop.permute.xlu0 %3572
      %3576 = vset.pattern.permute.xlu0 0
      %3577 = vperm.xlu0 %3576, %v2811
      %v3578 = vpop.permute.xlu0 %3577
      %3581 = vset.pattern.permute.xlu0 0
      %3582 = vperm.xlu0 %3581, %v2826
      %v3583 = vpop.permute.xlu0 %3582
      %3586 = vset.pattern.permute.xlu0 0
      %3587 = vperm.xlu0 %3586, %v2841
      %v3588 = vpop.permute.xlu0 %3587
      %3591 = vset.pattern.permute.xlu0 0
      %3592 = vperm.xlu0 %3591, %v2856
      %v3593 = vpop.permute.xlu0 %3592
      %3596 = vset.pattern.permute.xlu0 0
      %3597 = vperm.xlu0 %3596, %v2871
      %v3598 = vpop.permute.xlu0 %3597
      %3601 = vset.pattern.permute.xlu0 0
      %3602 = vperm.xlu0 %3601, %v2886
      %v3603 = vpop.permute.xlu0 %3602
      %3606 = vset.pattern.permute.xlu0 0
      %3607 = vperm.xlu0 %3606, %v2901
      %v3608 = vpop.permute.xlu0 %3607
      %3611 = vset.pattern.permute.xlu0 0
      %3612 = vperm.xlu0 %3611, %v2916
      %v3613 = vpop.permute.xlu0 %3612
      %3616 = vset.pattern.permute.xlu0 0
      %3617 = vperm.xlu0 %3616, %v2931
      %v3618 = vpop.permute.xlu0 %3617
      %3621 = vset.pattern.permute.xlu0 0
      %3622 = vperm.xlu0 %3621, %v2946
      %v3623 = vpop.permute.xlu0 %3622
      %3626 = vset.pattern.permute.xlu0 0
      %3627 = vperm.xlu0 %3626, %v2961
      %v3628 = vpop.permute.xlu0 %3627
      %3631 = vset.pattern.permute.xlu0 0
      %3632 = vperm.xlu0 %3631, %v2976
      %v3633 = vpop.permute.xlu0 %3632
      %3636 = vset.pattern.permute.xlu0 0
      %3637 = vperm.xlu0 %3636, %v2991
      %v3638 = vpop.permute.xlu0 %3637
      %3641 = vset.pattern.permute.xlu0 0
      %3642 = vperm.xlu0 %3641, %v3006
      %v3643 = vpop.permute.xlu0 %3642
      %3646 = vset.pattern.permute.xlu0 0
      %3647 = vperm.xlu0 %3646, %v3021
      %v3648 = vpop.permute.xlu0 %3647
      %3651 = vset.pattern.permute.xlu0 0
      %3652 = vperm.xlu0 %3651, %v3036
      %v3653 = vpop.permute.xlu0 %3652
      %3656 = vset.pattern.permute.xlu0 0
      %3657 = vperm.xlu0 %3656, %v3051
      %v3658 = vpop.permute.xlu0 %3657
      %3661 = vset.pattern.permute.xlu0 0
      %3662 = vperm.xlu0 %3661, %v3066
      %v3663 = vpop.permute.xlu0 %3662
      %3666 = vset.pattern.permute.xlu0 0
      %3667 = vperm.xlu0 %3666, %v3081
      %v3668 = vpop.permute.xlu0 %3667
      %3671 = vset.pattern.permute.xlu0 0
      %3672 = vperm.xlu0 %3671, %v3096
      %v3673 = vpop.permute.xlu0 %3672
      %3676 = vset.pattern.permute.xlu0 0
      %3677 = vperm.xlu0 %3676, %v3111
      %v3678 = vpop.permute.xlu0 %3677
      %3681 = vset.pattern.permute.xlu0 0
      %3682 = vperm.xlu0 %3681, %v3126
      %v3683 = vpop.permute.xlu0 %3682
      %3686 = vset.pattern.permute.xlu0 0
      %3687 = vperm.xlu0 %3686, %v3141
      %v3688 = vpop.permute.xlu0 %3687
      %3691 = vset.pattern.permute.xlu0 0
      %3692 = vperm.xlu0 %3691, %v3156
      %v3693 = vpop.permute.xlu0 %3692
      %3696 = vset.pattern.permute.xlu0 0
      %3697 = vperm.xlu0 %3696, %v3171
      %v3698 = vpop.permute.xlu0 %3697
      %3701 = vset.pattern.permute.xlu0 0
      %3702 = vperm.xlu0 %3701, %v3186
      %v3703 = vpop.permute.xlu0 %3702
      %3706 = vset.pattern.permute.xlu0 0
      %3707 = vperm.xlu0 %3706, %v3201
      %v3708 = vpop.permute.xlu0 %3707
      %3711 = vset.pattern.permute.xlu0 0
      %3712 = vperm.xlu0 %3711, %v3216
      %v3713 = vpop.permute.xlu0 %3712
      %3716 = vset.pattern.permute.xlu0 0
      %3717 = vperm.xlu0 %3716, %v3231
      %v3718 = vpop.permute.xlu0 %3717
      %3721 = vset.pattern.permute.xlu0 0
      %3722 = vperm.xlu0 %3721, %v3246
      %v3723 = vpop.permute.xlu0 %3722
      %3726 = vset.pattern.permute.xlu0 0
      %3727 = vperm.xlu0 %3726, %v3261
      %v3728 = vpop.permute.xlu0 %3727
      %3731 = vset.pattern.permute.xlu0 0
      %3732 = vperm.xlu0 %3731, %v3276
      %v3733 = vpop.permute.xlu0 %3732
      %3736 = vset.pattern.permute.xlu0 0
      %3737 = vperm.xlu0 %3736, %v3291
      %v3738 = vpop.permute.xlu0 %3737
      %3741 = vset.pattern.permute.xlu0 0
      %3742 = vperm.xlu0 %3741, %v3306
      %v3743 = vpop.permute.xlu0 %3742
      %3746 = vset.pattern.permute.xlu0 0
      %3747 = vperm.xlu0 %3746, %v3321
      %v3748 = vpop.permute.xlu0 %3747
      %3751 = vset.pattern.permute.xlu0 0
      %3752 = vperm.xlu0 %3751, %v3336
      %v3753 = vpop.permute.xlu0 %3752
      %3756 = vset.pattern.permute.xlu0 0
      %3757 = vperm.xlu0 %3756, %v3351
      %v3758 = vpop.permute.xlu0 %3757
      %3761 = vset.pattern.permute.xlu0 0
      %3762 = vperm.xlu0 %3761, %v3366
      %v3763 = vpop.permute.xlu0 %3762
      %3766 = vset.pattern.permute.xlu0 0
      %3767 = vperm.xlu0 %3766, %v3381
      %v3768 = vpop.permute.xlu0 %3767
      %3771 = vset.pattern.permute.xlu0 0
      %3772 = vperm.xlu0 %3771, %v3396
      %v3773 = vpop.permute.xlu0 %3772
      %v3775 = vmul.f32 %v3508, %v3397
      %v3776 = vmul.f32 %v3508, %v3398
      %v3777 = vmul.f32 %v3513, %v3399
      %v3778 = vmul.f32 %v3513, %v3400
      %v3779 = vmul.f32 %v3518, %v3401
      %v3780 = vmul.f32 %v3518, %v3402
      %v3781 = vmul.f32 %v3523, %v3403
      %v3782 = vmul.f32 %v3523, %v3404
      %v3783 = vmul.f32 %v3528, %v3405
      %v3784 = vmul.f32 %v3528, %v3406
      %v3785 = vmul.f32 %v3533, %v3407
      %v3786 = vmul.f32 %v3533, %v3408
      %v3787 = vmul.f32 %v3538, %v3409
      %v3788 = vmul.f32 %v3538, %v3410
      %v3789 = vmul.f32 %v3543, %v3411
      %v3790 = vmul.f32 %v3543, %v3412
      %v3791 = vmul.f32 %v3548, %v3413
      %v3792 = vmul.f32 %v3548, %v3414
      %v3793 = vmul.f32 %v3553, %v3415
      %v3794 = vmul.f32 %v3553, %v3416
      %v3795 = vmul.f32 %v3558, %v3417
      %v3796 = vmul.f32 %v3558, %v3418
      %v3797 = vmul.f32 %v3563, %v3419
      %v3798 = vmul.f32 %v3563, %v3420
      %v3799 = vmul.f32 %v3568, %v3421
      %v3800 = vmul.f32 %v3568, %v3422
      %v3801 = vmul.f32 %v3573, %v3423
      %v3802 = vmul.f32 %v3573, %v3424
      %v3803 = vmul.f32 %v3578, %v3425
      %v3804 = vmul.f32 %v3578, %v3426
      %v3805 = vmul.f32 %v3583, %v3427
      %v3806 = vmul.f32 %v3583, %v3428
      %v3807 = vmul.f32 %v3588, %v3429
      %v3808 = vmul.f32 %v3588, %v3430
      %v3809 = vmul.f32 %v3593, %v3431
      %v3810 = vmul.f32 %v3593, %v3432
      %v3811 = vmul.f32 %v3598, %v3433
      %v3812 = vmul.f32 %v3598, %v3434
      %v3813 = vmul.f32 %v3603, %v3435
      %v3814 = vmul.f32 %v3603, %v3436
      %v3815 = vmul.f32 %v3608, %v3437
      %v3816 = vmul.f32 %v3608, %v3438
      %v3817 = vmul.f32 %v3613, %v3439
      %v3818 = vmul.f32 %v3613, %v3440
      %v3819 = vmul.f32 %v3618, %v3441
      %v3820 = vmul.f32 %v3618, %v3442
      %v3821 = vmul.f32 %v3623, %v3443
      %v3822 = vmul.f32 %v3623, %v3444
      %v3823 = vmul.f32 %v3628, %v3445
      %v3824 = vmul.f32 %v3628, %v3446
      %v3825 = vmul.f32 %v3633, %v3447
      %v3826 = vmul.f32 %v3633, %v3448
      %v3827 = vmul.f32 %v3638, %v3449
      %v3828 = vmul.f32 %v3638, %v3450
      %v3829 = vmul.f32 %v3643, %v3451
      %v3830 = vmul.f32 %v3643, %v3452
      %v3831 = vmul.f32 %v3648, %v3453
      %v3832 = vmul.f32 %v3648, %v3454
      %v3833 = vmul.f32 %v3653, %v3455
      %v3834 = vmul.f32 %v3653, %v3456
      %v3835 = vmul.f32 %v3658, %v3457
      %v3836 = vmul.f32 %v3658, %v3458
      %v3837 = vmul.f32 %v3663, %v3459
      %v3838 = vmul.f32 %v3663, %v3460
      %v3839 = vmul.f32 %v3668, %v3461
      %v3840 = vmul.f32 %v3668, %v3462
      %v3841 = vmul.f32 %v3673, %v3463
      %v3842 = vmul.f32 %v3673, %v3464
      %v3843 = vmul.f32 %v3678, %v3465
      %v3844 = vmul.f32 %v3678, %v3466
      %v3845 = vmul.f32 %v3683, %v3467
      %v3846 = vmul.f32 %v3683, %v3468
      %v3847 = vmul.f32 %v3688, %v3469
      %v3848 = vmul.f32 %v3688, %v3470
      %v3849 = vmul.f32 %v3693, %v3471
      %v3850 = vmul.f32 %v3693, %v3472
      %v3851 = vmul.f32 %v3698, %v3473
      %v3852 = vmul.f32 %v3698, %v3474
      %v3853 = vmul.f32 %v3703, %v3475
      %v3854 = vmul.f32 %v3703, %v3476
      %v3855 = vmul.f32 %v3708, %v3477
      %v3856 = vmul.f32 %v3708, %v3478
      %v3857 = vmul.f32 %v3713, %v3479
      %v3858 = vmul.f32 %v3713, %v3480
      %v3859 = vmul.f32 %v3718, %v3481
      %v3860 = vmul.f32 %v3718, %v3482
      %v3861 = vmul.f32 %v3723, %v3483
      %v3862 = vmul.f32 %v3723, %v3484
      %v3863 = vmul.f32 %v3728, %v3485
      %v3864 = vmul.f32 %v3728, %v3486
      %v3865 = vmul.f32 %v3733, %v3487
      %v3866 = vmul.f32 %v3733, %v3488
      %v3867 = vmul.f32 %v3738, %v3489
      %v3868 = vmul.f32 %v3738, %v3490
      %v3869 = vmul.f32 %v3743, %v3491
      %v3870 = vmul.f32 %v3743, %v3492
      %v3871 = vmul.f32 %v3748, %v3493
      %v3872 = vmul.f32 %v3748, %v3494
      %v3873 = vmul.f32 %v3753, %v3495
      %v3874 = vmul.f32 %v3753, %v3496
      %v3875 = vmul.f32 %v3758, %v3497
      %v3876 = vmul.f32 %v3758, %v3498
      %v3877 = vmul.f32 %v3763, %v3499
      %v3878 = vmul.f32 %v3763, %v3500
      %v3879 = vmul.f32 %v3768, %v3501
      %v3880 = vmul.f32 %v3768, %v3502
      %v3881 = vmul.f32 %v3773, %v3503
      %v3882 = vmul.f32 %v3773, %v3504
      %3883 = vst [vmem:[%s248] sm:$0xff] %v3775
      %vm3884 = vcmask 556032
      %3885 = vst.msk [vmem:[%s248 + $0x8] sm:$0xff] %vm3884, %v3776
      %3886 = vst [vmem:[%s248 + $0x10] sm:$0xff] %v3777
      %3887 = vst.msk [vmem:[%s248 + $0x18] sm:$0xff] %vm3884, %v3778
      %3888 = vst [vmem:[%s248 + $0x20] sm:$0xff] %v3779
      %3889 = vst.msk [vmem:[%s248 + $0x28] sm:$0xff] %vm3884, %v3780
      %3890 = vst [vmem:[%s248 + $0x30] sm:$0xff] %v3781
      %3891 = vst.msk [vmem:[%s248 + $0x38] sm:$0xff] %vm3884, %v3782
      %3892 = vst [vmem:[%s248 + $0x40] sm:$0xff] %v3783
      %3893 = vst.msk [vmem:[%s248 + $0x48] sm:$0xff] %vm3884, %v3784
      %3894 = vst [vmem:[%s248 + $0x50] sm:$0xff] %v3785
      %3895 = vst.msk [vmem:[%s248 + $0x58] sm:$0xff] %vm3884, %v3786
      %3896 = vst [vmem:[%s248 + $0x60] sm:$0xff] %v3787
      %3897 = vst.msk [vmem:[%s248 + $0x68] sm:$0xff] %vm3884, %v3788
      %3898 = vst [vmem:[%s248 + $0x70] sm:$0xff] %v3789
      %3899 = vst.msk [vmem:[%s248 + $0x78] sm:$0xff] %vm3884, %v3790
      %3900 = vst [vmem:[%s248 + $0x80] sm:$0xff] %v3791
      %3901 = vst.msk [vmem:[%s248 + $0x88] sm:$0xff] %vm3884, %v3792
      %3902 = vst [vmem:[%s248 + $0x90] sm:$0xff] %v3793
      %3903 = vst.msk [vmem:[%s248 + $0x98] sm:$0xff] %vm3884, %v3794
      %3904 = vst [vmem:[%s248 + $0xa0] sm:$0xff] %v3795
      %3905 = vst.msk [vmem:[%s248 + $0xa8] sm:$0xff] %vm3884, %v3796
      %3906 = vst [vmem:[%s248 + $0xb0] sm:$0xff] %v3797
      %3907 = vst.msk [vmem:[%s248 + $0xb8] sm:$0xff] %vm3884, %v3798
      %3908 = vst [vmem:[%s248 + $0xc0] sm:$0xff] %v3799
      %3909 = vst.msk [vmem:[%s248 + $0xc8] sm:$0xff] %vm3884, %v3800
      %3910 = vst [vmem:[%s248 + $0xd0] sm:$0xff] %v3801
      %3911 = vst.msk [vmem:[%s248 + $0xd8] sm:$0xff] %vm3884, %v3802
      %3912 = vst [vmem:[%s248 + $0xe0] sm:$0xff] %v3803
      %3913 = vst.msk [vmem:[%s248 + $0xe8] sm:$0xff] %vm3884, %v3804
      %3914 = vst [vmem:[%s248 + $0xf0] sm:$0xff] %v3805
      %3915 = vst.msk [vmem:[%s248 + $0xf8] sm:$0xff] %vm3884, %v3806
      %3916 = vst [vmem:[%s248 + $0x100] sm:$0xff] %v3807
      %3917 = vst.msk [vmem:[%s248 + $0x108] sm:$0xff] %vm3884, %v3808
      %3918 = vst [vmem:[%s248 + $0x110] sm:$0xff] %v3809
      %3919 = vst.msk [vmem:[%s248 + $0x118] sm:$0xff] %vm3884, %v3810
      %3920 = vst [vmem:[%s248 + $0x120] sm:$0xff] %v3811
      %3921 = vst.msk [vmem:[%s248 + $0x128] sm:$0xff] %vm3884, %v3812
      %3922 = vst [vmem:[%s248 + $0x130] sm:$0xff] %v3813
      %3923 = vst.msk [vmem:[%s248 + $0x138] sm:$0xff] %vm3884, %v3814
      %3924 = vst [vmem:[%s248 + $0x140] sm:$0xff] %v3815
      %3925 = vst.msk [vmem:[%s248 + $0x148] sm:$0xff] %vm3884, %v3816
      %3926 = vst [vmem:[%s248 + $0x150] sm:$0xff] %v3817
      %3927 = vst.msk [vmem:[%s248 + $0x158] sm:$0xff] %vm3884, %v3818
      %3928 = vst [vmem:[%s248 + $0x160] sm:$0xff] %v3819
      %3929 = vst.msk [vmem:[%s248 + $0x168] sm:$0xff] %vm3884, %v3820
      %3930 = vst [vmem:[%s248 + $0x170] sm:$0xff] %v3821
      %3931 = vst.msk [vmem:[%s248 + $0x178] sm:$0xff] %vm3884, %v3822
      %3932 = vst [vmem:[%s248 + $0x180] sm:$0xff] %v3823
      %3933 = vst.msk [vmem:[%s248 + $0x188] sm:$0xff] %vm3884, %v3824
      %3934 = vst [vmem:[%s248 + $0x190] sm:$0xff] %v3825
      %3935 = vst.msk [vmem:[%s248 + $0x198] sm:$0xff] %vm3884, %v3826
      %3936 = vst [vmem:[%s248 + $0x1a0] sm:$0xff] %v3827
      %3937 = vst.msk [vmem:[%s248 + $0x1a8] sm:$0xff] %vm3884, %v3828
      %3938 = vst [vmem:[%s248 + $0x1b0] sm:$0xff] %v3829
      %3939 = vst.msk [vmem:[%s248 + $0x1b8] sm:$0xff] %vm3884, %v3830
      %3940 = vst [vmem:[%s248 + $0x1c0] sm:$0xff] %v3831
      %3941 = vst.msk [vmem:[%s248 + $0x1c8] sm:$0xff] %vm3884, %v3832
      %3942 = vst [vmem:[%s248 + $0x1d0] sm:$0xff] %v3833
      %3943 = vst.msk [vmem:[%s248 + $0x1d8] sm:$0xff] %vm3884, %v3834
      %3944 = vst [vmem:[%s248 + $0x1e0] sm:$0xff] %v3835
      %3945 = vst.msk [vmem:[%s248 + $0x1e8] sm:$0xff] %vm3884, %v3836
      %3946 = vst [vmem:[%s248 + $0x1f0] sm:$0xff] %v3837
      %3947 = vst.msk [vmem:[%s248 + $0x1f8] sm:$0xff] %vm3884, %v3838
      %3948 = vst [vmem:[%s248 + $0x200] sm:$0xff] %v3839
      %3949 = vst.msk [vmem:[%s248 + $0x208] sm:$0xff] %vm3884, %v3840
      %3950 = vst [vmem:[%s248 + $0x210] sm:$0xff] %v3841
      %3951 = vst.msk [vmem:[%s248 + $0x218] sm:$0xff] %vm3884, %v3842
      %3952 = vst [vmem:[%s248 + $0x220] sm:$0xff] %v3843
      %3953 = vst.msk [vmem:[%s248 + $0x228] sm:$0xff] %vm3884, %v3844
      %3954 = vst [vmem:[%s248 + $0x230] sm:$0xff] %v3845
      %3955 = vst.msk [vmem:[%s248 + $0x238] sm:$0xff] %vm3884, %v3846
      %3956 = vst [vmem:[%s248 + $0x240] sm:$0xff] %v3847
      %3957 = vst.msk [vmem:[%s248 + $0x248] sm:$0xff] %vm3884, %v3848
      %3958 = vst [vmem:[%s248 + $0x250] sm:$0xff] %v3849
      %3959 = vst.msk [vmem:[%s248 + $0x258] sm:$0xff] %vm3884, %v3850
      %3960 = vst [vmem:[%s248 + $0x260] sm:$0xff] %v3851
      %3961 = vst.msk [vmem:[%s248 + $0x268] sm:$0xff] %vm3884, %v3852
      %3962 = vst [vmem:[%s248 + $0x270] sm:$0xff] %v3853
      %3963 = vst.msk [vmem:[%s248 + $0x278] sm:$0xff] %vm3884, %v3854
      %3964 = vst [vmem:[%s248 + $0x280] sm:$0xff] %v3855
      %3965 = vst.msk [vmem:[%s248 + $0x288] sm:$0xff] %vm3884, %v3856
      %3966 = vst [vmem:[%s248 + $0x290] sm:$0xff] %v3857
      %3967 = vst.msk [vmem:[%s248 + $0x298] sm:$0xff] %vm3884, %v3858
      %3968 = vst [vmem:[%s248 + $0x2a0] sm:$0xff] %v3859
      %3969 = vst.msk [vmem:[%s248 + $0x2a8] sm:$0xff] %vm3884, %v3860
      %3970 = vst [vmem:[%s248 + $0x2b0] sm:$0xff] %v3861
      %3971 = vst.msk [vmem:[%s248 + $0x2b8] sm:$0xff] %vm3884, %v3862
      %3972 = vst [vmem:[%s248 + $0x2c0] sm:$0xff] %v3863
      %3973 = vst.msk [vmem:[%s248 + $0x2c8] sm:$0xff] %vm3884, %v3864
      %3974 = vst [vmem:[%s248 + $0x2d0] sm:$0xff] %v3865
      %3975 = vst.msk [vmem:[%s248 + $0x2d8] sm:$0xff] %vm3884, %v3866
      %3976 = vst [vmem:[%s248 + $0x2e0] sm:$0xff] %v3867
      %3977 = vst.msk [vmem:[%s248 + $0x2e8] sm:$0xff] %vm3884, %v3868
      %3978 = vst [vmem:[%s248 + $0x2f0] sm:$0xff] %v3869
      %3979 = vst.msk [vmem:[%s248 + $0x2f8] sm:$0xff] %vm3884, %v3870
      %3980 = vst [vmem:[%s248 + $0x300] sm:$0xff] %v3871
      %3981 = vst.msk [vmem:[%s248 + $0x308] sm:$0xff] %vm3884, %v3872
      %3982 = vst [vmem:[%s248 + $0x310] sm:$0xff] %v3873
      %3983 = vst.msk [vmem:[%s248 + $0x318] sm:$0xff] %vm3884, %v3874
      %3984 = vst [vmem:[%s248 + $0x320] sm:$0xff] %v3875
      %3985 = vst.msk [vmem:[%s248 + $0x328] sm:$0xff] %vm3884, %v3876
      %3986 = vst [vmem:[%s248 + $0x330] sm:$0xff] %v3877
      %3987 = vst.msk [vmem:[%s248 + $0x338] sm:$0xff] %vm3884, %v3878
      %3988 = vst [vmem:[%s248 + $0x340] sm:$0xff] %v3879
      %3989 = vst.msk [vmem:[%s248 + $0x348] sm:$0xff] %vm3884, %v3880
      %3990 = vst [vmem:[%s248 + $0x350] sm:$0xff] %v3881
      %3991 = vst.msk [vmem:[%s248 + $0x358] sm:$0xff] %vm3884, %v3882
      %s3992 = smul.u32 54, %s15
      %p3993 = scmp.lt.s32.totalorder %s3992, 107
      %s3994 = scalar_select %p3993, %s3992, 107
      %s3995 = smul.addr %s3994, 2
      %s3996 = smul.addr %s3995, 8
      %s3997 = scalar_lea.vmem %s4, %s3996
      // Predicated region
      $region37: #{tpu_custom_call.1} parent=35 // pred_check
        %p3998 = pneg %p132
      $region38: #{tpu_custom_call.1} parent=35 // pred_check_branch
        %4000 = sbr.rel (%p3998) target = $region40
      $region39: #{tpu_custom_call.1} parent=35 // pred_region
        %s4001 = smul.u32 54, %s15
      $region40: #{tpu_custom_call.1} parent=35 // pred_fallthru
        _
    $region36: #{tpu_custom_call.1} parent=5 // pred_fallthru
      _
    %p4002 = scmp.le.s32.totalorder 2, %s10
    // Predicated region
    $region41: #{tpu_custom_call.1} parent=5 // pred_check
      %p4003 = pneg %p4002
    $region42: #{tpu_custom_call.1} parent=5 // pred_check_branch
      %4005 = sbr.rel (%p4003) target = $region44
    $region43: #{tpu_custom_call.1} parent=5 // pred_region
      %s4006 = ssub.s32 %s10, 2
      // Predicated region
      $region45: #{tpu_custom_call.1} parent=43 // pred_check
        %p4007 = pneg %p138
      $region46: #{tpu_custom_call.1} parent=43 // pred_check_branch
        %4009 = sbr.rel (%p4007) target = $region48
      $region47: #{tpu_custom_call.1} parent=43 // pred_region
        %s4010 = smul.u32 54, %s16
        %p4011 = scmp.lt.s32.totalorder %s4010, 107
        %s4012 = scalar_select %p4011, %s4010, 107
        %s4013 = smul.addr %s4012, 2
        %s4014 = smul.addr %s4013, 8
        %s4015 = scalar_lea.vmem %s4, %s4014
      $region48: #{tpu_custom_call.1} parent=43 // pred_fallthru
        _
    $region44: #{tpu_custom_call.1} parent=5 // pred_fallthru
      _
  $region6: #{tpu_custom_call.1} parent=0 // loop_footer
    %s14 = sadd.s32 1, %s10
  $region7: #{tpu_custom_call.1} parent=0 // loop_footer_branch
    %9 = sbr.rel target = $region3
  $region8: #{tpu_custom_call.1} parent=0 // loop_exit
    _

</llo_original>
